<compile_context>
chip_gen: v6e
topology: v6e:2x2x1
jax: 0.10.0
libtpu: 0.0.40
codegen_flags: <defaults>
</compile_context>

<pallas_src>
import math
from functools import partial

import jax
import jax.numpy as jnp
from jax.experimental import pallas as pl
from jax.experimental.pallas import tpu as pltpu


# ----------------------------- kernel helpers ------------------------------

def _layer_norm(x, gamma, beta, eps=1e-5):
    mu = jnp.mean(x, axis=-1, keepdims=True)
    xc = x - mu
    var = jnp.mean(xc * xc, axis=-1, keepdims=True)
    return xc * jax.lax.rsqrt(var + eps) * gamma + beta


# ------------------------------- fused kernel --------------------------------

def fused_forward_kernel(
        data_ref, meta_ref, wm_ref, bm_ref, wed_ref, wem_ref, peb_ref,
        qmask_ref, sbias_ref,
        wqkv_ref, bqkv_ref, wo_ref, bo_ref, g1_ref, b1_ref,
        wff1_ref, bff1_ref, wff2_ref, bff2_ref, g2_ref, b2_ref,
        whead_ref, bhead_ref,
        out_ref, x_ref, *, B, T, num_heads):
    """One encoder layer per grid step; frontend at l==0, heads at l==L-1."""
    l = pl.program_id(0)
    BT = B * T
    D = x_ref.shape[1]
    hd = D // num_heads
    scale = 1.0 / math.sqrt(hd)
    bf16 = jnp.bfloat16

    # ---------------- frontend (first grid step only) -----------------------
    @pl.when(l == 0)
    def _frontend():
        Din = data_ref.shape[1]
        Dm = meta_ref.shape[1]
        # metadata Linear + ReLU (tiny K -> f32 VPU MAC), then (B,Fm)@(Fm,D)
        meta = meta_ref[...]
        mfeat = bm_ref[...]
        for i in range(Dm):
            mfeat = mfeat + meta[:, i:i + 1] * wm_ref[i:i + 1, :]
        mfeat = jnp.maximum(mfeat, 0.0)                          # (B, Fm)
        mcontrib = jnp.dot(mfeat.astype(bf16), wem_ref[...],
                           preferred_element_type=jnp.float32)   # (B, D)
        # PE(+emb bias) broadcast over batch  +  metadata broadcast over time
        x = (jnp.broadcast_to(peb_ref[...][None], (B, T, D)).reshape(BT, D)
             + jnp.broadcast_to(mcontrib[:, None, :], (B, T, D)).reshape(BT, D))
        data = data_ref[...]                                     # (B*T, Din)
        for i in range(Din):                                     # tiny-K MAC, once
            x = x + data[:, i:i + 1] * wed_ref[i:i + 1, :]
        x_ref[...] = x

    # ---------------- one TransformerEncoderLayer (post-LN) -----------------
    x = x_ref[...]                                               # (BT, D) f32
    qkv = (jnp.dot(x.astype(bf16), wqkv_ref[0],
                   preferred_element_type=jnp.float32)
           + bqkv_ref[0]).astype(bf16)                           # (BT, 3D) bf16
    q = qkv[:, 0:D] * scale                                      # scale folded once
    k = qkv[:, D:2 * D]
    v = qkv[:, 2 * D:3 * D]

    # Mask-packed multi-head attention: every (batch, head) pair handled by the
    # same two matmuls.  Row r = h*B*T + b*T + i of q_hat holds q[b*T+i] masked
    # to head-h feature lanes; sbias kills cross-batch key columns.
    qmask = qmask_ref[...]                                       # (H*BT, D) f32
    q_hat = (jnp.broadcast_to(q[None], (num_heads, BT, D))
             .reshape(num_heads * BT, D) * qmask.astype(bf16))
    s = jax.lax.dot_general(q_hat, k, (((1,), (1,)), ((), ())),
                            preferred_element_type=jnp.float32)  # (H*BT, BT)
    s = s + sbias_ref[...]
    s = s - jnp.max(s, axis=-1, keepdims=True)
    p = jnp.exp(s)
    p = p * pl.reciprocal(jnp.sum(p, axis=-1, keepdims=True), approx=True)
    o_full = jnp.dot(p.astype(bf16), v,
                     preferred_element_type=jnp.float32)         # (H*BT, D)
    o_full = o_full * qmask                                      # keep head lanes
    o = o_full[0:BT]
    for h in range(1, num_heads):                                # fold -> head concat
        o = o + o_full[h * BT:(h + 1) * BT]                      # (BT, D)

    attn = jnp.dot(o.astype(bf16), wo_ref[0],
                   preferred_element_type=jnp.float32) + bo_ref[0]
    y = _layer_norm(x + attn, g1_ref[0], b1_ref[0])
    f = jnp.maximum(jnp.dot(y.astype(bf16), wff1_ref[0],
                            preferred_element_type=jnp.float32) + bff1_ref[0], 0.0)
    f = jnp.dot(f.astype(bf16), wff2_ref[0],
                preferred_element_type=jnp.float32) + bff2_ref[0]
    x_new = _layer_norm(y + f, g2_ref[0], b2_ref[0])
    x_ref[...] = x_new

    # ---------------- heads (last grid step only), single store -------------
    @pl.when(l == pl.num_programs(0) - 1)
    def _heads():
        logits = jnp.dot(x_new.astype(bf16), whead_ref[...],
                         preferred_element_type=jnp.float32) + bhead_ref[...]
        col = jax.lax.broadcasted_iota(jnp.int32, (BT, 2), 1)
        out_ref[...] = jnp.where(col == 0, jnp.maximum(logits, 0.0),
                                 jax.nn.sigmoid(logits))


# ----------------------------- pallas_call glue ------------------------------

def two_step_network_with_attention(data, metadata, params, *, num_heads):
    B, T, Din = data.shape
    Dm = metadata.shape[1]
    D = params["w_emb_dyn"].shape[1]
    Fm = params["w_meta"].shape[1]
    Dff = params["layers"][0]["w_ff1"].shape[1]
    L = len(params["layers"])
    H = num_heads
    hd = D // H
    BT = B * T
    bf16 = jnp.bfloat16

    # InputNormalization + flatten (B,T,Din) -> (B*T,Din)
    data_n = ((data - params["data_mean"]) / params["data_std"]).reshape(BT, Din)
    meta_n = (metadata - params["meta_mean"]) / params["meta_std"]

    pe_bias = params["pe"] + params["b_emb"]                      # (T, D)

    # static packing masks: head selector on feature lanes, batch mask on keys
    r = jnp.arange(H * BT)
    qmask = ((r // BT)[:, None] == (jnp.arange(D) // hd)[None, :]
             ).astype(jnp.float32)                                # (H*BT, D)
    sbias = jnp.where(((r // T) % B)[:, None] == (jnp.arange(BT) // T)[None, :],
                      0.0, -1e9).astype(jnp.float32)              # (H*BT, BT)

    # stack per-layer weights along a leading L axis (bf16 for MXU operands)
    def stk(name, dt=jnp.float32):
        return jnp.stack([lp[name] for lp in params["layers"]]).astype(dt)

    wqkv, bqkv = stk("w_qkv", bf16), stk("b_qkv")
    wo, bo = stk("w_o", bf16), stk("b_o")
    g1, b1 = stk("ln1_g"), stk("ln1_b")
    wff1, bff1 = stk("w_ff1", bf16), stk("b_ff1")
    wff2, bff2 = stk("w_ff2", bf16), stk("b_ff2")
    g2, b2 = stk("ln2_g"), stk("ln2_b")

    whead = jnp.concatenate([params["w_rain"].T, params["w_wd"].T], -1).astype(bf16)
    bhead = jnp.concatenate([params["b_rain"], params["b_wd"]], -1)

    def full(shp):
        nd = len(shp)
        return pl.BlockSpec(shp, lambda l: (0,) * nd)             # resident block

    def perl(shp):
        nd = len(shp)
        return pl.BlockSpec((1,) + shp, lambda l: (l,) + (0,) * nd)  # per-layer block

    grid_spec = pltpu.PrefetchScalarGridSpec(
        num_scalar_prefetch=0,
        grid=(L,),
        in_specs=[
            full((BT, Din)), full((B, Dm)),
            full((Dm, Fm)), full((1, Fm)),
            full((Din, D)), full((Fm, D)), full((T, D)),
            full((H * BT, D)), full((H * BT, BT)),
            perl((D, 3 * D)), perl((1, 3 * D)),
            perl((D, D)), perl((1, D)),
            perl((1, D)), perl((1, D)),
            perl((D, Dff)), perl((1, Dff)),
            perl((Dff, D)), perl((1, D)),
            perl((1, D)), perl((1, D)),
            full((D, 2)), full((1, 2)),
        ],
        out_specs=pl.BlockSpec((BT, 2), lambda l: (0, 0)),
        scratch_shapes=[pltpu.VMEM((BT, D), jnp.float32)],        # x across layers
    )

    out = pl.pallas_call(
        partial(fused_forward_kernel, B=B, T=T, num_heads=H),
        out_shape=jax.ShapeDtypeStruct((BT, 2), jnp.float32),
        grid_spec=grid_spec,
        compiler_params=pltpu.CompilerParams(
            dimension_semantics=("arbitrary",)),
    )(data_n, meta_n,
      params["w_meta"], params["b_meta"],
      params["w_emb_dyn"], params["w_emb_meta"].astype(bf16), pe_bias,
      qmask, sbias,
      wqkv, bqkv, wo, bo, g1, b1, wff1, bff1, wff2, bff2, g2, b2,
      whead, bhead)
    return out.reshape(B, T, 2)


# ------------------------------ parameters ----------------------------------

def init_params(key, *, din=4, dmeta=2, d_model=128, meta_feat=32,
                window=32, layers=2, d_ff=256):
    keys = jax.random.split(key, 32)
    ki = iter(range(32))

    def lin(fin, fout):
        return jax.random.normal(keys[next(ki)], (fin, fout), jnp.float32) \
            * (1.0 / math.sqrt(fin))

    p = {}
    # synthetic InputNormalizationConfig (deterministic)
    p["data_mean"] = jnp.linspace(-0.5, 0.5, din, dtype=jnp.float32)
    p["data_std"] = jnp.linspace(1.0, 2.0, din, dtype=jnp.float32)
    p["meta_mean"] = jnp.linspace(0.0, 1.0, dmeta, dtype=jnp.float32)
    p["meta_std"] = jnp.full((dmeta,), 1.5, jnp.float32)

    p["w_meta"] = lin(dmeta, meta_feat)
    p["b_meta"] = jnp.zeros((1, meta_feat), jnp.float32)
    p["w_emb_dyn"] = lin(din, d_model)
    p["w_emb_meta"] = lin(meta_feat, d_model)
    p["b_emb"] = jnp.zeros((1, d_model), jnp.float32)

    # sinusoidal positional encoding
    pos = jnp.arange(window, dtype=jnp.float32)[:, None]
    div = jnp.exp(jnp.arange(0, d_model, 2, dtype=jnp.float32)
                  * (-math.log(10000.0) / d_model))
    pe = jnp.zeros((window, d_model), jnp.float32)
    pe = pe.at[:, 0::2].set(jnp.sin(pos * div))
    pe = pe.at[:, 1::2].set(jnp.cos(pos * div))
    p["pe"] = pe

    p["layers"] = []
    for _ in range(layers):
        p["layers"].append({
            "w_qkv": lin(d_model, 3 * d_model),
            "b_qkv": jnp.zeros((1, 3 * d_model), jnp.float32),
            "w_o": lin(d_model, d_model),
            "b_o": jnp.zeros((1, d_model), jnp.float32),
            "ln1_g": jnp.ones((1, d_model), jnp.float32),
            "ln1_b": jnp.zeros((1, d_model), jnp.float32),
            "w_ff1": lin(d_model, d_ff),
            "b_ff1": jnp.zeros((1, d_ff), jnp.float32),
            "w_ff2": lin(d_ff, d_model),
            "b_ff2": jnp.zeros((1, d_model), jnp.float32),
            "ln2_g": jnp.ones((1, d_model), jnp.float32),
            "ln2_b": jnp.zeros((1, d_model), jnp.float32),
        })

    p["w_rain"] = jax.random.normal(keys[next(ki)], (1, d_model), jnp.float32) \
        * (1.0 / math.sqrt(d_model))
    p["b_rain"] = jnp.zeros((1, 1), jnp.float32)
    p["w_wd"] = jax.random.normal(keys[next(ki)], (1, d_model), jnp.float32) \
        * (1.0 / math.sqrt(d_model))
    p["b_wd"] = jnp.zeros((1, 1), jnp.float32)
    return p


# --------------------------------- main --------------------------------------

if __name__ == "__main__":
    key = jax.random.PRNGKey(0)
    kp, kd, km = jax.random.split(key, 3)

    # small shapes consistent with the module defaults (d_model scaled down)
    B, T = 2, 32                   # window_size=32
    DIN, DMETA = 4, 2              # dynamic_input_size=4, metadata_input_size=2
    D_MODEL, META_FEAT, D_FF = 128, 32, 256
    LAYERS, HEADS = 2, 8           # h=8 heads

    params = init_params(kp, din=DIN, dmeta=DMETA, d_model=D_MODEL,
                         meta_feat=META_FEAT, window=T, layers=LAYERS, d_ff=D_FF)
    data = jax.random.normal(kd, (B, T, DIN), jnp.float32)
    metadata = jax.random.normal(km, (B, DMETA), jnp.float32)

    fwd = jax.jit(partial(two_step_network_with_attention, num_heads=HEADS))
    out = jax.block_until_ready(fwd(data, metadata, params))

    assert out.shape == (B, T, 2), out.shape
    assert bool(jnp.all(jnp.isfinite(out)))
    print("KERNEL_OK")
</pallas_src>

<mosaic_0001>
module attributes {stable_mosaic.version = 11 : i64} {
  func.func @fused_forward_kernel(%arg0: i32, %arg1: memref<64x4xf32, #tpu.memory_space<vmem>>, %arg2: memref<2x2xf32, #tpu.memory_space<vmem>>, %arg3: memref<2x32xf32, #tpu.memory_space<vmem>>, %arg4: memref<1x32xf32, #tpu.memory_space<vmem>>, %arg5: memref<4x128xf32, #tpu.memory_space<vmem>>, %arg6: memref<32x128xbf16, #tpu.memory_space<vmem>>, %arg7: memref<32x128xf32, #tpu.memory_space<vmem>>, %arg8: memref<512x128xf32, #tpu.memory_space<vmem>>, %arg9: memref<512x64xf32, #tpu.memory_space<vmem>>, %arg10: memref<1x128x384xbf16, #tpu.memory_space<vmem>>, %arg11: memref<1x1x384xf32, #tpu.memory_space<vmem>>, %arg12: memref<1x128x128xbf16, #tpu.memory_space<vmem>>, %arg13: memref<1x1x128xf32, #tpu.memory_space<vmem>>, %arg14: memref<1x1x128xf32, #tpu.memory_space<vmem>>, %arg15: memref<1x1x128xf32, #tpu.memory_space<vmem>>, %arg16: memref<1x128x256xbf16, #tpu.memory_space<vmem>>, %arg17: memref<1x1x256xf32, #tpu.memory_space<vmem>>, %arg18: memref<1x256x128xbf16, #tpu.memory_space<vmem>>, %arg19: memref<1x1x128xf32, #tpu.memory_space<vmem>>, %arg20: memref<1x1x128xf32, #tpu.memory_space<vmem>>, %arg21: memref<1x1x128xf32, #tpu.memory_space<vmem>>, %arg22: memref<128x2xbf16, #tpu.memory_space<vmem>>, %arg23: memref<1x2xf32, #tpu.memory_space<vmem>>, %arg24: memref<64x2xf32, #tpu.memory_space<vmem>>, %arg25: memref<64x128xf32, #tpu.memory_space<vmem>>) attributes {dimension_semantics = [#tpu.dimension_semantics<arbitrary>], iteration_bounds = array<i64: 2>, scalar_prefetch = 0 : i64, scratch_operands = 1 : i64, tpu.core_type = #tpu.core_type<tc>, window_params = [{pipeline_mode = #tpu.pipeline_mode<synchronous>, transform_indices = @transform_0, window_bounds = array<i64: 64, 4>}, {pipeline_mode = #tpu.pipeline_mode<synchronous>, transform_indices = @transform_1, window_bounds = array<i64: 2, 2>}, {pipeline_mode = #tpu.pipeline_mode<synchronous>, transform_indices = @transform_2, window_bounds = array<i64: 2, 32>}, {pipeline_mode = #tpu.pipeline_mode<synchronous>, transform_indices = @transform_3, window_bounds = array<i64: 1, 32>}, {pipeline_mode = #tpu.pipeline_mode<synchronous>, transform_indices = @transform_4, window_bounds = array<i64: 4, 128>}, {pipeline_mode = #tpu.pipeline_mode<synchronous>, transform_indices = @transform_5, window_bounds = array<i64: 32, 128>}, {pipeline_mode = #tpu.pipeline_mode<synchronous>, transform_indices = @transform_6, window_bounds = array<i64: 32, 128>}, {pipeline_mode = #tpu.pipeline_mode<synchronous>, transform_indices = @transform_7, window_bounds = array<i64: 512, 128>}, {pipeline_mode = #tpu.pipeline_mode<synchronous>, transform_indices = @transform_8, window_bounds = array<i64: 512, 64>}, {transform_indices = @transform_9, window_bounds = array<i64: 1, 128, 384>}, {transform_indices = @transform_10, window_bounds = array<i64: 1, 1, 384>}, {transform_indices = @transform_11, window_bounds = array<i64: 1, 128, 128>}, {transform_indices = @transform_12, window_bounds = array<i64: 1, 1, 128>}, {transform_indices = @transform_13, window_bounds = array<i64: 1, 1, 128>}, {transform_indices = @transform_14, window_bounds = array<i64: 1, 1, 128>}, {transform_indices = @transform_15, window_bounds = array<i64: 1, 128, 256>}, {transform_indices = @transform_16, window_bounds = array<i64: 1, 1, 256>}, {transform_indices = @transform_17, window_bounds = array<i64: 1, 256, 128>}, {transform_indices = @transform_18, window_bounds = array<i64: 1, 1, 128>}, {transform_indices = @transform_19, window_bounds = array<i64: 1, 1, 128>}, {transform_indices = @transform_20, window_bounds = array<i64: 1, 1, 128>}, {pipeline_mode = #tpu.pipeline_mode<synchronous>, transform_indices = @transform_21, window_bounds = array<i64: 128, 2>}, {pipeline_mode = #tpu.pipeline_mode<synchronous>, transform_indices = @transform_22, window_bounds = array<i64: 1, 2>}, {pipeline_mode = #tpu.pipeline_mode<synchronous>, transform_indices = @transform_23, window_bounds = array<i64: 64, 2>}]} {
    %c0_i32 = arith.constant 0 : i32
    %0 = arith.cmpi eq, %arg0, %c0_i32 : i32
    %1 = arith.extui %0 : i1 to i32
    %c0_i32_0 = arith.constant 0 : i32
    %2 = arith.cmpi ne, %1, %c0_i32_0 : i32
    scf.if %2 {
      %c0_64 = arith.constant 0 : index
      %c0_65 = arith.constant 0 : index
      %136 = vector.load %arg2[%c0_64, %c0_65] : memref<2x2xf32, #tpu.memory_space<vmem>>, vector<2x2xf32>
      %c0_66 = arith.constant 0 : index
      %c0_67 = arith.constant 0 : index
      %137 = vector.load %arg4[%c0_66, %c0_67] : memref<1x32xf32, #tpu.memory_space<vmem>>, vector<1x32xf32>
      %138 = vector.extract_strided_slice %136 {offsets = [0, 0], sizes = [2, 1], strides = [1, 1]} : vector<2x2xf32> to vector<2x1xf32>
      %c0_68 = arith.constant 0 : index
      %c0_69 = arith.constant 0 : index
      %139 = vector.load %arg3[%c0_68, %c0_69] : memref<2x32xf32, #tpu.memory_space<vmem>>, vector<1x32xf32>
      %140 = vector.broadcast %138 : vector<2x1xf32> to vector<2x32xf32>
      %141 = vector.broadcast %139 : vector<1x32xf32> to vector<2x32xf32>
      %142 = arith.mulf %140, %141 : vector<2x32xf32>
      %143 = vector.broadcast %137 : vector<1x32xf32> to vector<2x32xf32>
      %144 = arith.addf %143, %142 : vector<2x32xf32>
      %145 = vector.extract_strided_slice %136 {offsets = [0, 1], sizes = [2, 1], strides = [1, 1]} : vector<2x2xf32> to vector<2x1xf32>
      %c1 = arith.constant 1 : index
      %c0_70 = arith.constant 0 : index
      %146 = vector.load %arg3[%c1, %c0_70] : memref<2x32xf32, #tpu.memory_space<vmem>>, vector<1x32xf32>
      %147 = vector.broadcast %145 : vector<2x1xf32> to vector<2x32xf32>
      %148 = vector.broadcast %146 : vector<1x32xf32> to vector<2x32xf32>
      %149 = arith.mulf %147, %148 : vector<2x32xf32>
      %150 = arith.addf %144, %149 : vector<2x32xf32>
      %cst_71 = arith.constant 0.000000e+00 : f32
      %151 = vector.broadcast %cst_71 : f32 to vector<2x32xf32>
      %152 = arith.maximumf %150, %151 : vector<2x32xf32>
      %153 = arith.truncf %152 : vector<2x32xf32> to vector<2x32xbf16>
      %c0_72 = arith.constant 0 : index
      %c0_73 = arith.constant 0 : index
      %154 = vector.load %arg6[%c0_72, %c0_73] : memref<32x128xbf16, #tpu.memory_space<vmem>>, vector<32x128xbf16>
      %cst_74 = arith.constant dense<0.000000e+00> : vector<2x128xf32>
      %155 = tpu.matmul %153, %154, %cst_74 {dimension_numbers = #tpu.dot_dimension_numbers<[1], [0], [0], [1], [0, 0, 1, 1], [], []>} : vector<2x32xbf16>, vector<32x128xbf16>, vector<2x128xf32> -> vector<2x128xf32>
      %c0_75 = arith.constant 0 : index
      %c0_76 = arith.constant 0 : index
      %156 = vector.load %arg7[%c0_75, %c0_76] : memref<32x128xf32, #tpu.memory_space<vmem>>, vector<32x128xf32>
      %157 = vector.shape_cast %156 : vector<32x128xf32> to vector<1x32x128xf32>
      %158 = vector.shape_cast %157 : vector<1x32x128xf32> to vector<1x32x128xf32>
      %159 = vector.broadcast %158 : vector<1x32x128xf32> to vector<2x32x128xf32>
      %160 = vector.shape_cast %159 : vector<2x32x128xf32> to vector<64x128xf32>
      %161 = vector.shape_cast %155 : vector<2x128xf32> to vector<2x1x128xf32>
      %162 = vector.shape_cast %161 : vector<2x1x128xf32> to vector<2x1x128xf32>
      %163 = vector.broadcast %162 : vector<2x1x128xf32> to vector<2x32x128xf32>
      %164 = vector.shape_cast %163 : vector<2x32x128xf32> to vector<64x128xf32>
      %165 = arith.addf %160, %164 : vector<64x128xf32>
      %c0_77 = arith.constant 0 : index
      %c0_78 = arith.constant 0 : index
      %166 = vector.load %arg1[%c0_77, %c0_78] : memref<64x4xf32, #tpu.memory_space<vmem>>, vector<64x4xf32>
      %167 = vector.extract_strided_slice %166 {offsets = [0, 0], sizes = [64, 1], strides = [1, 1]} : vector<64x4xf32> to vector<64x1xf32>
      %c0_79 = arith.constant 0 : index
      %c0_80 = arith.constant 0 : index
      %168 = vector.load %arg5[%c0_79, %c0_80] : memref<4x128xf32, #tpu.memory_space<vmem>>, vector<1x128xf32>
      %169 = vector.broadcast %167 : vector<64x1xf32> to vector<64x128xf32>
      %170 = vector.broadcast %168 : vector<1x128xf32> to vector<64x128xf32>
      %171 = arith.mulf %169, %170 : vector<64x128xf32>
      %172 = arith.addf %165, %171 : vector<64x128xf32>
      %173 = vector.extract_strided_slice %166 {offsets = [0, 1], sizes = [64, 1], strides = [1, 1]} : vector<64x4xf32> to vector<64x1xf32>
      %c1_81 = arith.constant 1 : index
      %c0_82 = arith.constant 0 : index
      %174 = vector.load %arg5[%c1_81, %c0_82] : memref<4x128xf32, #tpu.memory_space<vmem>>, vector<1x128xf32>
      %175 = vector.broadcast %173 : vector<64x1xf32> to vector<64x128xf32>
      %176 = vector.broadcast %174 : vector<1x128xf32> to vector<64x128xf32>
      %177 = arith.mulf %175, %176 : vector<64x128xf32>
      %178 = arith.addf %172, %177 : vector<64x128xf32>
      %179 = vector.extract_strided_slice %166 {offsets = [0, 2], sizes = [64, 1], strides = [1, 1]} : vector<64x4xf32> to vector<64x1xf32>
      %c2 = arith.constant 2 : index
      %c0_83 = arith.constant 0 : index
      %180 = vector.load %arg5[%c2, %c0_83] : memref<4x128xf32, #tpu.memory_space<vmem>>, vector<1x128xf32>
      %181 = vector.broadcast %179 : vector<64x1xf32> to vector<64x128xf32>
      %182 = vector.broadcast %180 : vector<1x128xf32> to vector<64x128xf32>
      %183 = arith.mulf %181, %182 : vector<64x128xf32>
      %184 = arith.addf %178, %183 : vector<64x128xf32>
      %185 = vector.extract_strided_slice %166 {offsets = [0, 3], sizes = [64, 1], strides = [1, 1]} : vector<64x4xf32> to vector<64x1xf32>
      %c3 = arith.constant 3 : index
      %c0_84 = arith.constant 0 : index
      %186 = vector.load %arg5[%c3, %c0_84] : memref<4x128xf32, #tpu.memory_space<vmem>>, vector<1x128xf32>
      %187 = vector.broadcast %185 : vector<64x1xf32> to vector<64x128xf32>
      %188 = vector.broadcast %186 : vector<1x128xf32> to vector<64x128xf32>
      %189 = arith.mulf %187, %188 : vector<64x128xf32>
      %190 = arith.addf %184, %189 : vector<64x128xf32>
      %c0_85 = arith.constant 0 : index
      %c0_86 = arith.constant 0 : index
      %191 = vector.load %arg25[%c0_85, %c0_86] : memref<64x128xf32, #tpu.memory_space<vmem>>, vector<64x128xf32>
      tpu.vector_store %arg25[%c0_85, %c0_86], %190 {strides = array<i32>} : memref<64x128xf32, #tpu.memory_space<vmem>>, vector<64x128xf32>,
    } else {
    }
    %c0 = arith.constant 0 : index
    %c0_1 = arith.constant 0 : index
    %3 = vector.load %arg25[%c0, %c0_1] : memref<64x128xf32, #tpu.memory_space<vmem>>, vector<64x128xf32>
    %4 = arith.truncf %3 : vector<64x128xf32> to vector<64x128xbf16>
    %c0_2 = arith.constant 0 : index
    %c0_3 = arith.constant 0 : index
    %c0_4 = arith.constant 0 : index
    %5 = vector.load %arg10[%c0_2, %c0_3, %c0_4] : memref<1x128x384xbf16, #tpu.memory_space<vmem>>, vector<1x128x384xbf16>
    %6 = vector.shape_cast %5 : vector<1x128x384xbf16> to vector<128x384xbf16>
    %cst = arith.constant dense<0.000000e+00> : vector<64x384xf32>
    %7 = tpu.matmul %4, %6, %cst {dimension_numbers = #tpu.dot_dimension_numbers<[1], [0], [0], [1], [0, 0, 1, 1], [], []>} : vector<64x128xbf16>, vector<128x384xbf16>, vector<64x384xf32> -> vector<64x384xf32>
    %c0_5 = arith.constant 0 : index
    %c0_6 = arith.constant 0 : index
    %c0_7 = arith.constant 0 : index
    %8 = vector.load %arg11[%c0_5, %c0_6, %c0_7] : memref<1x1x384xf32, #tpu.memory_space<vmem>>, vector<1x1x384xf32>
    %9 = vector.shape_cast %8 : vector<1x1x384xf32> to vector<1x384xf32>
    %10 = vector.broadcast %9 : vector<1x384xf32> to vector<64x384xf32>
    %11 = arith.addf %7, %10 : vector<64x384xf32>
    %12 = arith.truncf %11 : vector<64x384xf32> to vector<64x384xbf16>
    %13 = vector.extract_strided_slice %12 {offsets = [0, 0], sizes = [64, 128], strides = [1, 1]} : vector<64x384xbf16> to vector<64x128xbf16>
    %cst_8 = arith.constant 2.500000e-01 : bf16
    %14 = vector.broadcast %cst_8 : bf16 to vector<64x128xbf16>
    %15 = arith.mulf %13, %14 : vector<64x128xbf16>
    %16 = vector.extract_strided_slice %12 {offsets = [0, 128], sizes = [64, 128], strides = [1, 1]} : vector<64x384xbf16> to vector<64x128xbf16>
    %17 = vector.extract_strided_slice %12 {offsets = [0, 256], sizes = [64, 128], strides = [1, 1]} : vector<64x384xbf16> to vector<64x128xbf16>
    %c0_9 = arith.constant 0 : index
    %c0_10 = arith.constant 0 : index
    %18 = vector.load %arg8[%c0_9, %c0_10] : memref<512x128xf32, #tpu.memory_space<vmem>>, vector<512x128xf32>
    %19 = vector.shape_cast %15 : vector<64x128xbf16> to vector<1x64x128xbf16>
    %20 = vector.shape_cast %19 : vector<1x64x128xbf16> to vector<1x64x128xbf16>
    %21 = vector.broadcast %20 : vector<1x64x128xbf16> to vector<8x64x128xbf16>
    %22 = vector.shape_cast %21 : vector<8x64x128xbf16> to vector<512x128xbf16>
    %23 = arith.truncf %18 : vector<512x128xf32> to vector<512x128xbf16>
    %24 = arith.mulf %22, %23 : vector<512x128xbf16>
    %cst_11 = arith.constant dense<0.000000e+00> : vector<512x64xf32>
    %25 = tpu.matmul %24, %16, %cst_11 {dimension_numbers = #tpu.dot_dimension_numbers<[1], [1], [0], [0], [0, 0, 1, 0], [], []>} : vector<512x128xbf16>, vector<64x128xbf16>, vector<512x64xf32> -> vector<512x64xf32>
    %c0_12 = arith.constant 0 : index
    %c0_13 = arith.constant 0 : index
    %26 = vector.load %arg9[%c0_12, %c0_13] : memref<512x64xf32, #tpu.memory_space<vmem>>, vector<512x64xf32>
    %27 = arith.addf %25, %26 : vector<512x64xf32>
    %cst_14 = arith.constant dense<0xFF800000> : vector<512xf32>
    %28 = vector.multi_reduction <maximumf>, %27, %cst_14 [1] : vector<512x64xf32> to vector<512xf32>
    %29 = vector.shape_cast %28 : vector<512xf32> to vector<512x1xf32>
    %30 = vector.broadcast %29 : vector<512x1xf32> to vector<512x64xf32>
    %31 = arith.subf %27, %30 : vector<512x64xf32>
    %32 = math.exp %31 : vector<512x64xf32>
    %cst_15 = arith.constant dense<0.000000e+00> : vector<512xf32>
    %33 = vector.multi_reduction <add>, %32, %cst_15 [1] : vector<512x64xf32> to vector<512xf32>
    %34 = vector.shape_cast %33 : vector<512xf32> to vector<512x1xf32>
    %35 = tpu.reciprocal %34 {approx = true} : vector<512x1xf32> -> vector<512x1xf32>
    %36 = vector.broadcast %35 : vector<512x1xf32> to vector<512x64xf32>
    %37 = arith.mulf %32, %36 : vector<512x64xf32>
    %38 = arith.truncf %37 : vector<512x64xf32> to vector<512x64xbf16>
    %cst_16 = arith.constant dense<0.000000e+00> : vector<512x128xf32>
    %39 = tpu.matmul %38, %17, %cst_16 {dimension_numbers = #tpu.dot_dimension_numbers<[1], [0], [0], [1], [0, 0, 1, 1], [], []>} : vector<512x64xbf16>, vector<64x128xbf16>, vector<512x128xf32> -> vector<512x128xf32>
    %40 = arith.mulf %39, %18 : vector<512x128xf32>
    %41 = vector.extract_strided_slice %40 {offsets = [0, 0], sizes = [64, 128], strides = [1, 1]} : vector<512x128xf32> to vector<64x128xf32>
    %42 = vector.extract_strided_slice %40 {offsets = [64, 0], sizes = [64, 128], strides = [1, 1]} : vector<512x128xf32> to vector<64x128xf32>
    %43 = arith.addf %41, %42 : vector<64x128xf32>
    %44 = vector.extract_strided_slice %40 {offsets = [128, 0], sizes = [64, 128], strides = [1, 1]} : vector<512x128xf32> to vector<64x128xf32>
    %45 = arith.addf %43, %44 : vector<64x128xf32>
    %46 = vector.extract_strided_slice %40 {offsets = [192, 0], sizes = [64, 128], strides = [1, 1]} : vector<512x128xf32> to vector<64x128xf32>
    %47 = arith.addf %45, %46 : vector<64x128xf32>
    %48 = vector.extract_strided_slice %40 {offsets = [256, 0], sizes = [64, 128], strides = [1, 1]} : vector<512x128xf32> to vector<64x128xf32>
    %49 = arith.addf %47, %48 : vector<64x128xf32>
    %50 = vector.extract_strided_slice %40 {offsets = [320, 0], sizes = [64, 128], strides = [1, 1]} : vector<512x128xf32> to vector<64x128xf32>
    %51 = arith.addf %49, %50 : vector<64x128xf32>
    %52 = vector.extract_strided_slice %40 {offsets = [384, 0], sizes = [64, 128], strides = [1, 1]} : vector<512x128xf32> to vector<64x128xf32>
    %53 = arith.addf %51, %52 : vector<64x128xf32>
    %54 = vector.extract_strided_slice %40 {offsets = [448, 0], sizes = [64, 128], strides = [1, 1]} : vector<512x128xf32> to vector<64x128xf32>
    %55 = arith.addf %53, %54 : vector<64x128xf32>
    %56 = arith.truncf %55 : vector<64x128xf32> to vector<64x128xbf16>
    %c0_17 = arith.constant 0 : index
    %c0_18 = arith.constant 0 : index
    %c0_19 = arith.constant 0 : index
    %57 = vector.load %arg12[%c0_17, %c0_18, %c0_19] : memref<1x128x128xbf16, #tpu.memory_space<vmem>>, vector<1x128x128xbf16>
    %58 = vector.shape_cast %57 : vector<1x128x128xbf16> to vector<128x128xbf16>
    %cst_20 = arith.constant dense<0.000000e+00> : vector<64x128xf32>
    %59 = tpu.matmul %56, %58, %cst_20 {dimension_numbers = #tpu.dot_dimension_numbers<[1], [0], [0], [1], [0, 0, 1, 1], [], []>} : vector<64x128xbf16>, vector<128x128xbf16>, vector<64x128xf32> -> vector<64x128xf32>
    %c0_21 = arith.constant 0 : index
    %c0_22 = arith.constant 0 : index
    %c0_23 = arith.constant 0 : index
    %60 = vector.load %arg13[%c0_21, %c0_22, %c0_23] : memref<1x1x128xf32, #tpu.memory_space<vmem>>, vector<1x1x128xf32>
    %61 = vector.shape_cast %60 : vector<1x1x128xf32> to vector<1x128xf32>
    %62 = vector.broadcast %61 : vector<1x128xf32> to vector<64x128xf32>
    %63 = arith.addf %59, %62 : vector<64x128xf32>
    %64 = arith.addf %3, %63 : vector<64x128xf32>
    %c0_24 = arith.constant 0 : index
    %c0_25 = arith.constant 0 : index
    %c0_26 = arith.constant 0 : index
    %65 = vector.load %arg14[%c0_24, %c0_25, %c0_26] : memref<1x1x128xf32, #tpu.memory_space<vmem>>, vector<1x1x128xf32>
    %66 = vector.shape_cast %65 : vector<1x1x128xf32> to vector<1x128xf32>
    %c0_27 = arith.constant 0 : index
    %c0_28 = arith.constant 0 : index
    %c0_29 = arith.constant 0 : index
    %67 = vector.load %arg15[%c0_27, %c0_28, %c0_29] : memref<1x1x128xf32, #tpu.memory_space<vmem>>, vector<1x1x128xf32>
    %68 = vector.shape_cast %67 : vector<1x1x128xf32> to vector<1x128xf32>
    %cst_30 = arith.constant dense<0.000000e+00> : vector<64xf32>
    %69 = vector.multi_reduction <add>, %64, %cst_30 [1] : vector<64x128xf32> to vector<64xf32>
    %70 = vector.shape_cast %69 : vector<64xf32> to vector<64x1xf32>
    %cst_31 = arith.constant 1.280000e+02 : f32
    %71 = vector.broadcast %cst_31 : f32 to vector<64x1xf32>
    %72 = arith.divf %70, %71 : vector<64x1xf32>
    %73 = vector.broadcast %72 : vector<64x1xf32> to vector<64x128xf32>
    %74 = arith.subf %64, %73 : vector<64x128xf32>
    %75 = arith.mulf %74, %74 : vector<64x128xf32>
    %cst_32 = arith.constant dense<0.000000e+00> : vector<64xf32>
    %76 = vector.multi_reduction <add>, %75, %cst_32 [1] : vector<64x128xf32> to vector<64xf32>
    %77 = vector.shape_cast %76 : vector<64xf32> to vector<64x1xf32>
    %cst_33 = arith.constant 1.280000e+02 : f32
    %78 = vector.broadcast %cst_33 : f32 to vector<64x1xf32>
    %79 = arith.divf %77, %78 : vector<64x1xf32>
    %cst_34 = arith.constant 9.99999974E-6 : f32
    %80 = vector.broadcast %cst_34 : f32 to vector<64x1xf32>
    %81 = arith.addf %79, %80 : vector<64x1xf32>
    %82 = math.rsqrt %81 : vector<64x1xf32>
    %83 = vector.broadcast %82 : vector<64x1xf32> to vector<64x128xf32>
    %84 = arith.mulf %74, %83 : vector<64x128xf32>
    %85 = vector.broadcast %66 : vector<1x128xf32> to vector<64x128xf32>
    %86 = arith.mulf %84, %85 : vector<64x128xf32>
    %87 = vector.broadcast %68 : vector<1x128xf32> to vector<64x128xf32>
    %88 = arith.addf %86, %87 : vector<64x128xf32>
    %89 = arith.truncf %88 : vector<64x128xf32> to vector<64x128xbf16>
    %c0_35 = arith.constant 0 : index
    %c0_36 = arith.constant 0 : index
    %c0_37 = arith.constant 0 : index
    %90 = vector.load %arg16[%c0_35, %c0_36, %c0_37] : memref<1x128x256xbf16, #tpu.memory_space<vmem>>, vector<1x128x256xbf16>
    %91 = vector.shape_cast %90 : vector<1x128x256xbf16> to vector<128x256xbf16>
    %cst_38 = arith.constant dense<0.000000e+00> : vector<64x256xf32>
    %92 = tpu.matmul %89, %91, %cst_38 {dimension_numbers = #tpu.dot_dimension_numbers<[1], [0], [0], [1], [0, 0, 1, 1], [], []>} : vector<64x128xbf16>, vector<128x256xbf16>, vector<64x256xf32> -> vector<64x256xf32>
    %c0_39 = arith.constant 0 : index
    %c0_40 = arith.constant 0 : index
    %c0_41 = arith.constant 0 : index
    %93 = vector.load %arg17[%c0_39, %c0_40, %c0_41] : memref<1x1x256xf32, #tpu.memory_space<vmem>>, vector<1x1x256xf32>
    %94 = vector.shape_cast %93 : vector<1x1x256xf32> to vector<1x256xf32>
    %95 = vector.broadcast %94 : vector<1x256xf32> to vector<64x256xf32>
    %96 = arith.addf %92, %95 : vector<64x256xf32>
    %cst_42 = arith.constant 0.000000e+00 : f32
    %97 = vector.broadcast %cst_42 : f32 to vector<64x256xf32>
    %98 = arith.maximumf %96, %97 : vector<64x256xf32>
    %99 = arith.truncf %98 : vector<64x256xf32> to vector<64x256xbf16>
    %c0_43 = arith.constant 0 : index
    %c0_44 = arith.constant 0 : index
    %c0_45 = arith.constant 0 : index
    %100 = vector.load %arg18[%c0_43, %c0_44, %c0_45] : memref<1x256x128xbf16, #tpu.memory_space<vmem>>, vector<1x256x128xbf16>
    %101 = vector.shape_cast %100 : vector<1x256x128xbf16> to vector<256x128xbf16>
    %cst_46 = arith.constant dense<0.000000e+00> : vector<64x128xf32>
    %102 = tpu.matmul %99, %101, %cst_46 {dimension_numbers = #tpu.dot_dimension_numbers<[1], [0], [0], [1], [0, 0, 1, 1], [], []>} : vector<64x256xbf16>, vector<256x128xbf16>, vector<64x128xf32> -> vector<64x128xf32>
    %c0_47 = arith.constant 0 : index
    %c0_48 = arith.constant 0 : index
    %c0_49 = arith.constant 0 : index
    %103 = vector.load %arg19[%c0_47, %c0_48, %c0_49] : memref<1x1x128xf32, #tpu.memory_space<vmem>>, vector<1x1x128xf32>
    %104 = vector.shape_cast %103 : vector<1x1x128xf32> to vector<1x128xf32>
    %105 = vector.broadcast %104 : vector<1x128xf32> to vector<64x128xf32>
    %106 = arith.addf %102, %105 : vector<64x128xf32>
    %107 = arith.addf %88, %106 : vector<64x128xf32>
    %c0_50 = arith.constant 0 : index
    %c0_51 = arith.constant 0 : index
    %c0_52 = arith.constant 0 : index
    %108 = vector.load %arg20[%c0_50, %c0_51, %c0_52] : memref<1x1x128xf32, #tpu.memory_space<vmem>>, vector<1x1x128xf32>
    %109 = vector.shape_cast %108 : vector<1x1x128xf32> to vector<1x128xf32>
    %c0_53 = arith.constant 0 : index
    %c0_54 = arith.constant 0 : index
    %c0_55 = arith.constant 0 : index
    %110 = vector.load %arg21[%c0_53, %c0_54, %c0_55] : memref<1x1x128xf32, #tpu.memory_space<vmem>>, vector<1x1x128xf32>
    %111 = vector.shape_cast %110 : vector<1x1x128xf32> to vector<1x128xf32>
    %cst_56 = arith.constant dense<0.000000e+00> : vector<64xf32>
    %112 = vector.multi_reduction <add>, %107, %cst_56 [1] : vector<64x128xf32> to vector<64xf32>
    %113 = vector.shape_cast %112 : vector<64xf32> to vector<64x1xf32>
    %cst_57 = arith.constant 1.280000e+02 : f32
    %114 = vector.broadcast %cst_57 : f32 to vector<64x1xf32>
    %115 = arith.divf %113, %114 : vector<64x1xf32>
    %116 = vector.broadcast %115 : vector<64x1xf32> to vector<64x128xf32>
    %117 = arith.subf %107, %116 : vector<64x128xf32>
    %118 = arith.mulf %117, %117 : vector<64x128xf32>
    %cst_58 = arith.constant dense<0.000000e+00> : vector<64xf32>
    %119 = vector.multi_reduction <add>, %118, %cst_58 [1] : vector<64x128xf32> to vector<64xf32>
    %120 = vector.shape_cast %119 : vector<64xf32> to vector<64x1xf32>
    %cst_59 = arith.constant 1.280000e+02 : f32
    %121 = vector.broadcast %cst_59 : f32 to vector<64x1xf32>
    %122 = arith.divf %120, %121 : vector<64x1xf32>
    %cst_60 = arith.constant 9.99999974E-6 : f32
    %123 = vector.broadcast %cst_60 : f32 to vector<64x1xf32>
    %124 = arith.addf %122, %123 : vector<64x1xf32>
    %125 = math.rsqrt %124 : vector<64x1xf32>
    %126 = vector.broadcast %125 : vector<64x1xf32> to vector<64x128xf32>
    %127 = arith.mulf %117, %126 : vector<64x128xf32>
    %128 = vector.broadcast %109 : vector<1x128xf32> to vector<64x128xf32>
    %129 = arith.mulf %127, %128 : vector<64x128xf32>
    %130 = vector.broadcast %111 : vector<1x128xf32> to vector<64x128xf32>
    %131 = arith.addf %129, %130 : vector<64x128xf32>
    %c0_61 = arith.constant 0 : index
    %c0_62 = arith.constant 0 : index
    %132 = vector.load %arg25[%c0_61, %c0_62] : memref<64x128xf32, #tpu.memory_space<vmem>>, vector<64x128xf32>
    tpu.vector_store %arg25[%c0_61, %c0_62], %131 {strides = array<i32>} : memref<64x128xf32, #tpu.memory_space<vmem>>, vector<64x128xf32>,
    %c1_i32 = arith.constant 1 : i32
    %133 = arith.cmpi eq, %arg0, %c1_i32 : i32
    %134 = arith.extui %133 : i1 to i32
    %c0_i32_63 = arith.constant 0 : i32
    %135 = arith.cmpi ne, %134, %c0_i32_63 : i32
    scf.if %135 {
      %136 = arith.truncf %131 : vector<64x128xf32> to vector<64x128xbf16>
      %c0_64 = arith.constant 0 : index
      %c0_65 = arith.constant 0 : index
      %137 = vector.load %arg22[%c0_64, %c0_65] : memref<128x2xbf16, #tpu.memory_space<vmem>>, vector<128x2xbf16>
      %cst_66 = arith.constant dense<0.000000e+00> : vector<64x2xf32>
      %138 = tpu.matmul %136, %137, %cst_66 {dimension_numbers = #tpu.dot_dimension_numbers<[1], [0], [0], [1], [0, 0, 1, 1], [], []>} : vector<64x128xbf16>, vector<128x2xbf16>, vector<64x2xf32> -> vector<64x2xf32>
      %c0_67 = arith.constant 0 : index
      %c0_68 = arith.constant 0 : index
      %139 = vector.load %arg23[%c0_67, %c0_68] : memref<1x2xf32, #tpu.memory_space<vmem>>, vector<1x2xf32>
      %140 = vector.broadcast %139 : vector<1x2xf32> to vector<64x2xf32>
      %141 = arith.addf %138, %140 : vector<64x2xf32>
      %142 = tpu.iota {dimensions = array<i32: 1>} : vector<64x2xi32>
      %c0_i32_69 = arith.constant 0 : i32
      %143 = vector.broadcast %c0_i32_69 : i32 to vector<64x2xi32>
      %144 = arith.cmpi eq, %142, %143 : vector<64x2xi32>
      %cst_70 = arith.constant 0.000000e+00 : f32
      %145 = vector.broadcast %cst_70 : f32 to vector<64x2xf32>
      %146 = arith.maximumf %141, %145 : vector<64x2xf32>
      %147 = arith.negf %141 : vector<64x2xf32>
      %148 = math.exp %147 : vector<64x2xf32>
      %cst_71 = arith.constant 1.000000e+00 : f32
      %149 = vector.broadcast %cst_71 : f32 to vector<64x2xf32>
      %150 = arith.addf %149, %148 : vector<64x2xf32>
      %151 = arith.divf %149, %150 : vector<64x2xf32>
      %152 = arith.select %144, %146, %151 : vector<64x2xi1>, vector<64x2xf32>
      %c0_72 = arith.constant 0 : index
      %c0_73 = arith.constant 0 : index
      %153 = vector.load %arg24[%c0_72, %c0_73] : memref<64x2xf32, #tpu.memory_space<vmem>>, vector<64x2xf32>
      tpu.vector_store %arg24[%c0_72, %c0_73], %152 {strides = array<i32>} : memref<64x2xf32, #tpu.memory_space<vmem>>, vector<64x2xf32>,
    } else {
    }
    return
  }
  func.func @transform_0(%arg0: i32) -> (i32, i32) {
    %c0_i32 = arith.constant 0 : i32
    %c0_i32_0 = arith.constant 0 : i32
    %c0_i32_1 = arith.constant 0 : i32
    return %c0_i32, %c0_i32_0 : i32, i32
  }
  func.func @transform_1(%arg0: i32) -> (i32, i32) {
    %c0_i32 = arith.constant 0 : i32
    %c0_i32_0 = arith.constant 0 : i32
    %c0_i32_1 = arith.constant 0 : i32
    return %c0_i32, %c0_i32_0 : i32, i32
  }
  func.func @transform_2(%arg0: i32) -> (i32, i32) {
    %c0_i32 = arith.constant 0 : i32
    %c0_i32_0 = arith.constant 0 : i32
    %c0_i32_1 = arith.constant 0 : i32
    return %c0_i32, %c0_i32_0 : i32, i32
  }
  func.func @transform_3(%arg0: i32) -> (i32, i32) {
    %c0_i32 = arith.constant 0 : i32
    %c0_i32_0 = arith.constant 0 : i32
    %c0_i32_1 = arith.constant 0 : i32
    return %c0_i32, %c0_i32_0 : i32, i32
  }
  func.func @transform_4(%arg0: i32) -> (i32, i32) {
    %c0_i32 = arith.constant 0 : i32
    %c0_i32_0 = arith.constant 0 : i32
    %c0_i32_1 = arith.constant 0 : i32
    return %c0_i32, %c0_i32_0 : i32, i32
  }
  func.func @transform_5(%arg0: i32) -> (i32, i32) {
    %c0_i32 = arith.constant 0 : i32
    %c0_i32_0 = arith.constant 0 : i32
    %c0_i32_1 = arith.constant 0 : i32
    return %c0_i32, %c0_i32_0 : i32, i32
  }
  func.func @transform_6(%arg0: i32) -> (i32, i32) {
    %c0_i32 = arith.constant 0 : i32
    %c0_i32_0 = arith.constant 0 : i32
    %c0_i32_1 = arith.constant 0 : i32
    return %c0_i32, %c0_i32_0 : i32, i32
  }
  func.func @transform_7(%arg0: i32) -> (i32, i32) {
    %c0_i32 = arith.constant 0 : i32
    %c0_i32_0 = arith.constant 0 : i32
    %c0_i32_1 = arith.constant 0 : i32
    return %c0_i32, %c0_i32_0 : i32, i32
  }
  func.func @transform_8(%arg0: i32) -> (i32, i32) {
    %c0_i32 = arith.constant 0 : i32
    %c0_i32_0 = arith.constant 0 : i32
    %c0_i32_1 = arith.constant 0 : i32
    return %c0_i32, %c0_i32_0 : i32, i32
  }
  func.func @transform_9(%arg0: i32) -> (i32, i32, i32) {
    %c0_i32 = arith.constant 0 : i32
    %c0_i32_0 = arith.constant 0 : i32
    %c0_i32_1 = arith.constant 0 : i32
    return %arg0, %c0_i32, %c0_i32_0 : i32, i32, i32
  }
  func.func @transform_10(%arg0: i32) -> (i32, i32, i32) {
    %c0_i32 = arith.constant 0 : i32
    %c0_i32_0 = arith.constant 0 : i32
    %c0_i32_1 = arith.constant 0 : i32
    return %arg0, %c0_i32, %c0_i32_0 : i32, i32, i32
  }
  func.func @transform_11(%arg0: i32) -> (i32, i32, i32) {
    %c0_i32 = arith.constant 0 : i32
    %c0_i32_0 = arith.constant 0 : i32
    %c0_i32_1 = arith.constant 0 : i32
    return %arg0, %c0_i32, %c0_i32_0 : i32, i32, i32
  }
  func.func @transform_12(%arg0: i32) -> (i32, i32, i32) {
    %c0_i32 = arith.constant 0 : i32
    %c0_i32_0 = arith.constant 0 : i32
    %c0_i32_1 = arith.constant 0 : i32
    return %arg0, %c0_i32, %c0_i32_0 : i32, i32, i32
  }
  func.func @transform_13(%arg0: i32) -> (i32, i32, i32) {
    %c0_i32 = arith.constant 0 : i32
    %c0_i32_0 = arith.constant 0 : i32
    %c0_i32_1 = arith.constant 0 : i32
    return %arg0, %c0_i32, %c0_i32_0 : i32, i32, i32
  }
  func.func @transform_14(%arg0: i32) -> (i32, i32, i32) {
    %c0_i32 = arith.constant 0 : i32
    %c0_i32_0 = arith.constant 0 : i32
    %c0_i32_1 = arith.constant 0 : i32
    return %arg0, %c0_i32, %c0_i32_0 : i32, i32, i32
  }
  func.func @transform_15(%arg0: i32) -> (i32, i32, i32) {
    %c0_i32 = arith.constant 0 : i32
    %c0_i32_0 = arith.constant 0 : i32
    %c0_i32_1 = arith.constant 0 : i32
    return %arg0, %c0_i32, %c0_i32_0 : i32, i32, i32
  }
  func.func @transform_16(%arg0: i32) -> (i32, i32, i32) {
    %c0_i32 = arith.constant 0 : i32
    %c0_i32_0 = arith.constant 0 : i32
    %c0_i32_1 = arith.constant 0 : i32
    return %arg0, %c0_i32, %c0_i32_0 : i32, i32, i32
  }
  func.func @transform_17(%arg0: i32) -> (i32, i32, i32) {
    %c0_i32 = arith.constant 0 : i32
    %c0_i32_0 = arith.constant 0 : i32
    %c0_i32_1 = arith.constant 0 : i32
    return %arg0, %c0_i32, %c0_i32_0 : i32, i32, i32
  }
  func.func @transform_18(%arg0: i32) -> (i32, i32, i32) {
    %c0_i32 = arith.constant 0 : i32
    %c0_i32_0 = arith.constant 0 : i32
    %c0_i32_1 = arith.constant 0 : i32
    return %arg0, %c0_i32, %c0_i32_0 : i32, i32, i32
  }
  func.func @transform_19(%arg0: i32) -> (i32, i32, i32) {
    %c0_i32 = arith.constant 0 : i32
    %c0_i32_0 = arith.constant 0 : i32
    %c0_i32_1 = arith.constant 0 : i32
    return %arg0, %c0_i32, %c0_i32_0 : i32, i32, i32
  }
  func.func @transform_20(%arg0: i32) -> (i32, i32, i32) {
    %c0_i32 = arith.constant 0 : i32
    %c0_i32_0 = arith.constant 0 : i32
    %c0_i32_1 = arith.constant 0 : i32
    return %arg0, %c0_i32, %c0_i32_0 : i32, i32, i32
  }
  func.func @transform_21(%arg0: i32) -> (i32, i32) {
    %c0_i32 = arith.constant 0 : i32
    %c0_i32_0 = arith.constant 0 : i32
    %c0_i32_1 = arith.constant 0 : i32
    return %c0_i32, %c0_i32_0 : i32, i32
  }
  func.func @transform_22(%arg0: i32) -> (i32, i32) {
    %c0_i32 = arith.constant 0 : i32
    %c0_i32_0 = arith.constant 0 : i32
    %c0_i32_1 = arith.constant 0 : i32
    return %c0_i32, %c0_i32_0 : i32, i32
  }
  func.func @transform_23(%arg0: i32) -> (i32, i32) {
    %c0_i32 = arith.constant 0 : i32
    %c0_i32_0 = arith.constant 0 : i32
    %c0_i32_1 = arith.constant 0 : i32
    return %c0_i32, %c0_i32_0 : i32, i32
  }
}

</mosaic_0001>

<llo_original>
// kernel: two_step_network_with_attention.1
$region0: #{two_step_network_with_attention.1}
  #allocation0 [shape = 'u32[]', space=smem, size = 0x4, offset = 0x4, fixed_abs, tag = 'smem constant byte address 0x4 - core index']
  #allocation1 [shape = 'u32[144,128]{1,0:T(1,128)}', space=vmem, size = 0x12000, scoped, tag = 'internal scratch']
  #allocation2 [shape = 'f32[64,128]{1,0:T(8,128)}', space=vmem, size = 0x8000, scoped, tag = 'scratch operand']
  %s0 = inlined_call_operand.vmem [shape: f32[64,4], index: 0, kind: input, shape index: {}]
  %s1 = inlined_call_operand.vmem [shape: f32[2,2], index: 1, kind: input, shape index: {}]
  %s2 = inlined_call_operand.vmem [shape: f32[2,32], index: 2, kind: input, shape index: {}]
  %s3 = inlined_call_operand.vmem [shape: f32[1,32], index: 3, kind: input, shape index: {}]
  %s4 = inlined_call_operand.vmem [shape: f32[4,128], index: 4, kind: input, shape index: {}]
  %s5 = inlined_call_operand.vmem [shape: bf16[32,128], index: 5, kind: input, shape index: {}]
  %s6 = inlined_call_operand.vmem [shape: f32[32,128], index: 6, kind: input, shape index: {}]
  %s7 = inlined_call_operand.vmem [shape: f32[512,128], index: 7, kind: input, shape index: {}]
  %s8 = inlined_call_operand.vmem [shape: f32[512,64], index: 8, kind: input, shape index: {}]
  %s9 = inlined_call_operand.vmem [shape: bf16[2,128,384], index: 9, kind: input, shape index: {}]
  %s10 = inlined_call_operand.vmem [shape: f32[2,1,384], index: 10, kind: input, shape index: {}]
  %s11 = inlined_call_operand.vmem [shape: bf16[2,128,128], index: 11, kind: input, shape index: {}]
  %s12 = inlined_call_operand.vmem [shape: f32[2,1,128], index: 12, kind: input, shape index: {}]
  %s13 = inlined_call_operand.vmem [shape: f32[2,1,128], index: 13, kind: input, shape index: {}]
  %s14 = inlined_call_operand.vmem [shape: f32[2,1,128], index: 14, kind: input, shape index: {}]
  %s15 = inlined_call_operand.vmem [shape: bf16[2,128,256], index: 15, kind: input, shape index: {}]
  %s16 = inlined_call_operand.vmem [shape: f32[2,1,256], index: 16, kind: input, shape index: {}]
  %s17 = inlined_call_operand.vmem [shape: bf16[2,256,128], index: 17, kind: input, shape index: {}]
  %s18 = inlined_call_operand.vmem [shape: f32[2,1,128], index: 18, kind: input, shape index: {}]
  %s19 = inlined_call_operand.vmem [shape: f32[2,1,128], index: 19, kind: input, shape index: {}]
  %s20 = inlined_call_operand.vmem [shape: f32[2,1,128], index: 20, kind: input, shape index: {}]
  %s21 = inlined_call_operand.vmem [shape: bf16[128,2], index: 21, kind: input, shape index: {}]
  %s22 = inlined_call_operand.vmem [shape: f32[1,2], index: 22, kind: input, shape index: {}]
  %s23 = inlined_call_operand.vmem [shape: f32[64,2], index: 23, kind: output, shape index: {}]
  %s24 = sld [smem:[#allocation0]]
  $region133: #{two_step_network_with_attention.1} parent=0
    _
  %s26 = ssub.s32 1, %s24
  %s27 = scalar_select 0, %s26, %s24
  loop: start=0, step=1, limit=4
  $region2: #{two_step_network_with_attention.1} parent=0 // loop_pre_header
    _
  $region3: #{two_step_network_with_attention.1} parent=0 // loop_header
    %s29 = sphi 0, %s33
    %p30 = scmp.ge.s32.totalorder %s29, 4
    %s37 = sphi 0, %s37
    %s39 = sphi 0, %s37
    %s40 = sphi 0, %s39
    %s54 = sphi 0, %s40
    %s58 = sphi 0, %s58
    %s60 = sphi 0, %s58
    %s61 = sphi 0, %s60
    %s75 = sphi 0, %s61
    %s79 = sphi 0, %s79
    %s81 = sphi 0, %s79
    %s82 = sphi 0, %s81
    %s96 = sphi 0, %s82
    %s100 = sphi 0, %s100
    %s102 = sphi 0, %s100
    %s103 = sphi 0, %s102
    %s117 = sphi 0, %s103
    %s121 = sphi 0, %s121
    %s123 = sphi 0, %s121
    %s124 = sphi 0, %s123
    %s138 = sphi 0, %s124
    %s142 = sphi 0, %s142
    %s144 = sphi 0, %s142
    %s145 = sphi 0, %s144
    %s159 = sphi 0, %s145
    %s163 = sphi 0, %s163
    %s165 = sphi 0, %s163
    %s166 = sphi 0, %s165
    %s180 = sphi 0, %s166
    %s184 = sphi 0, %s184
    %s186 = sphi 0, %s184
    %s187 = sphi 0, %s186
    %s201 = sphi 0, %s187
    %s205 = sphi 0, %s205
    %s207 = sphi 0, %s205
    %s208 = sphi 0, %s207
    %s222 = sphi 0, %s208
    %s228 = sphi 0, %s230
    %s231 = sphi 0, %s228
    %s232 = sphi 0, %s231
    %s248 = sphi 0, %s232
    %s254 = sphi 0, %s256
    %s257 = sphi 0, %s254
    %s258 = sphi 0, %s257
    %s274 = sphi 0, %s258
    %s280 = sphi 0, %s282
    %s283 = sphi 0, %s280
    %s284 = sphi 0, %s283
    %s300 = sphi 0, %s284
    %s306 = sphi 0, %s308
    %s309 = sphi 0, %s306
    %s310 = sphi 0, %s309
    %s326 = sphi 0, %s310
    %s332 = sphi 0, %s334
    %s335 = sphi 0, %s332
    %s336 = sphi 0, %s335
    %s352 = sphi 0, %s336
    %s358 = sphi 0, %s360
    %s361 = sphi 0, %s358
    %s362 = sphi 0, %s361
    %s378 = sphi 0, %s362
    %s384 = sphi 0, %s386
    %s387 = sphi 0, %s384
    %s388 = sphi 0, %s387
    %s404 = sphi 0, %s388
    %s410 = sphi 0, %s412
    %s413 = sphi 0, %s410
    %s414 = sphi 0, %s413
    %s430 = sphi 0, %s414
    %s436 = sphi 0, %s438
    %s439 = sphi 0, %s436
    %s440 = sphi 0, %s439
    %s456 = sphi 0, %s440
    %s462 = sphi 0, %s464
    %s465 = sphi 0, %s462
    %s466 = sphi 0, %s465
    %s482 = sphi 0, %s466
    %s488 = sphi 0, %s490
    %s491 = sphi 0, %s488
    %s492 = sphi 0, %s491
    %s508 = sphi 0, %s492
    %s514 = sphi 0, %s516
    %s517 = sphi 0, %s514
    %s518 = sphi 0, %s517
    %s534 = sphi 0, %s518
    %s538 = sphi 0, %s538
    %s540 = sphi 0, %s538
    %s541 = sphi 0, %s540
    %s555 = sphi 0, %s541
    %s559 = sphi 0, %s559
    %s561 = sphi 0, %s559
    %s562 = sphi 0, %s561
    %s576 = sphi 0, %s562
    %s580 = sphi 0, %s580
    %s582 = sphi 0, %s580
    %s583 = sphi 0, %s582
    %s597 = sphi 0, %s583
  $region4: #{two_step_network_with_attention.1} parent=0 // loop_header_branch
    %32 = sbr.rel (%p30) target = $region8
  $region5: #{two_step_network_with_attention.1} parent=0 // loop_body
    %s34 = ssub.s32 %s29, 1
    %s35 = ssub.s32 %s29, 2
    %s36 = sadd.s32 %s29, 1
    %s38 = sadd.s32 %s37, 1
    %p41 = scmp.eq.s32.totalorder %s29, 1
    %p42 = scmp.ne.s32.totalorder %s37, %s39
    %p43 = scmp.eq.s32.totalorder %s29, 0
    %p44 = por %p42, %p43
    %p45 = scmp.ne.s32.totalorder %s37, %s39
    %p46 = scmp.eq.s32.totalorder %s34, 1
    %p47 = por %p45, %p46
    %p48 = scmp.ne.s32.totalorder %s39, %s40
    %p49 = scmp.eq.s32.totalorder %s34, 0
    %p50 = por %p48, %p49
    %p51 = scmp.ne.s32.totalorder %s39, %s40
    %p52 = scmp.eq.s32.totalorder %s35, 1
    %p53 = por %p51, %p52
    %p55 = scmp.ne.s32.totalorder %s40, %s54
    %p56 = scmp.eq.s32.totalorder %s35, 0
    %p57 = por %p55, %p56
    %s59 = sadd.s32 %s58, 1
    %p62 = scmp.eq.s32.totalorder %s29, 1
    %p63 = scmp.ne.s32.totalorder %s58, %s60
    %p64 = scmp.eq.s32.totalorder %s29, 0
    %p65 = por %p63, %p64
    %p66 = scmp.ne.s32.totalorder %s58, %s60
    %p67 = scmp.eq.s32.totalorder %s34, 1
    %p68 = por %p66, %p67
    %p69 = scmp.ne.s32.totalorder %s60, %s61
    %p70 = scmp.eq.s32.totalorder %s34, 0
    %p71 = por %p69, %p70
    %p72 = scmp.ne.s32.totalorder %s60, %s61
    %p73 = scmp.eq.s32.totalorder %s35, 1
    %p74 = por %p72, %p73
    %p76 = scmp.ne.s32.totalorder %s61, %s75
    %p77 = scmp.eq.s32.totalorder %s35, 0
    %p78 = por %p76, %p77
    %s80 = sadd.s32 %s79, 1
    %p83 = scmp.eq.s32.totalorder %s29, 1
    %p84 = scmp.ne.s32.totalorder %s79, %s81
    %p85 = scmp.eq.s32.totalorder %s29, 0
    %p86 = por %p84, %p85
    %p87 = scmp.ne.s32.totalorder %s79, %s81
    %p88 = scmp.eq.s32.totalorder %s34, 1
    %p89 = por %p87, %p88
    %p90 = scmp.ne.s32.totalorder %s81, %s82
    %p91 = scmp.eq.s32.totalorder %s34, 0
    %p92 = por %p90, %p91
    %p93 = scmp.ne.s32.totalorder %s81, %s82
    %p94 = scmp.eq.s32.totalorder %s35, 1
    %p95 = por %p93, %p94
    %p97 = scmp.ne.s32.totalorder %s82, %s96
    %p98 = scmp.eq.s32.totalorder %s35, 0
    %p99 = por %p97, %p98
    %s101 = sadd.s32 %s100, 1
    %p104 = scmp.eq.s32.totalorder %s29, 1
    %p105 = scmp.ne.s32.totalorder %s100, %s102
    %p106 = scmp.eq.s32.totalorder %s29, 0
    %p107 = por %p105, %p106
    %p108 = scmp.ne.s32.totalorder %s100, %s102
    %p109 = scmp.eq.s32.totalorder %s34, 1
    %p110 = por %p108, %p109
    %p111 = scmp.ne.s32.totalorder %s102, %s103
    %p112 = scmp.eq.s32.totalorder %s34, 0
    %p113 = por %p111, %p112
    %p114 = scmp.ne.s32.totalorder %s102, %s103
    %p115 = scmp.eq.s32.totalorder %s35, 1
    %p116 = por %p114, %p115
    %p118 = scmp.ne.s32.totalorder %s103, %s117
    %p119 = scmp.eq.s32.totalorder %s35, 0
    %p120 = por %p118, %p119
    %s122 = sadd.s32 %s121, 1
    %p125 = scmp.eq.s32.totalorder %s29, 1
    %p126 = scmp.ne.s32.totalorder %s121, %s123
    %p127 = scmp.eq.s32.totalorder %s29, 0
    %p128 = por %p126, %p127
    %p129 = scmp.ne.s32.totalorder %s121, %s123
    %p130 = scmp.eq.s32.totalorder %s34, 1
    %p131 = por %p129, %p130
    %p132 = scmp.ne.s32.totalorder %s123, %s124
    %p133 = scmp.eq.s32.totalorder %s34, 0
    %p134 = por %p132, %p133
    %p135 = scmp.ne.s32.totalorder %s123, %s124
    %p136 = scmp.eq.s32.totalorder %s35, 1
    %p137 = por %p135, %p136
    %p139 = scmp.ne.s32.totalorder %s124, %s138
    %p140 = scmp.eq.s32.totalorder %s35, 0
    %p141 = por %p139, %p140
    %s143 = sadd.s32 %s142, 1
    %p146 = scmp.eq.s32.totalorder %s29, 1
    %p147 = scmp.ne.s32.totalorder %s142, %s144
    %p148 = scmp.eq.s32.totalorder %s29, 0
    %p149 = por %p147, %p148
    %p150 = scmp.ne.s32.totalorder %s142, %s144
    %p151 = scmp.eq.s32.totalorder %s34, 1
    %p152 = por %p150, %p151
    %p153 = scmp.ne.s32.totalorder %s144, %s145
    %p154 = scmp.eq.s32.totalorder %s34, 0
    %p155 = por %p153, %p154
    %p156 = scmp.ne.s32.totalorder %s144, %s145
    %p157 = scmp.eq.s32.totalorder %s35, 1
    %p158 = por %p156, %p157
    %p160 = scmp.ne.s32.totalorder %s145, %s159
    %p161 = scmp.eq.s32.totalorder %s35, 0
    %p162 = por %p160, %p161
    %s164 = sadd.s32 %s163, 1
    %p167 = scmp.eq.s32.totalorder %s29, 1
    %p168 = scmp.ne.s32.totalorder %s163, %s165
    %p169 = scmp.eq.s32.totalorder %s29, 0
    %p170 = por %p168, %p169
    %p171 = scmp.ne.s32.totalorder %s163, %s165
    %p172 = scmp.eq.s32.totalorder %s34, 1
    %p173 = por %p171, %p172
    %p174 = scmp.ne.s32.totalorder %s165, %s166
    %p175 = scmp.eq.s32.totalorder %s34, 0
    %p176 = por %p174, %p175
    %p177 = scmp.ne.s32.totalorder %s165, %s166
    %p178 = scmp.eq.s32.totalorder %s35, 1
    %p179 = por %p177, %p178
    %p181 = scmp.ne.s32.totalorder %s166, %s180
    %p182 = scmp.eq.s32.totalorder %s35, 0
    %p183 = por %p181, %p182
    %s185 = sadd.s32 %s184, 1
    %p188 = scmp.eq.s32.totalorder %s29, 1
    %p189 = scmp.ne.s32.totalorder %s184, %s186
    %p190 = scmp.eq.s32.totalorder %s29, 0
    %p191 = por %p189, %p190
    %p192 = scmp.ne.s32.totalorder %s184, %s186
    %p193 = scmp.eq.s32.totalorder %s34, 1
    %p194 = por %p192, %p193
    %p195 = scmp.ne.s32.totalorder %s186, %s187
    %p196 = scmp.eq.s32.totalorder %s34, 0
    %p197 = por %p195, %p196
    %p198 = scmp.ne.s32.totalorder %s186, %s187
    %p199 = scmp.eq.s32.totalorder %s35, 1
    %p200 = por %p198, %p199
    %p202 = scmp.ne.s32.totalorder %s187, %s201
    %p203 = scmp.eq.s32.totalorder %s35, 0
    %p204 = por %p202, %p203
    %s206 = sadd.s32 %s205, 1
    %p209 = scmp.eq.s32.totalorder %s29, 1
    %p210 = scmp.ne.s32.totalorder %s205, %s207
    %p211 = scmp.eq.s32.totalorder %s29, 0
    %p212 = por %p210, %p211
    %p213 = scmp.ne.s32.totalorder %s205, %s207
    %p214 = scmp.eq.s32.totalorder %s34, 1
    %p215 = por %p213, %p214
    %p216 = scmp.ne.s32.totalorder %s207, %s208
    %p217 = scmp.eq.s32.totalorder %s34, 0
    %p218 = por %p216, %p217
    %p219 = scmp.ne.s32.totalorder %s207, %s208
    %p220 = scmp.eq.s32.totalorder %s35, 1
    %p221 = por %p219, %p220
    %p223 = scmp.ne.s32.totalorder %s208, %s222
    %p224 = scmp.eq.s32.totalorder %s35, 0
    %p225 = por %p223, %p224
    %s226 = ssub.s32 %s29, %s36
    %p227 = scmp.eq.s32.totalorder %s226, 0
    %s229 = sadd.s32 %s228, 1
    %s230 = scalar_select %p227, %s228, %s229
    %p233 = pneg %p227
    %p234 = scmp.eq.s32.totalorder %s29, 1
    %p235 = por %p233, %p234
    %p236 = scmp.ne.s32.totalorder %s228, %s231
    %p237 = scmp.eq.s32.totalorder %s29, 0
    %p238 = por %p236, %p237
    %p239 = scmp.ne.s32.totalorder %s228, %s231
    %p240 = scmp.eq.s32.totalorder %s34, 1
    %p241 = por %p239, %p240
    %p242 = scmp.ne.s32.totalorder %s231, %s232
    %p243 = scmp.eq.s32.totalorder %s34, 0
    %p244 = por %p242, %p243
    %p245 = scmp.ne.s32.totalorder %s231, %s232
    %p246 = scmp.eq.s32.totalorder %s35, 1
    %p247 = por %p245, %p246
    %p249 = scmp.ne.s32.totalorder %s232, %s248
    %p250 = scmp.eq.s32.totalorder %s35, 0
    %p251 = por %p249, %p250
    %s252 = ssub.s32 %s29, %s36
    %p253 = scmp.eq.s32.totalorder %s252, 0
    %s255 = sadd.s32 %s254, 1
    %s256 = scalar_select %p253, %s254, %s255
    %p259 = pneg %p253
    %p260 = scmp.eq.s32.totalorder %s29, 1
    %p261 = por %p259, %p260
    %p262 = scmp.ne.s32.totalorder %s254, %s257
    %p263 = scmp.eq.s32.totalorder %s29, 0
    %p264 = por %p262, %p263
    %p265 = scmp.ne.s32.totalorder %s254, %s257
    %p266 = scmp.eq.s32.totalorder %s34, 1
    %p267 = por %p265, %p266
    %p268 = scmp.ne.s32.totalorder %s257, %s258
    %p269 = scmp.eq.s32.totalorder %s34, 0
    %p270 = por %p268, %p269
    %p271 = scmp.ne.s32.totalorder %s257, %s258
    %p272 = scmp.eq.s32.totalorder %s35, 1
    %p273 = por %p271, %p272
    %p275 = scmp.ne.s32.totalorder %s258, %s274
    %p276 = scmp.eq.s32.totalorder %s35, 0
    %p277 = por %p275, %p276
    %s278 = ssub.s32 %s29, %s36
    %p279 = scmp.eq.s32.totalorder %s278, 0
    %s281 = sadd.s32 %s280, 1
    %s282 = scalar_select %p279, %s280, %s281
    %p285 = pneg %p279
    %p286 = scmp.eq.s32.totalorder %s29, 1
    %p287 = por %p285, %p286
    %p288 = scmp.ne.s32.totalorder %s280, %s283
    %p289 = scmp.eq.s32.totalorder %s29, 0
    %p290 = por %p288, %p289
    %p291 = scmp.ne.s32.totalorder %s280, %s283
    %p292 = scmp.eq.s32.totalorder %s34, 1
    %p293 = por %p291, %p292
    %p294 = scmp.ne.s32.totalorder %s283, %s284
    %p295 = scmp.eq.s32.totalorder %s34, 0
    %p296 = por %p294, %p295
    %p297 = scmp.ne.s32.totalorder %s283, %s284
    %p298 = scmp.eq.s32.totalorder %s35, 1
    %p299 = por %p297, %p298
    %p301 = scmp.ne.s32.totalorder %s284, %s300
    %p302 = scmp.eq.s32.totalorder %s35, 0
    %p303 = por %p301, %p302
    %s304 = ssub.s32 %s29, %s36
    %p305 = scmp.eq.s32.totalorder %s304, 0
    %s307 = sadd.s32 %s306, 1
    %s308 = scalar_select %p305, %s306, %s307
    %p311 = pneg %p305
    %p312 = scmp.eq.s32.totalorder %s29, 1
    %p313 = por %p311, %p312
    %p314 = scmp.ne.s32.totalorder %s306, %s309
    %p315 = scmp.eq.s32.totalorder %s29, 0
    %p316 = por %p314, %p315
    %p317 = scmp.ne.s32.totalorder %s306, %s309
    %p318 = scmp.eq.s32.totalorder %s34, 1
    %p319 = por %p317, %p318
    %p320 = scmp.ne.s32.totalorder %s309, %s310
    %p321 = scmp.eq.s32.totalorder %s34, 0
    %p322 = por %p320, %p321
    %p323 = scmp.ne.s32.totalorder %s309, %s310
    %p324 = scmp.eq.s32.totalorder %s35, 1
    %p325 = por %p323, %p324
    %p327 = scmp.ne.s32.totalorder %s310, %s326
    %p328 = scmp.eq.s32.totalorder %s35, 0
    %p329 = por %p327, %p328
    %s330 = ssub.s32 %s29, %s36
    %p331 = scmp.eq.s32.totalorder %s330, 0
    %s333 = sadd.s32 %s332, 1
    %s334 = scalar_select %p331, %s332, %s333
    %p337 = pneg %p331
    %p338 = scmp.eq.s32.totalorder %s29, 1
    %p339 = por %p337, %p338
    %p340 = scmp.ne.s32.totalorder %s332, %s335
    %p341 = scmp.eq.s32.totalorder %s29, 0
    %p342 = por %p340, %p341
    %p343 = scmp.ne.s32.totalorder %s332, %s335
    %p344 = scmp.eq.s32.totalorder %s34, 1
    %p345 = por %p343, %p344
    %p346 = scmp.ne.s32.totalorder %s335, %s336
    %p347 = scmp.eq.s32.totalorder %s34, 0
    %p348 = por %p346, %p347
    %p349 = scmp.ne.s32.totalorder %s335, %s336
    %p350 = scmp.eq.s32.totalorder %s35, 1
    %p351 = por %p349, %p350
    %p353 = scmp.ne.s32.totalorder %s336, %s352
    %p354 = scmp.eq.s32.totalorder %s35, 0
    %p355 = por %p353, %p354
    %s356 = ssub.s32 %s29, %s36
    %p357 = scmp.eq.s32.totalorder %s356, 0
    %s359 = sadd.s32 %s358, 1
    %s360 = scalar_select %p357, %s358, %s359
    %p363 = pneg %p357
    %p364 = scmp.eq.s32.totalorder %s29, 1
    %p365 = por %p363, %p364
    %p366 = scmp.ne.s32.totalorder %s358, %s361
    %p367 = scmp.eq.s32.totalorder %s29, 0
    %p368 = por %p366, %p367
    %p369 = scmp.ne.s32.totalorder %s358, %s361
    %p370 = scmp.eq.s32.totalorder %s34, 1
    %p371 = por %p369, %p370
    %p372 = scmp.ne.s32.totalorder %s361, %s362
    %p373 = scmp.eq.s32.totalorder %s34, 0
    %p374 = por %p372, %p373
    %p375 = scmp.ne.s32.totalorder %s361, %s362
    %p376 = scmp.eq.s32.totalorder %s35, 1
    %p377 = por %p375, %p376
    %p379 = scmp.ne.s32.totalorder %s362, %s378
    %p380 = scmp.eq.s32.totalorder %s35, 0
    %p381 = por %p379, %p380
    %s382 = ssub.s32 %s29, %s36
    %p383 = scmp.eq.s32.totalorder %s382, 0
    %s385 = sadd.s32 %s384, 1
    %s386 = scalar_select %p383, %s384, %s385
    %p389 = pneg %p383
    %p390 = scmp.eq.s32.totalorder %s29, 1
    %p391 = por %p389, %p390
    %p392 = scmp.ne.s32.totalorder %s384, %s387
    %p393 = scmp.eq.s32.totalorder %s29, 0
    %p394 = por %p392, %p393
    %p395 = scmp.ne.s32.totalorder %s384, %s387
    %p396 = scmp.eq.s32.totalorder %s34, 1
    %p397 = por %p395, %p396
    %p398 = scmp.ne.s32.totalorder %s387, %s388
    %p399 = scmp.eq.s32.totalorder %s34, 0
    %p400 = por %p398, %p399
    %p401 = scmp.ne.s32.totalorder %s387, %s388
    %p402 = scmp.eq.s32.totalorder %s35, 1
    %p403 = por %p401, %p402
    %p405 = scmp.ne.s32.totalorder %s388, %s404
    %p406 = scmp.eq.s32.totalorder %s35, 0
    %p407 = por %p405, %p406
    %s408 = ssub.s32 %s29, %s36
    %p409 = scmp.eq.s32.totalorder %s408, 0
    %s411 = sadd.s32 %s410, 1
    %s412 = scalar_select %p409, %s410, %s411
    %p415 = pneg %p409
    %p416 = scmp.eq.s32.totalorder %s29, 1
    %p417 = por %p415, %p416
    %p418 = scmp.ne.s32.totalorder %s410, %s413
    %p419 = scmp.eq.s32.totalorder %s29, 0
    %p420 = por %p418, %p419
    %p421 = scmp.ne.s32.totalorder %s410, %s413
    %p422 = scmp.eq.s32.totalorder %s34, 1
    %p423 = por %p421, %p422
    %p424 = scmp.ne.s32.totalorder %s413, %s414
    %p425 = scmp.eq.s32.totalorder %s34, 0
    %p426 = por %p424, %p425
    %p427 = scmp.ne.s32.totalorder %s413, %s414
    %p428 = scmp.eq.s32.totalorder %s35, 1
    %p429 = por %p427, %p428
    %p431 = scmp.ne.s32.totalorder %s414, %s430
    %p432 = scmp.eq.s32.totalorder %s35, 0
    %p433 = por %p431, %p432
    %s434 = ssub.s32 %s29, %s36
    %p435 = scmp.eq.s32.totalorder %s434, 0
    %s437 = sadd.s32 %s436, 1
    %s438 = scalar_select %p435, %s436, %s437
    %p441 = pneg %p435
    %p442 = scmp.eq.s32.totalorder %s29, 1
    %p443 = por %p441, %p442
    %p444 = scmp.ne.s32.totalorder %s436, %s439
    %p445 = scmp.eq.s32.totalorder %s29, 0
    %p446 = por %p444, %p445
    %p447 = scmp.ne.s32.totalorder %s436, %s439
    %p448 = scmp.eq.s32.totalorder %s34, 1
    %p449 = por %p447, %p448
    %p450 = scmp.ne.s32.totalorder %s439, %s440
    %p451 = scmp.eq.s32.totalorder %s34, 0
    %p452 = por %p450, %p451
    %p453 = scmp.ne.s32.totalorder %s439, %s440
    %p454 = scmp.eq.s32.totalorder %s35, 1
    %p455 = por %p453, %p454
    %p457 = scmp.ne.s32.totalorder %s440, %s456
    %p458 = scmp.eq.s32.totalorder %s35, 0
    %p459 = por %p457, %p458
    %s460 = ssub.s32 %s29, %s36
    %p461 = scmp.eq.s32.totalorder %s460, 0
    %s463 = sadd.s32 %s462, 1
    %s464 = scalar_select %p461, %s462, %s463
    %p467 = pneg %p461
    %p468 = scmp.eq.s32.totalorder %s29, 1
    %p469 = por %p467, %p468
    %p470 = scmp.ne.s32.totalorder %s462, %s465
    %p471 = scmp.eq.s32.totalorder %s29, 0
    %p472 = por %p470, %p471
    %p473 = scmp.ne.s32.totalorder %s462, %s465
    %p474 = scmp.eq.s32.totalorder %s34, 1
    %p475 = por %p473, %p474
    %p476 = scmp.ne.s32.totalorder %s465, %s466
    %p477 = scmp.eq.s32.totalorder %s34, 0
    %p478 = por %p476, %p477
    %p479 = scmp.ne.s32.totalorder %s465, %s466
    %p480 = scmp.eq.s32.totalorder %s35, 1
    %p481 = por %p479, %p480
    %p483 = scmp.ne.s32.totalorder %s466, %s482
    %p484 = scmp.eq.s32.totalorder %s35, 0
    %p485 = por %p483, %p484
    %s486 = ssub.s32 %s29, %s36
    %p487 = scmp.eq.s32.totalorder %s486, 0
    %s489 = sadd.s32 %s488, 1
    %s490 = scalar_select %p487, %s488, %s489
    %p493 = pneg %p487
    %p494 = scmp.eq.s32.totalorder %s29, 1
    %p495 = por %p493, %p494
    %p496 = scmp.ne.s32.totalorder %s488, %s491
    %p497 = scmp.eq.s32.totalorder %s29, 0
    %p498 = por %p496, %p497
    %p499 = scmp.ne.s32.totalorder %s488, %s491
    %p500 = scmp.eq.s32.totalorder %s34, 1
    %p501 = por %p499, %p500
    %p502 = scmp.ne.s32.totalorder %s491, %s492
    %p503 = scmp.eq.s32.totalorder %s34, 0
    %p504 = por %p502, %p503
    %p505 = scmp.ne.s32.totalorder %s491, %s492
    %p506 = scmp.eq.s32.totalorder %s35, 1
    %p507 = por %p505, %p506
    %p509 = scmp.ne.s32.totalorder %s492, %s508
    %p510 = scmp.eq.s32.totalorder %s35, 0
    %p511 = por %p509, %p510
    %s512 = ssub.s32 %s29, %s36
    %p513 = scmp.eq.s32.totalorder %s512, 0
    %s515 = sadd.s32 %s514, 1
    %s516 = scalar_select %p513, %s514, %s515
    %p519 = pneg %p513
    %p520 = scmp.eq.s32.totalorder %s29, 1
    %p521 = por %p519, %p520
    %p522 = scmp.ne.s32.totalorder %s514, %s517
    %p523 = scmp.eq.s32.totalorder %s29, 0
    %p524 = por %p522, %p523
    %p525 = scmp.ne.s32.totalorder %s514, %s517
    %p526 = scmp.eq.s32.totalorder %s34, 1
    %p527 = por %p525, %p526
    %p528 = scmp.ne.s32.totalorder %s517, %s518
    %p529 = scmp.eq.s32.totalorder %s34, 0
    %p530 = por %p528, %p529
    %p531 = scmp.ne.s32.totalorder %s517, %s518
    %p532 = scmp.eq.s32.totalorder %s35, 1
    %p533 = por %p531, %p532
    %p535 = scmp.ne.s32.totalorder %s518, %s534
    %p536 = scmp.eq.s32.totalorder %s35, 0
    %p537 = por %p535, %p536
    %s539 = sadd.s32 %s538, 1
    %p542 = scmp.eq.s32.totalorder %s29, 1
    %p543 = scmp.ne.s32.totalorder %s538, %s540
    %p544 = scmp.eq.s32.totalorder %s29, 0
    %p545 = por %p543, %p544
    %p546 = scmp.ne.s32.totalorder %s538, %s540
    %p547 = scmp.eq.s32.totalorder %s34, 1
    %p548 = por %p546, %p547
    %p549 = scmp.ne.s32.totalorder %s540, %s541
    %p550 = scmp.eq.s32.totalorder %s34, 0
    %p551 = por %p549, %p550
    %p552 = scmp.ne.s32.totalorder %s540, %s541
    %p553 = scmp.eq.s32.totalorder %s35, 1
    %p554 = por %p552, %p553
    %p556 = scmp.ne.s32.totalorder %s541, %s555
    %p557 = scmp.eq.s32.totalorder %s35, 0
    %p558 = por %p556, %p557
    %s560 = sadd.s32 %s559, 1
    %p563 = scmp.eq.s32.totalorder %s29, 1
    %p564 = scmp.ne.s32.totalorder %s559, %s561
    %p565 = scmp.eq.s32.totalorder %s29, 0
    %p566 = por %p564, %p565
    %p567 = scmp.ne.s32.totalorder %s559, %s561
    %p568 = scmp.eq.s32.totalorder %s34, 1
    %p569 = por %p567, %p568
    %p570 = scmp.ne.s32.totalorder %s561, %s562
    %p571 = scmp.eq.s32.totalorder %s34, 0
    %p572 = por %p570, %p571
    %p573 = scmp.ne.s32.totalorder %s561, %s562
    %p574 = scmp.eq.s32.totalorder %s35, 1
    %p575 = por %p573, %p574
    %p577 = scmp.ne.s32.totalorder %s562, %s576
    %p578 = scmp.eq.s32.totalorder %s35, 0
    %p579 = por %p577, %p578
    %s581 = sadd.s32 %s580, 1
    %p584 = scmp.eq.s32.totalorder %s29, 1
    %p585 = scmp.ne.s32.totalorder %s580, %s582
    %p586 = scmp.eq.s32.totalorder %s29, 0
    %p587 = por %p585, %p586
    %p588 = scmp.ne.s32.totalorder %s580, %s582
    %p589 = scmp.eq.s32.totalorder %s34, 1
    %p590 = por %p588, %p589
    %p591 = scmp.ne.s32.totalorder %s582, %s583
    %p592 = scmp.eq.s32.totalorder %s34, 0
    %p593 = por %p591, %p592
    %p594 = scmp.ne.s32.totalorder %s582, %s583
    %p595 = scmp.eq.s32.totalorder %s35, 1
    %p596 = por %p594, %p595
    %p598 = scmp.ne.s32.totalorder %s583, %s597
    %p599 = scmp.eq.s32.totalorder %s35, 0
    %p600 = por %p598, %p599
    %p601 = scmp.le.s32.totalorder 1, %s29
    %p602 = scmp.lt.s32.totalorder %s29, 3
    %p603 = pnand %p601, %p602
    %p604 = pneg %p603
    // Predicated region
    $region9: #{two_step_network_with_attention.1} parent=5 // pred_check
      _
    $region10: #{two_step_network_with_attention.1} parent=5 // pred_check_branch
      %606 = sbr.rel (%p603) target = $region12
    $region11: #{two_step_network_with_attention.1} parent=5 // pred_region
      %s607 = ssub.s32 %s29, 1
      // Predicated region
      $region13: #{two_step_network_with_attention.1} parent=11 // pred_check
        %p608 = pneg %p50
      $region14: #{two_step_network_with_attention.1} parent=11 // pred_check_branch
        %610 = sbr.rel (%p608) target = $region16
      $region15: #{two_step_network_with_attention.1} parent=11 // pred_region
        _
      $region16: #{two_step_network_with_attention.1} parent=11 // pred_fallthru
        _
      // Predicated region
      $region17: #{two_step_network_with_attention.1} parent=11 // pred_check
        %p611 = pneg %p71
      $region18: #{two_step_network_with_attention.1} parent=11 // pred_check_branch
        %613 = sbr.rel (%p611) target = $region20
      $region19: #{two_step_network_with_attention.1} parent=11 // pred_region
        _
      $region20: #{two_step_network_with_attention.1} parent=11 // pred_fallthru
        _
      // Predicated region
      $region21: #{two_step_network_with_attention.1} parent=11 // pred_check
        %p614 = pneg %p92
      $region22: #{two_step_network_with_attention.1} parent=11 // pred_check_branch
        %616 = sbr.rel (%p614) target = $region24
      $region23: #{two_step_network_with_attention.1} parent=11 // pred_region
        _
      $region24: #{two_step_network_with_attention.1} parent=11 // pred_fallthru
        _
      // Predicated region
      $region25: #{two_step_network_with_attention.1} parent=11 // pred_check
        %p617 = pneg %p113
      $region26: #{two_step_network_with_attention.1} parent=11 // pred_check_branch
        %619 = sbr.rel (%p617) target = $region28
      $region27: #{two_step_network_with_attention.1} parent=11 // pred_region
        _
      $region28: #{two_step_network_with_attention.1} parent=11 // pred_fallthru
        _
      // Predicated region
      $region29: #{two_step_network_with_attention.1} parent=11 // pred_check
        %p620 = pneg %p134
      $region30: #{two_step_network_with_attention.1} parent=11 // pred_check_branch
        %622 = sbr.rel (%p620) target = $region32
      $region31: #{two_step_network_with_attention.1} parent=11 // pred_region
        _
      $region32: #{two_step_network_with_attention.1} parent=11 // pred_fallthru
        _
      // Predicated region
      $region33: #{two_step_network_with_attention.1} parent=11 // pred_check
        %p623 = pneg %p155
      $region34: #{two_step_network_with_attention.1} parent=11 // pred_check_branch
        %625 = sbr.rel (%p623) target = $region36
      $region35: #{two_step_network_with_attention.1} parent=11 // pred_region
        _
      $region36: #{two_step_network_with_attention.1} parent=11 // pred_fallthru
        _
      // Predicated region
      $region37: #{two_step_network_with_attention.1} parent=11 // pred_check
        %p626 = pneg %p176
      $region38: #{two_step_network_with_attention.1} parent=11 // pred_check_branch
        %628 = sbr.rel (%p626) target = $region40
      $region39: #{two_step_network_with_attention.1} parent=11 // pred_region
        _
      $region40: #{two_step_network_with_attention.1} parent=11 // pred_fallthru
        _
      // Predicated region
      $region41: #{two_step_network_with_attention.1} parent=11 // pred_check
        %p629 = pneg %p197
      $region42: #{two_step_network_with_attention.1} parent=11 // pred_check_branch
        %631 = sbr.rel (%p629) target = $region44
      $region43: #{two_step_network_with_attention.1} parent=11 // pred_region
        _
      $region44: #{two_step_network_with_attention.1} parent=11 // pred_fallthru
        _
      // Predicated region
      $region45: #{two_step_network_with_attention.1} parent=11 // pred_check
        %p632 = pneg %p218
      $region46: #{two_step_network_with_attention.1} parent=11 // pred_check_branch
        %634 = sbr.rel (%p632) target = $region48
      $region47: #{two_step_network_with_attention.1} parent=11 // pred_region
        _
      $region48: #{two_step_network_with_attention.1} parent=11 // pred_fallthru
        _
      // Predicated region
      $region49: #{two_step_network_with_attention.1} parent=11 // pred_check
        %p635 = pneg %p551
      $region50: #{two_step_network_with_attention.1} parent=11 // pred_check_branch
        %637 = sbr.rel (%p635) target = $region52
      $region51: #{two_step_network_with_attention.1} parent=11 // pred_region
        _
      $region52: #{two_step_network_with_attention.1} parent=11 // pred_fallthru
        _
      // Predicated region
      $region53: #{two_step_network_with_attention.1} parent=11 // pred_check
        %p638 = pneg %p572
      $region54: #{two_step_network_with_attention.1} parent=11 // pred_check_branch
        %640 = sbr.rel (%p638) target = $region56
      $region55: #{two_step_network_with_attention.1} parent=11 // pred_region
        _
      $region56: #{two_step_network_with_attention.1} parent=11 // pred_fallthru
        _
    $region12: #{two_step_network_with_attention.1} parent=5 // pred_fallthru
      _
    %p641 = scmp.lt.s32.totalorder %s29, 2
    // Predicated region
    $region57: #{two_step_network_with_attention.1} parent=5 // pred_check
      %p642 = pneg %p641
    $region58: #{two_step_network_with_attention.1} parent=5 // pred_check_branch
      %644 = sbr.rel (%p642) target = $region60
    $region59: #{two_step_network_with_attention.1} parent=5 // pred_region
      // Predicated region
      $region61: #{two_step_network_with_attention.1} parent=59 // pred_check
        %p645 = pneg %p238
      $region62: #{two_step_network_with_attention.1} parent=59 // pred_check_branch
        %647 = sbr.rel (%p645) target = $region64
      $region63: #{two_step_network_with_attention.1} parent=59 // pred_region
        %p648 = scmp.lt.s32.totalorder %s29, 1
        %s649 = scalar_select %p648, %s29, 1
        %s650 = smul.addr %s649, 48
        %s651 = smul.addr %s650, 4
        %s652 = scalar_lea.vmem %s9, %s651
      $region64: #{two_step_network_with_attention.1} parent=59 // pred_fallthru
        _
      // Predicated region
      $region65: #{two_step_network_with_attention.1} parent=59 // pred_check
        %p653 = pneg %p264
      $region66: #{two_step_network_with_attention.1} parent=59 // pred_check_branch
        %655 = sbr.rel (%p653) target = $region68
      $region67: #{two_step_network_with_attention.1} parent=59 // pred_region
        %p656 = scmp.lt.s32.totalorder %s29, 1
        %s657 = scalar_select %p656, %s29, 1
        %s658 = smul.addr %s657, 3
        %s659 = scalar_lea.vmem %s10, %s658
      $region68: #{two_step_network_with_attention.1} parent=59 // pred_fallthru
        _
      // Predicated region
      $region69: #{two_step_network_with_attention.1} parent=59 // pred_check
        %p660 = pneg %p290
      $region70: #{two_step_network_with_attention.1} parent=59 // pred_check_branch
        %662 = sbr.rel (%p660) target = $region72
      $region71: #{two_step_network_with_attention.1} parent=59 // pred_region
        %p663 = scmp.lt.s32.totalorder %s29, 1
        %s664 = scalar_select %p663, %s29, 1
        %s665 = smul.addr %s664, 16
        %s666 = smul.addr %s665, 4
        %s667 = scalar_lea.vmem %s11, %s666
      $region72: #{two_step_network_with_attention.1} parent=59 // pred_fallthru
        _
      // Predicated region
      $region73: #{two_step_network_with_attention.1} parent=59 // pred_check
        %p668 = pneg %p316
      $region74: #{two_step_network_with_attention.1} parent=59 // pred_check_branch
        %670 = sbr.rel (%p668) target = $region76
      $region75: #{two_step_network_with_attention.1} parent=59 // pred_region
        %p671 = scmp.lt.s32.totalorder %s29, 1
        %s672 = scalar_select %p671, %s29, 1
        %s673 = scalar_lea.vmem %s12, %s672
      $region76: #{two_step_network_with_attention.1} parent=59 // pred_fallthru
        _
      // Predicated region
      $region77: #{two_step_network_with_attention.1} parent=59 // pred_check
        %p674 = pneg %p342
      $region78: #{two_step_network_with_attention.1} parent=59 // pred_check_branch
        %676 = sbr.rel (%p674) target = $region80
      $region79: #{two_step_network_with_attention.1} parent=59 // pred_region
        %p677 = scmp.lt.s32.totalorder %s29, 1
        %s678 = scalar_select %p677, %s29, 1
        %s679 = scalar_lea.vmem %s13, %s678
      $region80: #{two_step_network_with_attention.1} parent=59 // pred_fallthru
        _
      // Predicated region
      $region81: #{two_step_network_with_attention.1} parent=59 // pred_check
        %p680 = pneg %p368
      $region82: #{two_step_network_with_attention.1} parent=59 // pred_check_branch
        %682 = sbr.rel (%p680) target = $region84
      $region83: #{two_step_network_with_attention.1} parent=59 // pred_region
        %p683 = scmp.lt.s32.totalorder %s29, 1
        %s684 = scalar_select %p683, %s29, 1
        %s685 = scalar_lea.vmem %s14, %s684
      $region84: #{two_step_network_with_attention.1} parent=59 // pred_fallthru
        _
      // Predicated region
      $region85: #{two_step_network_with_attention.1} parent=59 // pred_check
        %p686 = pneg %p394
      $region86: #{two_step_network_with_attention.1} parent=59 // pred_check_branch
        %688 = sbr.rel (%p686) target = $region88
      $region87: #{two_step_network_with_attention.1} parent=59 // pred_region
        %p689 = scmp.lt.s32.totalorder %s29, 1
        %s690 = scalar_select %p689, %s29, 1
        %s691 = smul.addr %s690, 32
        %s692 = smul.addr %s691, 4
        %s693 = scalar_lea.vmem %s15, %s692
      $region88: #{two_step_network_with_attention.1} parent=59 // pred_fallthru
        _
      // Predicated region
      $region89: #{two_step_network_with_attention.1} parent=59 // pred_check
        %p694 = pneg %p420
      $region90: #{two_step_network_with_attention.1} parent=59 // pred_check_branch
        %696 = sbr.rel (%p694) target = $region92
      $region91: #{two_step_network_with_attention.1} parent=59 // pred_region
        %p697 = scmp.lt.s32.totalorder %s29, 1
        %s698 = scalar_select %p697, %s29, 1
        %s699 = smul.addr %s698, 2
        %s700 = scalar_lea.vmem %s16, %s699
      $region92: #{two_step_network_with_attention.1} parent=59 // pred_fallthru
        _
      // Predicated region
      $region93: #{two_step_network_with_attention.1} parent=59 // pred_check
        %p701 = pneg %p446
      $region94: #{two_step_network_with_attention.1} parent=59 // pred_check_branch
        %703 = sbr.rel (%p701) target = $region96
      $region95: #{two_step_network_with_attention.1} parent=59 // pred_region
        %p704 = scmp.lt.s32.totalorder %s29, 1
        %s705 = scalar_select %p704, %s29, 1
        %s706 = smul.addr %s705, 32
        %s707 = smul.addr %s706, 4
        %s708 = scalar_lea.vmem %s17, %s707
      $region96: #{two_step_network_with_attention.1} parent=59 // pred_fallthru
        _
      // Predicated region
      $region97: #{two_step_network_with_attention.1} parent=59 // pred_check
        %p709 = pneg %p472
      $region98: #{two_step_network_with_attention.1} parent=59 // pred_check_branch
        %711 = sbr.rel (%p709) target = $region100
      $region99: #{two_step_network_with_attention.1} parent=59 // pred_region
        %p712 = scmp.lt.s32.totalorder %s29, 1
        %s713 = scalar_select %p712, %s29, 1
        %s714 = scalar_lea.vmem %s18, %s713
      $region100: #{two_step_network_with_attention.1} parent=59 // pred_fallthru
        _
      // Predicated region
      $region101: #{two_step_network_with_attention.1} parent=59 // pred_check
        %p715 = pneg %p498
      $region102: #{two_step_network_with_attention.1} parent=59 // pred_check_branch
        %717 = sbr.rel (%p715) target = $region104
      $region103: #{two_step_network_with_attention.1} parent=59 // pred_region
        %p718 = scmp.lt.s32.totalorder %s29, 1
        %s719 = scalar_select %p718, %s29, 1
        %s720 = scalar_lea.vmem %s19, %s719
      $region104: #{two_step_network_with_attention.1} parent=59 // pred_fallthru
        _
      // Predicated region
      $region105: #{two_step_network_with_attention.1} parent=59 // pred_check
        %p721 = pneg %p524
      $region106: #{two_step_network_with_attention.1} parent=59 // pred_check_branch
        %723 = sbr.rel (%p721) target = $region108
      $region107: #{two_step_network_with_attention.1} parent=59 // pred_region
        %p724 = scmp.lt.s32.totalorder %s29, 1
        %s725 = scalar_select %p724, %s29, 1
        %s726 = scalar_lea.vmem %s20, %s725
      $region108: #{two_step_network_with_attention.1} parent=59 // pred_fallthru
        _
    $region60: #{two_step_network_with_attention.1} parent=5 // pred_fallthru
      _
    %p727 = scmp.le.s32.totalorder 1, %s29
    %p728 = scmp.lt.s32.totalorder %s29, 3
    %p729 = pnand %p727, %p728
    %p730 = pneg %p729
    // Predicated region
    $region109: #{two_step_network_with_attention.1} parent=5 // pred_check
      _
    $region110: #{two_step_network_with_attention.1} parent=5 // pred_check_branch
      %732 = sbr.rel (%p729) target = $region112
    $region111: #{two_step_network_with_attention.1} parent=5 // pred_region
      %s733 = ssub.s32 %s29, 1
      %p734 = pneg %p50
      %p735 = pneg %p47
      %p736 = pneg %p71
      %p737 = pneg %p68
      %p738 = pneg %p92
      %p739 = pneg %p89
      %p740 = pneg %p113
      %p741 = pneg %p110
      %p742 = pneg %p134
      %p743 = pneg %p131
      %p744 = pneg %p155
      %p745 = pneg %p152
      %p746 = pneg %p176
      %p747 = pneg %p173
      %p748 = pneg %p197
      %p749 = pneg %p194
      %p750 = pneg %p218
      %p751 = pneg %p215
      %p752 = scmp.lt.s32.totalorder %s34, 1
      %s753 = scalar_select %p752, %s34, 1
      %s754 = smul.addr %s753, 48
      %s755 = smul.addr %s754, 4
      %s756 = scalar_lea.vmem %s9, %s755
      %p757 = pneg %p244
      %p758 = pneg %p241
      %p759 = scmp.lt.s32.totalorder %s34, 1
      %s760 = scalar_select %p759, %s34, 1
      %s761 = smul.addr %s760, 3
      %s762 = scalar_lea.vmem %s10, %s761
      %p763 = pneg %p270
      %p764 = pneg %p267
      %p765 = scmp.lt.s32.totalorder %s34, 1
      %s766 = scalar_select %p765, %s34, 1
      %s767 = smul.addr %s766, 16
      %s768 = smul.addr %s767, 4
      %s769 = scalar_lea.vmem %s11, %s768
      %p770 = pneg %p296
      %p771 = pneg %p293
      %p772 = scmp.lt.s32.totalorder %s34, 1
      %s773 = scalar_select %p772, %s34, 1
      %s774 = scalar_lea.vmem %s12, %s773
      %p775 = pneg %p322
      %p776 = pneg %p319
      %p777 = scmp.lt.s32.totalorder %s34, 1
      %s778 = scalar_select %p777, %s34, 1
      %s779 = scalar_lea.vmem %s13, %s778
      %p780 = pneg %p348
      %p781 = pneg %p345
      %p782 = scmp.lt.s32.totalorder %s34, 1
      %s783 = scalar_select %p782, %s34, 1
      %s784 = scalar_lea.vmem %s14, %s783
      %p785 = pneg %p374
      %p786 = pneg %p371
      %p787 = scmp.lt.s32.totalorder %s34, 1
      %s788 = scalar_select %p787, %s34, 1
      %s789 = smul.addr %s788, 32
      %s790 = smul.addr %s789, 4
      %s791 = scalar_lea.vmem %s15, %s790
      %p792 = pneg %p400
      %p793 = pneg %p397
      %p794 = scmp.lt.s32.totalorder %s34, 1
      %s795 = scalar_select %p794, %s34, 1
      %s796 = smul.addr %s795, 2
      %s797 = scalar_lea.vmem %s16, %s796
      %p798 = pneg %p426
      %p799 = pneg %p423
      %p800 = scmp.lt.s32.totalorder %s34, 1
      %s801 = scalar_select %p800, %s34, 1
      %s802 = smul.addr %s801, 32
      %s803 = smul.addr %s802, 4
      %s804 = scalar_lea.vmem %s17, %s803
      %p805 = pneg %p452
      %p806 = pneg %p449
      %p807 = scmp.lt.s32.totalorder %s34, 1
      %s808 = scalar_select %p807, %s34, 1
      %s809 = scalar_lea.vmem %s18, %s808
      %p810 = pneg %p478
      %p811 = pneg %p475
      %p812 = scmp.lt.s32.totalorder %s34, 1
      %s813 = scalar_select %p812, %s34, 1
      %s814 = scalar_lea.vmem %s19, %s813
      %p815 = pneg %p504
      %p816 = pneg %p501
      %p817 = scmp.lt.s32.totalorder %s34, 1
      %s818 = scalar_select %p817, %s34, 1
      %s819 = scalar_lea.vmem %s20, %s818
      %p820 = pneg %p530
      %p821 = pneg %p527
      %p822 = pneg %p551
      %p823 = pneg %p548
      %p824 = pneg %p572
      %p825 = pneg %p569
      %p826 = pneg %p593
      %p827 = pneg %p590
      %p828 = scmp.lt.s32.totalorder %s34, 1
      %s829 = scalar_select %p828, %s34, 1
      %s830 = smul.addr %s829, 48
      %s831 = smul.addr %s830, 4
      %s832 = scalar_lea.vmem %s9, %s831
      %p833 = scmp.lt.s32.totalorder %s34, 1
      %s834 = scalar_select %p833, %s34, 1
      %s835 = smul.addr %s834, 3
      %s836 = scalar_lea.vmem %s10, %s835
      %p837 = scmp.lt.s32.totalorder %s34, 1
      %s838 = scalar_select %p837, %s34, 1
      %s839 = smul.addr %s838, 16
      %s840 = smul.addr %s839, 4
      %s841 = scalar_lea.vmem %s11, %s840
      %p842 = scmp.lt.s32.totalorder %s34, 1
      %s843 = scalar_select %p842, %s34, 1
      %s844 = scalar_lea.vmem %s12, %s843
      %p845 = scmp.lt.s32.totalorder %s34, 1
      %s846 = scalar_select %p845, %s34, 1
      %s847 = scalar_lea.vmem %s13, %s846
      %p848 = scmp.lt.s32.totalorder %s34, 1
      %s849 = scalar_select %p848, %s34, 1
      %s850 = scalar_lea.vmem %s14, %s849
      %p851 = scmp.lt.s32.totalorder %s34, 1
      %s852 = scalar_select %p851, %s34, 1
      %s853 = smul.addr %s852, 32
      %s854 = smul.addr %s853, 4
      %s855 = scalar_lea.vmem %s15, %s854
      %p856 = scmp.lt.s32.totalorder %s34, 1
      %s857 = scalar_select %p856, %s34, 1
      %s858 = smul.addr %s857, 2
      %s859 = scalar_lea.vmem %s16, %s858
      %p860 = scmp.lt.s32.totalorder %s34, 1
      %s861 = scalar_select %p860, %s34, 1
      %s862 = smul.addr %s861, 32
      %s863 = smul.addr %s862, 4
      %s864 = scalar_lea.vmem %s17, %s863
      %p865 = scmp.lt.s32.totalorder %s34, 1
      %s866 = scalar_select %p865, %s34, 1
      %s867 = scalar_lea.vmem %s18, %s866
      %p868 = scmp.lt.s32.totalorder %s34, 1
      %s869 = scalar_select %p868, %s34, 1
      %s870 = scalar_lea.vmem %s19, %s869
      %p871 = scmp.lt.s32.totalorder %s34, 1
      %s872 = scalar_select %p871, %s34, 1
      %s873 = scalar_lea.vmem %s20, %s872
      %p876 = scmp.eq.s32.totalorder %s34, 0
      // Predicated region
      $region113: #{two_step_network_with_attention.1} parent=111 // pred_check
        %p877 = pneg %p876
      $region114: #{two_step_network_with_attention.1} parent=111 // pred_check_branch
        %879 = sbr.rel (%p877) target = $region116
      $region115: #{two_step_network_with_attention.1} parent=111 // pred_region
        %v880 = vld [vmem:[%s1] sm:$0x3]
        %v881 = vld [vmem:[%s3] sm:$0x1]
        %v882 = vld [vmem:[%s2] sm:$0x1]
        %884 = vset.pattern.permute.xlu0 0
        %885 = vperm.xlu0 %884, %v880
        %v886 = vpop.permute.xlu0 %885
        %v888 = vlaneseq
        %v889 = vshrl.u32 %v888, 7
        %v890 = vsub.s32 0, %v889
        %v891 = vrot.slane %v882, %v890
        %v892 = vmul.f32 %v886, %v891
        %v894 = vlaneseq
        %v895 = vshrl.u32 %v894, 7
        %v896 = vsub.s32 0, %v895
        %v897 = vrot.slane %v881, %v896
        %v899 = vadd.f32 %v897, %v892
        %v900 = vld [vmem:[%s2 + $0x1] sm:$0x1]
        %901 = vset.pattern.permute.xlu0 1
        %902 = vperm.xlu0 %901, %v880
        %v903 = vpop.permute.xlu0 %902
        %v905 = vlaneseq
        %v906 = vshrl.u32 %v905, 7
        %v907 = vsub.s32 0, %v906
        %v908 = vrot.slane %v900, %v907
        %v909 = vmul.f32 %v903, %v908
        %v910 = vadd.f32 %v899, %v909
        %v911 = vmax.f32 %v910, 0.0
        %v912 = vpack.c.bf16 %v911, %v911
        %v913 = vld [vmem:[%s5] sm:$0xf]
        %v914 = vld [vmem:[%s5 + $0x4] sm:$0xf]
        %v915 = vld [vmem:[%s5 + $0x8] sm:$0xf]
        %v916 = vld [vmem:[%s5 + $0xc] sm:$0xf]
        %v921 = vunpack.c.l.b16 %v913
        %v922 = vunpack.c.l.b16 %v914
        %v923 = vunpack.c.l.b16 %v915
        %v924 = vunpack.c.l.b16 %v916
        %v925 = vpack.c.b16 %v922, %v921
        %v926 = vpack.c.b16 %v924, %v923
        %vm929 = vcmask 261120
        %v931 = vsel %vm929, %v912, 0
        %933 = vmatprep.subr.bf16.mxu0 0
        %934 = vmatpush1.bf16.msra.mxu0 0
        %935 = vmatprep.subr.bf16.mxu0 0
        %936 = vmatpush1.bf16.msra.mxu0 0
        %937 = vmatprep.subr.bf16.mxu0 0
        %938 = vmatpush1.bf16.msra.mxu0 0
        %939 = vmatprep.subr.bf16.mxu0 0
        %940 = vmatpush1.bf16.msra.mxu0 0
        %941 = vmatprep.subr.bf16.mxu0 0
        %942 = vmatpush1.bf16.msra.mxu0 0
        %943 = vmatprep.subr.bf16.mxu0 0
        %944 = vmatpush1.bf16.msra.mxu0 0
        %945 = vmatprep.subr.bf16.mxu0 0
        %946 = vmatpush1.bf16.msra.mxu0 %v926
        %947 = vmatprep.subr.bf16.mxu0 0
        %948 = vmatpush1.bf16.msra.mxu0 %v925
        %949 = vmatprep.subr.bf16.mxu0 0
        %950 = vmatpush2.bf16.msra.mxu0 0
        %951 = vmatprep.subr.bf16.mxu0 0
        %952 = vmatpush2.bf16.msra.mxu0 0
        %953 = vmatprep.subr.bf16.mxu0 0
        %954 = vmatpush2.bf16.msra.mxu0 0
        %955 = vmatprep.subr.bf16.mxu0 0
        %956 = vmatpush2.bf16.msra.mxu0 0
        %957 = vmatprep.subr.bf16.mxu0 0
        %958 = vmatpush2.bf16.msra.mxu0 0
        %959 = vmatprep.subr.bf16.mxu0 0
        %960 = vmatpush2.bf16.msra.mxu0 0
        %961 = vmatprep.subr.bf16.mxu0 0
        %962 = vmatpush2.bf16.msra.mxu0 0
        %963 = vmatprep.subr.bf16.mxu0 0
        %964 = vmatpush2.bf16.msra.mxu0 0
        %965 = vmatprep.mubr.bf16.mxu0 0
        %966 = vmatmul.mubr.bf16.gmra.mxu0 %v931
        %v967 = vpop.f32.mrf.mxu0
        %v968 = vadd.f32 0.0, %v967
        %v969 = vpop.f32.mrf.mxu0
        %v970 = vpop.f32.mrf.mxu0
        %v971 = vpop.f32.mrf.mxu0
        %972 = vdwg.mxu0
        %v973 = vld [vmem:[%s6] sm:$0xff]
        %v974 = vld [vmem:[%s6 + $0x8] sm:$0xff]
        %v975 = vld [vmem:[%s6 + $0x10] sm:$0xff]
        %v976 = vld [vmem:[%s6 + $0x18] sm:$0xff]
        %v979 = vunpack.c.l.s4 1966171168
        %v980 = vunpack.c.0.s8 %v979
        %v981 = vlaneseq
        %v982 = vshrl.u32 %v981, 7
        %v983 = vsub.s32 %v980, %v982
        %v984 = vrot.slane %v968, %v983
        %v985 = vcombine.high %v984, %v984
        %v987 = vunpack.c.l.s4 1966171168
        %v988 = vunpack.c.0.s8 %v987
        %v989 = vlaneseq
        %v990 = vshrl.u32 %v989, 7
        %v991 = vsub.s32 %v988, %v990
        %v992 = vrot.slane %v984, %v991
        %v994 = vunpack.c.l.s4 1966171168
        %v995 = vunpack.c.0.s8 %v994
        %v996 = vlaneseq
        %v997 = vshrl.u32 %v996, 7
        %v998 = vsub.s32 %v995, %v997
        %v999 = vrot.slane %v985, %v998
        %v1000 = vlaneseq
        %v1001 = vshrl.u32 %v1000, 7
        %v1002 = vsub.s32 0, %v1001
        %v1003 = vrot.slane %v992, %v1002
        %v1004 = vlaneseq
        %v1005 = vshrl.u32 %v1004, 7
        %v1006 = vsub.s32 0, %v1005
        %v1007 = vrot.slane %v999, %v1006
        %v1010 = vadd.f32 %v973, %v1003
        %v1011 = vadd.f32 %v974, %v1003
        %v1012 = vadd.f32 %v975, %v1003
        %v1013 = vadd.f32 %v976, %v1003
        %v1014 = vadd.f32 %v973, %v1007
        %v1015 = vadd.f32 %v974, %v1007
        %v1016 = vadd.f32 %v975, %v1007
        %v1017 = vadd.f32 %v976, %v1007
        %v1018 = vld [vmem:[%s0] sm:$0xff]
        %v1019 = vld [vmem:[%s0 + $0x8] sm:$0xff]
        %v1020 = vld [vmem:[%s0 + $0x10] sm:$0xff]
        %v1021 = vld [vmem:[%s0 + $0x18] sm:$0xff]
        %v1022 = vld [vmem:[%s0 + $0x20] sm:$0xff]
        %v1023 = vld [vmem:[%s0 + $0x28] sm:$0xff]
        %v1024 = vld [vmem:[%s0 + $0x30] sm:$0xff]
        %v1025 = vld [vmem:[%s0 + $0x38] sm:$0xff]
        %v1026 = vld [vmem:[%s4] sm:$0x1]
        %1028 = vset.pattern.permute.xlu0 0
        %1029 = vperm.xlu0 %1028, %v1018
        %v1030 = vpop.permute.xlu0 %1029
        %1033 = vset.pattern.permute.xlu0 0
        %1034 = vperm.xlu0 %1033, %v1019
        %v1035 = vpop.permute.xlu0 %1034
        %1038 = vset.pattern.permute.xlu0 0
        %1039 = vperm.xlu0 %1038, %v1020
        %v1040 = vpop.permute.xlu0 %1039
        %1043 = vset.pattern.permute.xlu0 0
        %1044 = vperm.xlu0 %1043, %v1021
        %v1045 = vpop.permute.xlu0 %1044
        %1048 = vset.pattern.permute.xlu0 0
        %1049 = vperm.xlu0 %1048, %v1022
        %v1050 = vpop.permute.xlu0 %1049
        %1053 = vset.pattern.permute.xlu0 0
        %1054 = vperm.xlu0 %1053, %v1023
        %v1055 = vpop.permute.xlu0 %1054
        %1058 = vset.pattern.permute.xlu0 0
        %1059 = vperm.xlu0 %1058, %v1024
        %v1060 = vpop.permute.xlu0 %1059
        %1063 = vset.pattern.permute.xlu0 0
        %1064 = vperm.xlu0 %1063, %v1025
        %v1065 = vpop.permute.xlu0 %1064
        %v1067 = vlaneseq
        %v1068 = vshrl.u32 %v1067, 7
        %v1069 = vsub.s32 0, %v1068
        %v1070 = vrot.slane %v1026, %v1069
        %v1071 = vmul.f32 %v1030, %v1070
        %v1072 = vmul.f32 %v1035, %v1070
        %v1073 = vmul.f32 %v1040, %v1070
        %v1074 = vmul.f32 %v1045, %v1070
        %v1075 = vmul.f32 %v1050, %v1070
        %v1076 = vmul.f32 %v1055, %v1070
        %v1077 = vmul.f32 %v1060, %v1070
        %v1078 = vmul.f32 %v1065, %v1070
        %v1079 = vadd.f32 %v1010, %v1071
        %v1080 = vadd.f32 %v1011, %v1072
        %v1081 = vadd.f32 %v1012, %v1073
        %v1082 = vadd.f32 %v1013, %v1074
        %v1083 = vadd.f32 %v1014, %v1075
        %v1084 = vadd.f32 %v1015, %v1076
        %v1085 = vadd.f32 %v1016, %v1077
        %v1086 = vadd.f32 %v1017, %v1078
        %v1087 = vld [vmem:[%s4 + $0x1] sm:$0x1]
        %1088 = vset.pattern.permute.xlu0 1
        %1089 = vperm.xlu0 %1088, %v1018
        %v1090 = vpop.permute.xlu0 %1089
        %1092 = vset.pattern.permute.xlu0 1
        %1093 = vperm.xlu0 %1092, %v1019
        %v1094 = vpop.permute.xlu0 %1093
        %1096 = vset.pattern.permute.xlu0 1
        %1097 = vperm.xlu0 %1096, %v1020
        %v1098 = vpop.permute.xlu0 %1097
        %1100 = vset.pattern.permute.xlu0 1
        %1101 = vperm.xlu0 %1100, %v1021
        %v1102 = vpop.permute.xlu0 %1101
        %1104 = vset.pattern.permute.xlu0 1
        %1105 = vperm.xlu0 %1104, %v1022
        %v1106 = vpop.permute.xlu0 %1105
        %1108 = vset.pattern.permute.xlu0 1
        %1109 = vperm.xlu0 %1108, %v1023
        %v1110 = vpop.permute.xlu0 %1109
        %1112 = vset.pattern.permute.xlu0 1
        %1113 = vperm.xlu0 %1112, %v1024
        %v1114 = vpop.permute.xlu0 %1113
        %1116 = vset.pattern.permute.xlu0 1
        %1117 = vperm.xlu0 %1116, %v1025
        %v1118 = vpop.permute.xlu0 %1117
        %v1120 = vlaneseq
        %v1121 = vshrl.u32 %v1120, 7
        %v1122 = vsub.s32 0, %v1121
        %v1123 = vrot.slane %v1087, %v1122
        %v1124 = vmul.f32 %v1090, %v1123
        %v1125 = vmul.f32 %v1094, %v1123
        %v1126 = vmul.f32 %v1098, %v1123
        %v1127 = vmul.f32 %v1102, %v1123
        %v1128 = vmul.f32 %v1106, %v1123
        %v1129 = vmul.f32 %v1110, %v1123
        %v1130 = vmul.f32 %v1114, %v1123
        %v1131 = vmul.f32 %v1118, %v1123
        %v1132 = vadd.f32 %v1079, %v1124
        %v1133 = vadd.f32 %v1080, %v1125
        %v1134 = vadd.f32 %v1081, %v1126
        %v1135 = vadd.f32 %v1082, %v1127
        %v1136 = vadd.f32 %v1083, %v1128
        %v1137 = vadd.f32 %v1084, %v1129
        %v1138 = vadd.f32 %v1085, %v1130
        %v1139 = vadd.f32 %v1086, %v1131
        %v1140 = vld [vmem:[%s4 + $0x2] sm:$0x1]
        %1141 = vset.pattern.permute.xlu0 2
        %1142 = vperm.xlu0 %1141, %v1018
        %v1143 = vpop.permute.xlu0 %1142
        %1145 = vset.pattern.permute.xlu0 2
        %1146 = vperm.xlu0 %1145, %v1019
        %v1147 = vpop.permute.xlu0 %1146
        %1149 = vset.pattern.permute.xlu0 2
        %1150 = vperm.xlu0 %1149, %v1020
        %v1151 = vpop.permute.xlu0 %1150
        %1153 = vset.pattern.permute.xlu0 2
        %1154 = vperm.xlu0 %1153, %v1021
        %v1155 = vpop.permute.xlu0 %1154
        %1157 = vset.pattern.permute.xlu0 2
        %1158 = vperm.xlu0 %1157, %v1022
        %v1159 = vpop.permute.xlu0 %1158
        %1161 = vset.pattern.permute.xlu0 2
        %1162 = vperm.xlu0 %1161, %v1023
        %v1163 = vpop.permute.xlu0 %1162
        %1165 = vset.pattern.permute.xlu0 2
        %1166 = vperm.xlu0 %1165, %v1024
        %v1167 = vpop.permute.xlu0 %1166
        %1169 = vset.pattern.permute.xlu0 2
        %1170 = vperm.xlu0 %1169, %v1025
        %v1171 = vpop.permute.xlu0 %1170
        %v1173 = vlaneseq
        %v1174 = vshrl.u32 %v1173, 7
        %v1175 = vsub.s32 0, %v1174
        %v1176 = vrot.slane %v1140, %v1175
        %v1177 = vmul.f32 %v1143, %v1176
        %v1178 = vmul.f32 %v1147, %v1176
        %v1179 = vmul.f32 %v1151, %v1176
        %v1180 = vmul.f32 %v1155, %v1176
        %v1181 = vmul.f32 %v1159, %v1176
        %v1182 = vmul.f32 %v1163, %v1176
        %v1183 = vmul.f32 %v1167, %v1176
        %v1184 = vmul.f32 %v1171, %v1176
        %v1185 = vadd.f32 %v1132, %v1177
        %v1186 = vadd.f32 %v1133, %v1178
        %v1187 = vadd.f32 %v1134, %v1179
        %v1188 = vadd.f32 %v1135, %v1180
        %v1189 = vadd.f32 %v1136, %v1181
        %v1190 = vadd.f32 %v1137, %v1182
        %v1191 = vadd.f32 %v1138, %v1183
        %v1192 = vadd.f32 %v1139, %v1184
        %v1193 = vld [vmem:[%s4 + $0x3] sm:$0x1]
        %1194 = vset.pattern.permute.xlu0 3
        %1195 = vperm.xlu0 %1194, %v1018
        %v1196 = vpop.permute.xlu0 %1195
        %1198 = vset.pattern.permute.xlu0 3
        %1199 = vperm.xlu0 %1198, %v1019
        %v1200 = vpop.permute.xlu0 %1199
        %1202 = vset.pattern.permute.xlu0 3
        %1203 = vperm.xlu0 %1202, %v1020
        %v1204 = vpop.permute.xlu0 %1203
        %1206 = vset.pattern.permute.xlu0 3
        %1207 = vperm.xlu0 %1206, %v1021
        %v1208 = vpop.permute.xlu0 %1207
        %1210 = vset.pattern.permute.xlu0 3
        %1211 = vperm.xlu0 %1210, %v1022
        %v1212 = vpop.permute.xlu0 %1211
        %1214 = vset.pattern.permute.xlu0 3
        %1215 = vperm.xlu0 %1214, %v1023
        %v1216 = vpop.permute.xlu0 %1215
        %1218 = vset.pattern.permute.xlu0 3
        %1219 = vperm.xlu0 %1218, %v1024
        %v1220 = vpop.permute.xlu0 %1219
        %1222 = vset.pattern.permute.xlu0 3
        %1223 = vperm.xlu0 %1222, %v1025
        %v1224 = vpop.permute.xlu0 %1223
        %v1226 = vlaneseq
        %v1227 = vshrl.u32 %v1226, 7
        %v1228 = vsub.s32 0, %v1227
        %v1229 = vrot.slane %v1193, %v1228
        %v1230 = vmul.f32 %v1196, %v1229
        %v1231 = vmul.f32 %v1200, %v1229
        %v1232 = vmul.f32 %v1204, %v1229
        %v1233 = vmul.f32 %v1208, %v1229
        %v1234 = vmul.f32 %v1212, %v1229
        %v1235 = vmul.f32 %v1216, %v1229
        %v1236 = vmul.f32 %v1220, %v1229
        %v1237 = vmul.f32 %v1224, %v1229
        %v1238 = vadd.f32 %v1185, %v1230
        %v1239 = vadd.f32 %v1186, %v1231
        %v1240 = vadd.f32 %v1187, %v1232
        %v1241 = vadd.f32 %v1188, %v1233
        %v1242 = vadd.f32 %v1189, %v1234
        %v1243 = vadd.f32 %v1190, %v1235
        %v1244 = vadd.f32 %v1191, %v1236
        %v1245 = vadd.f32 %v1192, %v1237
        %1246 = vst [vmem:[#allocation2] sm:$0xff] %v1238
        %1247 = vst [vmem:[#allocation2 + $0x8] sm:$0xff] %v1239
        %1248 = vst [vmem:[#allocation2 + $0x10] sm:$0xff] %v1240
        %1249 = vst [vmem:[#allocation2 + $0x18] sm:$0xff] %v1241
        %1250 = vst [vmem:[#allocation2 + $0x20] sm:$0xff] %v1242
        %1251 = vst [vmem:[#allocation2 + $0x28] sm:$0xff] %v1243
        %1252 = vst [vmem:[#allocation2 + $0x30] sm:$0xff] %v1244
        %1253 = vst [vmem:[#allocation2 + $0x38] sm:$0xff] %v1245
      $region116: #{two_step_network_with_attention.1} parent=111 // pred_fallthru
        _
      %v1254 = vld [vmem:[#allocation2] sm:$0xff]
      %v1255 = vld [vmem:[#allocation2 + $0x8] sm:$0xff]
      %v1256 = vld [vmem:[#allocation2 + $0x10] sm:$0xff]
      %v1257 = vld [vmem:[#allocation2 + $0x18] sm:$0xff]
      %v1258 = vld [vmem:[#allocation2 + $0x20] sm:$0xff]
      %v1259 = vld [vmem:[#allocation2 + $0x28] sm:$0xff]
      %v1260 = vld [vmem:[#allocation2 + $0x30] sm:$0xff]
      %v1261 = vld [vmem:[#allocation2 + $0x38] sm:$0xff]
      %v1262 = vpack.c.bf16 %v1255, %v1254
      %v1263 = vpack.c.bf16 %v1257, %v1256
      %v1264 = vpack.c.bf16 %v1259, %v1258
      %v1265 = vpack.c.bf16 %v1261, %v1260
      %v1266 = vld [vmem:[%s832] sm:$0xff]
      %v1267 = vld [vmem:[%s832 + $0x8] sm:$0xf]
      %v1268 = vld [vmem:[%s832 + $0xc] sm:$0xff]
      %v1269 = vld [vmem:[%s832 + $0x14] sm:$0xf]
      %v1270 = vld [vmem:[%s832 + $0x18] sm:$0xff]
      %v1271 = vld [vmem:[%s832 + $0x20] sm:$0xf]
      %v1272 = vld [vmem:[%s832 + $0x24] sm:$0xff]
      %v1273 = vld [vmem:[%s832 + $0x2c] sm:$0xf]
      %v1274 = vld [vmem:[%s832 + $0x30] sm:$0xff]
      %v1275 = vld [vmem:[%s832 + $0x38] sm:$0xf]
      %v1276 = vld [vmem:[%s832 + $0x3c] sm:$0xff]
      %v1277 = vld [vmem:[%s832 + $0x44] sm:$0xf]
      %v1278 = vld [vmem:[%s832 + $0x48] sm:$0xff]
      %v1279 = vld [vmem:[%s832 + $0x50] sm:$0xf]
      %v1280 = vld [vmem:[%s832 + $0x54] sm:$0xff]
      %v1281 = vld [vmem:[%s832 + $0x5c] sm:$0xf]
      %v1282 = vld [vmem:[%s832 + $0x60] sm:$0xff]
      %v1283 = vld [vmem:[%s832 + $0x68] sm:$0xf]
      %v1284 = vld [vmem:[%s832 + $0x6c] sm:$0xff]
      %v1285 = vld [vmem:[%s832 + $0x74] sm:$0xf]
      %v1286 = vld [vmem:[%s832 + $0x78] sm:$0xff]
      %v1287 = vld [vmem:[%s832 + $0x80] sm:$0xf]
      %v1288 = vld [vmem:[%s832 + $0x84] sm:$0xff]
      %v1289 = vld [vmem:[%s832 + $0x8c] sm:$0xf]
      %v1290 = vld [vmem:[%s832 + $0x90] sm:$0xff]
      %v1291 = vld [vmem:[%s832 + $0x98] sm:$0xf]
      %v1292 = vld [vmem:[%s832 + $0x9c] sm:$0xff]
      %v1293 = vld [vmem:[%s832 + $0xa4] sm:$0xf]
      %v1294 = vld [vmem:[%s832 + $0xa8] sm:$0xff]
      %v1295 = vld [vmem:[%s832 + $0xb0] sm:$0xf]
      %v1296 = vld [vmem:[%s832 + $0xb4] sm:$0xff]
      %v1297 = vld [vmem:[%s832 + $0xbc] sm:$0xf]
      %v1298 = vld [vmem:[%s836] sm:$0x7]
      %v1300 = vlaneseq
      %v1301 = vshrl.u32 %v1300, 7
      %v1302 = vsub.s32 0, %v1301
      %v1303 = vrot.slane %v1298, %v1302
      %v1304 = vlaneseq
      %v1305 = vshrl.u32 %v1304, 7
      %v1306 = vsub.s32 1, %v1305
      %v1307 = vrot.slane %v1298, %v1306
      %v1308 = vlaneseq
      %v1309 = vshrl.u32 %v1308, 7
      %v1310 = vsub.s32 2, %v1309
      %v1311 = vrot.slane %v1298, %v1310
      %v1347 = vunpack.c.l.b16 %v1266
      %v1348 = vunpack.c.h.b16 %v1266
      %v1349 = vunpack.c.l.b16 %v1267
      %v1350 = vunpack.c.l.b16 %v1268
      %v1351 = vunpack.c.h.b16 %v1268
      %v1352 = vunpack.c.l.b16 %v1269
      %v1353 = vunpack.c.l.b16 %v1270
      %v1354 = vunpack.c.h.b16 %v1270
      %v1355 = vunpack.c.l.b16 %v1271
      %v1356 = vunpack.c.l.b16 %v1272
      %v1357 = vunpack.c.h.b16 %v1272
      %v1358 = vunpack.c.l.b16 %v1273
      %v1359 = vunpack.c.l.b16 %v1274
      %v1360 = vunpack.c.h.b16 %v1274
      %v1361 = vunpack.c.l.b16 %v1275
      %v1362 = vunpack.c.l.b16 %v1276
      %v1363 = vunpack.c.h.b16 %v1276
      %v1364 = vunpack.c.l.b16 %v1277
      %v1365 = vunpack.c.l.b16 %v1278
      %v1366 = vunpack.c.h.b16 %v1278
      %v1367 = vunpack.c.l.b16 %v1279
      %v1368 = vunpack.c.l.b16 %v1280
      %v1369 = vunpack.c.h.b16 %v1280
      %v1370 = vunpack.c.l.b16 %v1281
      %v1371 = vunpack.c.l.b16 %v1282
      %v1372 = vunpack.c.h.b16 %v1282
      %v1373 = vunpack.c.l.b16 %v1283
      %v1374 = vunpack.c.l.b16 %v1284
      %v1375 = vunpack.c.h.b16 %v1284
      %v1376 = vunpack.c.l.b16 %v1285
      %v1377 = vunpack.c.l.b16 %v1286
      %v1378 = vunpack.c.h.b16 %v1286
      %v1379 = vunpack.c.l.b16 %v1287
      %v1380 = vunpack.c.l.b16 %v1288
      %v1381 = vunpack.c.h.b16 %v1288
      %v1382 = vunpack.c.l.b16 %v1289
      %v1383 = vunpack.c.l.b16 %v1290
      %v1384 = vunpack.c.h.b16 %v1290
      %v1385 = vunpack.c.l.b16 %v1291
      %v1386 = vunpack.c.l.b16 %v1292
      %v1387 = vunpack.c.h.b16 %v1292
      %v1388 = vunpack.c.l.b16 %v1293
      %v1389 = vunpack.c.l.b16 %v1294
      %v1390 = vunpack.c.h.b16 %v1294
      %v1391 = vunpack.c.l.b16 %v1295
      %v1392 = vunpack.c.l.b16 %v1296
      %v1393 = vunpack.c.h.b16 %v1296
      %v1394 = vunpack.c.l.b16 %v1297
      %v1395 = vpack.c.b16 %v1350, %v1347
      %v1396 = vpack.c.b16 %v1351, %v1348
      %v1397 = vpack.c.b16 %v1352, %v1349
      %v1398 = vpack.c.b16 %v1356, %v1353
      %v1399 = vpack.c.b16 %v1357, %v1354
      %v1400 = vpack.c.b16 %v1358, %v1355
      %v1401 = vpack.c.b16 %v1362, %v1359
      %v1402 = vpack.c.b16 %v1363, %v1360
      %v1403 = vpack.c.b16 %v1364, %v1361
      %v1404 = vpack.c.b16 %v1368, %v1365
      %v1405 = vpack.c.b16 %v1369, %v1366
      %v1406 = vpack.c.b16 %v1370, %v1367
      %v1407 = vpack.c.b16 %v1374, %v1371
      %v1408 = vpack.c.b16 %v1375, %v1372
      %v1409 = vpack.c.b16 %v1376, %v1373
      %v1410 = vpack.c.b16 %v1380, %v1377
      %v1411 = vpack.c.b16 %v1381, %v1378
      %v1412 = vpack.c.b16 %v1382, %v1379
      %v1413 = vpack.c.b16 %v1386, %v1383
      %v1414 = vpack.c.b16 %v1387, %v1384
      %v1415 = vpack.c.b16 %v1388, %v1385
      %v1416 = vpack.c.b16 %v1392, %v1389
      %v1417 = vpack.c.b16 %v1393, %v1390
      %v1418 = vpack.c.b16 %v1394, %v1391
      %1443 = vmatprep.subr.bf16.mxu0 %v1417
      %1444 = vmatpush1.bf16.msra.mxu0 %v1416
      %1445 = vmatprep.subr.bf16.mxu0 %v1414
      %1446 = vmatpush1.bf16.msra.mxu0 %v1413
      %1447 = vmatprep.subr.bf16.mxu0 %v1411
      %1448 = vmatpush1.bf16.msra.mxu0 %v1410
      %1449 = vmatprep.subr.bf16.mxu0 %v1408
      %1450 = vmatpush1.bf16.msra.mxu0 %v1407
      %1451 = vmatprep.subr.bf16.mxu0 %v1405
      %1452 = vmatpush1.bf16.msra.mxu0 %v1404
      %1453 = vmatprep.subr.bf16.mxu0 %v1402
      %1454 = vmatpush1.bf16.msra.mxu0 %v1401
      %1455 = vmatprep.subr.bf16.mxu0 %v1399
      %1456 = vmatpush1.bf16.msra.mxu0 %v1398
      %1457 = vmatprep.subr.bf16.mxu0 %v1396
      %1458 = vmatpush1.bf16.msra.mxu0 %v1395
      %1459 = vmatprep.subr.bf16.mxu0 0
      %1460 = vmatpush2.bf16.msra.mxu0 0
      %1461 = vmatprep.subr.bf16.mxu0 0
      %1462 = vmatpush2.bf16.msra.mxu0 0
      %1463 = vmatprep.subr.bf16.mxu0 0
      %1464 = vmatpush2.bf16.msra.mxu0 0
      %1465 = vmatprep.subr.bf16.mxu0 0
      %1466 = vmatpush2.bf16.msra.mxu0 0
      %1467 = vmatprep.subr.bf16.mxu0 0
      %1468 = vmatpush2.bf16.msra.mxu0 0
      %1469 = vmatprep.subr.bf16.mxu0 0
      %1470 = vmatpush2.bf16.msra.mxu0 0
      %1471 = vmatprep.subr.bf16.mxu0 0
      %1472 = vmatpush2.bf16.msra.mxu0 0
      %1473 = vmatprep.subr.bf16.mxu0 0
      %1474 = vmatpush2.bf16.msra.mxu0 0
      %1475 = vmatprep.mubr.bf16.mxu0 0
      %1476 = vmatmul.mubr.bf16.gmra.mxu0 %v1262
      %v1477 = vpop.f32.mrf.mxu0
      %v1478 = vadd.f32 %v1303, %v1477
      %v1479 = vpop.f32.mrf.mxu0
      %v1480 = vadd.f32 %v1307, %v1479
      %v1481 = vpop.f32.mrf.mxu0
      %v1482 = vadd.f32 %v1303, %v1481
      %v1483 = vpop.f32.mrf.mxu0
      %v1484 = vadd.f32 %v1307, %v1483
      %1485 = vmatprep.mubr.bf16.mxu0 0
      %1486 = vmatmul.mubr.bf16.gmra.mxu0 %v1263
      %v1487 = vpop.f32.mrf.mxu0
      %v1488 = vadd.f32 %v1303, %v1487
      %v1489 = vpop.f32.mrf.mxu0
      %v1490 = vadd.f32 %v1307, %v1489
      %v1491 = vpop.f32.mrf.mxu0
      %v1492 = vadd.f32 %v1303, %v1491
      %v1493 = vpop.f32.mrf.mxu0
      %v1494 = vadd.f32 %v1307, %v1493
      %1495 = vmatprep.mubr.bf16.mxu0 0
      %1496 = vmatmul.mubr.bf16.gmra.mxu0 %v1264
      %v1497 = vpop.f32.mrf.mxu0
      %v1498 = vadd.f32 %v1303, %v1497
      %v1499 = vpop.f32.mrf.mxu0
      %v1500 = vadd.f32 %v1307, %v1499
      %v1501 = vpop.f32.mrf.mxu0
      %v1502 = vadd.f32 %v1303, %v1501
      %v1503 = vpop.f32.mrf.mxu0
      %v1504 = vadd.f32 %v1307, %v1503
      %1505 = vmatprep.mubr.bf16.mxu0 0
      %1506 = vmatmul.mubr.bf16.gmra.mxu0 %v1265
      %v1507 = vpop.f32.mrf.mxu0
      %v1508 = vadd.f32 %v1303, %v1507
      %v1509 = vpop.f32.mrf.mxu0
      %v1510 = vadd.f32 %v1307, %v1509
      %v1511 = vpop.f32.mrf.mxu0
      %v1512 = vadd.f32 %v1303, %v1511
      %v1513 = vpop.f32.mrf.mxu0
      %v1514 = vadd.f32 %v1307, %v1513
      %1515 = vdwg.mxu0
      %1516 = vmatprep.subr.bf16.mxu0 0
      %1517 = vmatpush1.bf16.msra.mxu0 %v1418
      %1518 = vmatprep.subr.bf16.mxu0 0
      %1519 = vmatpush1.bf16.msra.mxu0 %v1415
      %1520 = vmatprep.subr.bf16.mxu0 0
      %1521 = vmatpush1.bf16.msra.mxu0 %v1412
      %1522 = vmatprep.subr.bf16.mxu0 0
      %1523 = vmatpush1.bf16.msra.mxu0 %v1409
      %1524 = vmatprep.subr.bf16.mxu0 0
      %1525 = vmatpush1.bf16.msra.mxu0 %v1406
      %1526 = vmatprep.subr.bf16.mxu0 0
      %1527 = vmatpush1.bf16.msra.mxu0 %v1403
      %1528 = vmatprep.subr.bf16.mxu0 0
      %1529 = vmatpush1.bf16.msra.mxu0 %v1400
      %1530 = vmatprep.subr.bf16.mxu0 0
      %1531 = vmatpush1.bf16.msra.mxu0 %v1397
      %1532 = vmatprep.subr.bf16.mxu0 0
      %1533 = vmatpush2.bf16.msra.mxu0 0
      %1534 = vmatprep.subr.bf16.mxu0 0
      %1535 = vmatpush2.bf16.msra.mxu0 0
      %1536 = vmatprep.subr.bf16.mxu0 0
      %1537 = vmatpush2.bf16.msra.mxu0 0
      %1538 = vmatprep.subr.bf16.mxu0 0
      %1539 = vmatpush2.bf16.msra.mxu0 0
      %1540 = vmatprep.subr.bf16.mxu0 0
      %1541 = vmatpush2.bf16.msra.mxu0 0
      %1542 = vmatprep.subr.bf16.mxu0 0
      %1543 = vmatpush2.bf16.msra.mxu0 0
      %1544 = vmatprep.subr.bf16.mxu0 0
      %1545 = vmatpush2.bf16.msra.mxu0 0
      %1546 = vmatprep.subr.bf16.mxu0 0
      %1547 = vmatpush2.bf16.msra.mxu0 0
      %1548 = vmatprep.mubr.bf16.mxu0 0
      %1549 = vmatmul.mubr.bf16.gmra.mxu0 %v1262
      %v1550 = vpop.f32.mrf.mxu0
      %v1551 = vadd.f32 %v1311, %v1550
      %v1552 = vpop.f32.mrf.mxu0
      %v1553 = vpop.f32.mrf.mxu0
      %v1554 = vadd.f32 %v1311, %v1553
      %v1555 = vpop.f32.mrf.mxu0
      %1556 = vmatprep.mubr.bf16.mxu0 0
      %1557 = vmatmul.mubr.bf16.gmra.mxu0 %v1263
      %v1558 = vpop.f32.mrf.mxu0
      %v1559 = vadd.f32 %v1311, %v1558
      %v1560 = vpop.f32.mrf.mxu0
      %v1561 = vpop.f32.mrf.mxu0
      %v1562 = vadd.f32 %v1311, %v1561
      %v1563 = vpop.f32.mrf.mxu0
      %1564 = vmatprep.mubr.bf16.mxu0 0
      %1565 = vmatmul.mubr.bf16.gmra.mxu0 %v1264
      %v1566 = vpop.f32.mrf.mxu0
      %v1567 = vadd.f32 %v1311, %v1566
      %v1568 = vpop.f32.mrf.mxu0
      %v1569 = vpop.f32.mrf.mxu0
      %v1570 = vadd.f32 %v1311, %v1569
      %v1571 = vpop.f32.mrf.mxu0
      %1572 = vmatprep.mubr.bf16.mxu0 0
      %1573 = vmatmul.mubr.bf16.gmra.mxu0 %v1265
      %v1574 = vpop.f32.mrf.mxu0
      %v1575 = vadd.f32 %v1311, %v1574
      %v1576 = vpop.f32.mrf.mxu0
      %v1577 = vpop.f32.mrf.mxu0
      %v1578 = vadd.f32 %v1311, %v1577
      %v1579 = vpop.f32.mrf.mxu0
      %1580 = vdwg.mxu0
      %v1581 = vpack.c.bf16 %v1482, %v1478
      %v1582 = vpack.c.bf16 %v1484, %v1480
      %v1583 = vpack.c.bf16 %v1554, %v1551
      %v1584 = vpack.c.bf16 %v1492, %v1488
      %v1585 = vpack.c.bf16 %v1494, %v1490
      %v1586 = vpack.c.bf16 %v1562, %v1559
      %v1587 = vpack.c.bf16 %v1502, %v1498
      %v1588 = vpack.c.bf16 %v1504, %v1500
      %v1589 = vpack.c.bf16 %v1570, %v1567
      %v1590 = vpack.c.bf16 %v1512, %v1508
      %v1591 = vpack.c.bf16 %v1514, %v1510
      %v1592 = vpack.c.bf16 %v1578, %v1575
      %v1593 = vmul.bf16 %v1581, 1048592000
      %v1594 = vmul.bf16 %v1584, 1048592000
      %v1595 = vmul.bf16 %v1587, 1048592000
      %v1596 = vmul.bf16 %v1590, 1048592000
      %v1597 = vld [vmem:[%s7] sm:$0xff]
      %v1598 = vld [vmem:[%s7 + $0x8] sm:$0xff]
      %v1599 = vld [vmem:[%s7 + $0x10] sm:$0xff]
      %v1600 = vld [vmem:[%s7 + $0x18] sm:$0xff]
      %v1601 = vld [vmem:[%s7 + $0x20] sm:$0xff]
      %v1602 = vld [vmem:[%s7 + $0x28] sm:$0xff]
      %v1603 = vld [vmem:[%s7 + $0x30] sm:$0xff]
      %v1604 = vld [vmem:[%s7 + $0x38] sm:$0xff]
      %v1605 = vld [vmem:[%s7 + $0x40] sm:$0xff]
      %v1606 = vld [vmem:[%s7 + $0x48] sm:$0xff]
      %v1607 = vld [vmem:[%s7 + $0x50] sm:$0xff]
      %v1608 = vld [vmem:[%s7 + $0x58] sm:$0xff]
      %v1609 = vld [vmem:[%s7 + $0x60] sm:$0xff]
      %v1610 = vld [vmem:[%s7 + $0x68] sm:$0xff]
      %v1611 = vld [vmem:[%s7 + $0x70] sm:$0xff]
      %v1612 = vld [vmem:[%s7 + $0x78] sm:$0xff]
      %v1613 = vld [vmem:[%s7 + $0x80] sm:$0xff]
      %v1614 = vld [vmem:[%s7 + $0x88] sm:$0xff]
      %v1615 = vld [vmem:[%s7 + $0x90] sm:$0xff]
      %v1616 = vld [vmem:[%s7 + $0x98] sm:$0xff]
      %v1617 = vld [vmem:[%s7 + $0xa0] sm:$0xff]
      %v1618 = vld [vmem:[%s7 + $0xa8] sm:$0xff]
      %v1619 = vld [vmem:[%s7 + $0xb0] sm:$0xff]
      %v1620 = vld [vmem:[%s7 + $0xb8] sm:$0xff]
      %v1621 = vld [vmem:[%s7 + $0xc0] sm:$0xff]
      %v1622 = vld [vmem:[%s7 + $0xc8] sm:$0xff]
      %v1623 = vld [vmem:[%s7 + $0xd0] sm:$0xff]
      %v1624 = vld [vmem:[%s7 + $0xd8] sm:$0xff]
      %v1625 = vld [vmem:[%s7 + $0xe0] sm:$0xff]
      %v1626 = vld [vmem:[%s7 + $0xe8] sm:$0xff]
      %v1627 = vld [vmem:[%s7 + $0xf0] sm:$0xff]
      %v1628 = vld [vmem:[%s7 + $0xf8] sm:$0xff]
      %v1629 = vld [vmem:[%s7 + $0x100] sm:$0xff]
      %v1630 = vld [vmem:[%s7 + $0x108] sm:$0xff]
      %v1631 = vld [vmem:[%s7 + $0x110] sm:$0xff]
      %v1632 = vld [vmem:[%s7 + $0x118] sm:$0xff]
      %v1633 = vld [vmem:[%s7 + $0x120] sm:$0xff]
      %v1634 = vld [vmem:[%s7 + $0x128] sm:$0xff]
      %v1635 = vld [vmem:[%s7 + $0x130] sm:$0xff]
      %v1636 = vld [vmem:[%s7 + $0x138] sm:$0xff]
      %v1637 = vld [vmem:[%s7 + $0x140] sm:$0xff]
      %v1638 = vld [vmem:[%s7 + $0x148] sm:$0xff]
      %v1639 = vld [vmem:[%s7 + $0x150] sm:$0xff]
      %v1640 = vld [vmem:[%s7 + $0x158] sm:$0xff]
      %v1641 = vld [vmem:[%s7 + $0x160] sm:$0xff]
      %v1642 = vld [vmem:[%s7 + $0x168] sm:$0xff]
      %v1643 = vld [vmem:[%s7 + $0x170] sm:$0xff]
      %v1644 = vld [vmem:[%s7 + $0x178] sm:$0xff]
      %v1645 = vld [vmem:[%s7 + $0x180] sm:$0xff]
      %v1646 = vld [vmem:[%s7 + $0x188] sm:$0xff]
      %v1647 = vld [vmem:[%s7 + $0x190] sm:$0xff]
      %v1648 = vld [vmem:[%s7 + $0x198] sm:$0xff]
      %v1649 = vld [vmem:[%s7 + $0x1a0] sm:$0xff]
      %v1650 = vld [vmem:[%s7 + $0x1a8] sm:$0xff]
      %v1651 = vld [vmem:[%s7 + $0x1b0] sm:$0xff]
      %v1652 = vld [vmem:[%s7 + $0x1b8] sm:$0xff]
      %v1653 = vld [vmem:[%s7 + $0x1c0] sm:$0xff]
      %v1654 = vld [vmem:[%s7 + $0x1c8] sm:$0xff]
      %v1655 = vld [vmem:[%s7 + $0x1d0] sm:$0xff]
      %v1656 = vld [vmem:[%s7 + $0x1d8] sm:$0xff]
      %v1657 = vld [vmem:[%s7 + $0x1e0] sm:$0xff]
      %v1658 = vld [vmem:[%s7 + $0x1e8] sm:$0xff]
      %v1659 = vld [vmem:[%s7 + $0x1f0] sm:$0xff]
      %v1660 = vld [vmem:[%s7 + $0x1f8] sm:$0xff]
      %v1661 = vpack.c.bf16 %v1598, %v1597
      %v1662 = vpack.c.bf16 %v1600, %v1599
      %v1663 = vpack.c.bf16 %v1602, %v1601
      %v1664 = vpack.c.bf16 %v1604, %v1603
      %v1665 = vpack.c.bf16 %v1606, %v1605
      %v1666 = vpack.c.bf16 %v1608, %v1607
      %v1667 = vpack.c.bf16 %v1610, %v1609
      %v1668 = vpack.c.bf16 %v1612, %v1611
      %v1669 = vpack.c.bf16 %v1614, %v1613
      %v1670 = vpack.c.bf16 %v1616, %v1615
      %v1671 = vpack.c.bf16 %v1618, %v1617
      %v1672 = vpack.c.bf16 %v1620, %v1619
      %v1673 = vpack.c.bf16 %v1622, %v1621
      %v1674 = vpack.c.bf16 %v1624, %v1623
      %v1675 = vpack.c.bf16 %v1626, %v1625
      %v1676 = vpack.c.bf16 %v1628, %v1627
      %v1677 = vpack.c.bf16 %v1630, %v1629
      %v1678 = vpack.c.bf16 %v1632, %v1631
      %v1679 = vpack.c.bf16 %v1634, %v1633
      %v1680 = vpack.c.bf16 %v1636, %v1635
      %v1681 = vpack.c.bf16 %v1638, %v1637
      %v1682 = vpack.c.bf16 %v1640, %v1639
      %v1683 = vpack.c.bf16 %v1642, %v1641
      %v1684 = vpack.c.bf16 %v1644, %v1643
      %v1685 = vpack.c.bf16 %v1646, %v1645
      %v1686 = vpack.c.bf16 %v1648, %v1647
      %v1687 = vpack.c.bf16 %v1650, %v1649
      %v1688 = vpack.c.bf16 %v1652, %v1651
      %v1689 = vpack.c.bf16 %v1654, %v1653
      %v1690 = vpack.c.bf16 %v1656, %v1655
      %v1691 = vpack.c.bf16 %v1658, %v1657
      %v1692 = vpack.c.bf16 %v1660, %v1659
      %v1693 = vmul.bf16 %v1593, %v1661
      %v1694 = vmul.bf16 %v1594, %v1662
      %v1695 = vmul.bf16 %v1595, %v1663
      %v1696 = vmul.bf16 %v1596, %v1664
      %v1697 = vmul.bf16 %v1593, %v1665
      %v1698 = vmul.bf16 %v1594, %v1666
      %v1699 = vmul.bf16 %v1595, %v1667
      %v1700 = vmul.bf16 %v1596, %v1668
      %v1701 = vmul.bf16 %v1593, %v1669
      %v1702 = vmul.bf16 %v1594, %v1670
      %v1703 = vmul.bf16 %v1595, %v1671
      %v1704 = vmul.bf16 %v1596, %v1672
      %v1705 = vmul.bf16 %v1593, %v1673
      %v1706 = vmul.bf16 %v1594, %v1674
      %v1707 = vmul.bf16 %v1595, %v1675
      %v1708 = vmul.bf16 %v1596, %v1676
      %v1709 = vmul.bf16 %v1593, %v1677
      %v1710 = vmul.bf16 %v1594, %v1678
      %v1711 = vmul.bf16 %v1595, %v1679
      %v1712 = vmul.bf16 %v1596, %v1680
      %v1713 = vmul.bf16 %v1593, %v1681
      %v1714 = vmul.bf16 %v1594, %v1682
      %v1715 = vmul.bf16 %v1595, %v1683
      %v1716 = vmul.bf16 %v1596, %v1684
      %v1717 = vmul.bf16 %v1593, %v1685
      %v1718 = vmul.bf16 %v1594, %v1686
      %v1719 = vmul.bf16 %v1595, %v1687
      %v1720 = vmul.bf16 %v1596, %v1688
      %v1721 = vmul.bf16 %v1593, %v1689
      %v1722 = vmul.bf16 %v1594, %v1690
      %v1723 = vmul.bf16 %v1595, %v1691
      %v1724 = vmul.bf16 %v1596, %v1692
      %v1725 = vld [vmem:[%s8] sm:$0xff]
      %v1726 = vld [vmem:[%s8 + $0x8] sm:$0xff]
      %v1727 = vld [vmem:[%s8 + $0x10] sm:$0xff]
      %v1728 = vld [vmem:[%s8 + $0x18] sm:$0xff]
      %v1729 = vld [vmem:[%s8 + $0x20] sm:$0xff]
      %v1730 = vld [vmem:[%s8 + $0x28] sm:$0xff]
      %v1731 = vld [vmem:[%s8 + $0x30] sm:$0xff]
      %v1732 = vld [vmem:[%s8 + $0x38] sm:$0xff]
      %v1733 = vld [vmem:[%s8 + $0x40] sm:$0xff]
      %v1734 = vld [vmem:[%s8 + $0x48] sm:$0xff]
      %v1735 = vld [vmem:[%s8 + $0x50] sm:$0xff]
      %v1736 = vld [vmem:[%s8 + $0x58] sm:$0xff]
      %v1737 = vld [vmem:[%s8 + $0x60] sm:$0xff]
      %v1738 = vld [vmem:[%s8 + $0x68] sm:$0xff]
      %v1739 = vld [vmem:[%s8 + $0x70] sm:$0xff]
      %v1740 = vld [vmem:[%s8 + $0x78] sm:$0xff]
      %v1741 = vld [vmem:[%s8 + $0x80] sm:$0xff]
      %v1742 = vld [vmem:[%s8 + $0x88] sm:$0xff]
      %v1743 = vld [vmem:[%s8 + $0x90] sm:$0xff]
      %v1744 = vld [vmem:[%s8 + $0x98] sm:$0xff]
      %v1745 = vld [vmem:[%s8 + $0xa0] sm:$0xff]
      %v1746 = vld [vmem:[%s8 + $0xa8] sm:$0xff]
      %v1747 = vld [vmem:[%s8 + $0xb0] sm:$0xff]
      %v1748 = vld [vmem:[%s8 + $0xb8] sm:$0xff]
      %v1749 = vld [vmem:[%s8 + $0xc0] sm:$0xff]
      %v1750 = vld [vmem:[%s8 + $0xc8] sm:$0xff]
      %v1751 = vld [vmem:[%s8 + $0xd0] sm:$0xff]
      %v1752 = vld [vmem:[%s8 + $0xd8] sm:$0xff]
      %v1753 = vld [vmem:[%s8 + $0xe0] sm:$0xff]
      %v1754 = vld [vmem:[%s8 + $0xe8] sm:$0xff]
      %v1755 = vld [vmem:[%s8 + $0xf0] sm:$0xff]
      %v1756 = vld [vmem:[%s8 + $0xf8] sm:$0xff]
      %v1757 = vld [vmem:[%s8 + $0x100] sm:$0xff]
      %v1758 = vld [vmem:[%s8 + $0x108] sm:$0xff]
      %v1759 = vld [vmem:[%s8 + $0x110] sm:$0xff]
      %v1760 = vld [vmem:[%s8 + $0x118] sm:$0xff]
      %v1761 = vld [vmem:[%s8 + $0x120] sm:$0xff]
      %v1762 = vld [vmem:[%s8 + $0x128] sm:$0xff]
      %v1763 = vld [vmem:[%s8 + $0x130] sm:$0xff]
      %v1764 = vld [vmem:[%s8 + $0x138] sm:$0xff]
      %v1765 = vld [vmem:[%s8 + $0x140] sm:$0xff]
      %v1766 = vld [vmem:[%s8 + $0x148] sm:$0xff]
      %v1767 = vld [vmem:[%s8 + $0x150] sm:$0xff]
      %v1768 = vld [vmem:[%s8 + $0x158] sm:$0xff]
      %v1769 = vld [vmem:[%s8 + $0x160] sm:$0xff]
      %v1770 = vld [vmem:[%s8 + $0x168] sm:$0xff]
      %v1771 = vld [vmem:[%s8 + $0x170] sm:$0xff]
      %v1772 = vld [vmem:[%s8 + $0x178] sm:$0xff]
      %v1773 = vld [vmem:[%s8 + $0x180] sm:$0xff]
      %v1774 = vld [vmem:[%s8 + $0x188] sm:$0xff]
      %v1775 = vld [vmem:[%s8 + $0x190] sm:$0xff]
      %v1776 = vld [vmem:[%s8 + $0x198] sm:$0xff]
      %v1777 = vld [vmem:[%s8 + $0x1a0] sm:$0xff]
      %v1778 = vld [vmem:[%s8 + $0x1a8] sm:$0xff]
      %v1779 = vld [vmem:[%s8 + $0x1b0] sm:$0xff]
      %v1780 = vld [vmem:[%s8 + $0x1b8] sm:$0xff]
      %v1781 = vld [vmem:[%s8 + $0x1c0] sm:$0xff]
      %v1782 = vld [vmem:[%s8 + $0x1c8] sm:$0xff]
      %v1783 = vld [vmem:[%s8 + $0x1d0] sm:$0xff]
      %v1784 = vld [vmem:[%s8 + $0x1d8] sm:$0xff]
      %v1785 = vld [vmem:[%s8 + $0x1e0] sm:$0xff]
      %v1786 = vld [vmem:[%s8 + $0x1e8] sm:$0xff]
      %v1787 = vld [vmem:[%s8 + $0x1f0] sm:$0xff]
      %v1788 = vld [vmem:[%s8 + $0x1f8] sm:$0xff]
      %1789 = vmatprep.subr.bf16.mxu0 0
      %1790 = vmatpush1.bf16.xpose.msra.mxu0 0
      %1791 = vmatprep.subr.bf16.mxu0 0
      %1792 = vmatpush1.bf16.xpose.msra.mxu0 0
      %1793 = vmatprep.subr.bf16.mxu0 0
      %1794 = vmatpush1.bf16.xpose.msra.mxu0 0
      %1795 = vmatprep.subr.bf16.mxu0 0
      %1796 = vmatpush1.bf16.xpose.msra.mxu0 0
      %1797 = vmatprep.subr.bf16.mxu0 0
      %1798 = vmatpush1.bf16.xpose.msra.mxu0 %v1591
      %1799 = vmatprep.subr.bf16.mxu0 0
      %1800 = vmatpush1.bf16.xpose.msra.mxu0 %v1588
      %1801 = vmatprep.subr.bf16.mxu0 0
      %1802 = vmatpush1.bf16.xpose.msra.mxu0 %v1585
      %1803 = vmatprep.subr.bf16.mxu0 0
      %1804 = vmatpush1.bf16.xpose.msra.mxu0 %v1582
      %1805 = vmatprep.subr.bf16.mxu0 0
      %1806 = vmatpush2.bf16.xpose.msra.mxu0 0
      %1807 = vmatprep.subr.bf16.mxu0 0
      %1808 = vmatpush2.bf16.xpose.msra.mxu0 0
      %1809 = vmatprep.subr.bf16.mxu0 0
      %1810 = vmatpush2.bf16.xpose.msra.mxu0 0
      %1811 = vmatprep.subr.bf16.mxu0 0
      %1812 = vmatpush2.bf16.xpose.msra.mxu0 0
      %1813 = vmatprep.subr.bf16.mxu0 0
      %1814 = vmatpush2.bf16.xpose.msra.mxu0 0
      %1815 = vmatprep.subr.bf16.mxu0 0
      %1816 = vmatpush2.bf16.xpose.msra.mxu0 0
      %1817 = vmatprep.subr.bf16.mxu0 0
      %1818 = vmatpush2.bf16.xpose.msra.mxu0 0
      %1819 = vmatprep.subr.bf16.mxu0 0
      %1820 = vmatpush2.bf16.xpose.msra.mxu0 0
      %1821 = vmatprep.mubr.bf16.mxu0 0
      %1822 = vmatmul.mubr.bf16.gmra.mxu0 %v1693
      %v1823 = vpop.f32.mrf.mxu0
      %v1824 = vadd.f32 %v1725, %v1823
      %v1825 = vpop.f32.mrf.mxu0
      %v1826 = vpop.f32.mrf.mxu0
      %v1827 = vadd.f32 %v1726, %v1826
      %v1828 = vpop.f32.mrf.mxu0
      %1829 = vmatprep.mubr.bf16.mxu0 0
      %1830 = vmatmul.mubr.bf16.gmra.mxu0 %v1694
      %v1831 = vpop.f32.mrf.mxu0
      %v1832 = vadd.f32 %v1727, %v1831
      %v1833 = vpop.f32.mrf.mxu0
      %v1834 = vpop.f32.mrf.mxu0
      %v1835 = vadd.f32 %v1728, %v1834
      %v1836 = vpop.f32.mrf.mxu0
      %1837 = vmatprep.mubr.bf16.mxu0 0
      %1838 = vmatmul.mubr.bf16.gmra.mxu0 %v1695
      %v1839 = vpop.f32.mrf.mxu0
      %v1840 = vadd.f32 %v1729, %v1839
      %v1841 = vpop.f32.mrf.mxu0
      %v1842 = vpop.f32.mrf.mxu0
      %v1843 = vadd.f32 %v1730, %v1842
      %v1844 = vpop.f32.mrf.mxu0
      %1845 = vmatprep.mubr.bf16.mxu0 0
      %1846 = vmatmul.mubr.bf16.gmra.mxu0 %v1696
      %v1847 = vpop.f32.mrf.mxu0
      %v1848 = vadd.f32 %v1731, %v1847
      %v1849 = vpop.f32.mrf.mxu0
      %v1850 = vpop.f32.mrf.mxu0
      %v1851 = vadd.f32 %v1732, %v1850
      %v1852 = vpop.f32.mrf.mxu0
      %1853 = vmatprep.mubr.bf16.mxu0 0
      %1854 = vmatmul.mubr.bf16.gmra.mxu0 %v1697
      %v1855 = vpop.f32.mrf.mxu0
      %v1856 = vadd.f32 %v1733, %v1855
      %v1857 = vpop.f32.mrf.mxu0
      %v1858 = vpop.f32.mrf.mxu0
      %v1859 = vadd.f32 %v1734, %v1858
      %v1860 = vpop.f32.mrf.mxu0
      %1861 = vmatprep.mubr.bf16.mxu0 0
      %1862 = vmatmul.mubr.bf16.gmra.mxu0 %v1698
      %v1863 = vpop.f32.mrf.mxu0
      %v1864 = vadd.f32 %v1735, %v1863
      %v1865 = vpop.f32.mrf.mxu0
      %v1866 = vpop.f32.mrf.mxu0
      %v1867 = vadd.f32 %v1736, %v1866
      %v1868 = vpop.f32.mrf.mxu0
      %1869 = vmatprep.mubr.bf16.mxu0 0
      %1870 = vmatmul.mubr.bf16.gmra.mxu0 %v1699
      %v1871 = vpop.f32.mrf.mxu0
      %v1872 = vadd.f32 %v1737, %v1871
      %v1873 = vpop.f32.mrf.mxu0
      %v1874 = vpop.f32.mrf.mxu0
      %v1875 = vadd.f32 %v1738, %v1874
      %v1876 = vpop.f32.mrf.mxu0
      %1877 = vmatprep.mubr.bf16.mxu0 0
      %1878 = vmatmul.mubr.bf16.gmra.mxu0 %v1700
      %v1879 = vpop.f32.mrf.mxu0
      %v1880 = vadd.f32 %v1739, %v1879
      %v1881 = vpop.f32.mrf.mxu0
      %v1882 = vpop.f32.mrf.mxu0
      %v1883 = vadd.f32 %v1740, %v1882
      %v1884 = vpop.f32.mrf.mxu0
      %1885 = vmatprep.mubr.bf16.mxu0 0
      %1886 = vmatmul.mubr.bf16.gmra.mxu0 %v1701
      %v1887 = vpop.f32.mrf.mxu0
      %v1888 = vadd.f32 %v1741, %v1887
      %v1889 = vpop.f32.mrf.mxu0
      %v1890 = vpop.f32.mrf.mxu0
      %v1891 = vadd.f32 %v1742, %v1890
      %v1892 = vpop.f32.mrf.mxu0
      %1893 = vmatprep.mubr.bf16.mxu0 0
      %1894 = vmatmul.mubr.bf16.gmra.mxu0 %v1702
      %v1895 = vpop.f32.mrf.mxu0
      %v1896 = vadd.f32 %v1743, %v1895
      %v1897 = vpop.f32.mrf.mxu0
      %v1898 = vpop.f32.mrf.mxu0
      %v1899 = vadd.f32 %v1744, %v1898
      %v1900 = vpop.f32.mrf.mxu0
      %1901 = vmatprep.mubr.bf16.mxu0 0
      %1902 = vmatmul.mubr.bf16.gmra.mxu0 %v1703
      %v1903 = vpop.f32.mrf.mxu0
      %v1904 = vadd.f32 %v1745, %v1903
      %v1905 = vpop.f32.mrf.mxu0
      %v1906 = vpop.f32.mrf.mxu0
      %v1907 = vadd.f32 %v1746, %v1906
      %v1908 = vpop.f32.mrf.mxu0
      %1909 = vmatprep.mubr.bf16.mxu0 0
      %1910 = vmatmul.mubr.bf16.gmra.mxu0 %v1704
      %v1911 = vpop.f32.mrf.mxu0
      %v1912 = vadd.f32 %v1747, %v1911
      %v1913 = vpop.f32.mrf.mxu0
      %v1914 = vpop.f32.mrf.mxu0
      %v1915 = vadd.f32 %v1748, %v1914
      %v1916 = vpop.f32.mrf.mxu0
      %1917 = vmatprep.mubr.bf16.mxu0 0
      %1918 = vmatmul.mubr.bf16.gmra.mxu0 %v1705
      %v1919 = vpop.f32.mrf.mxu0
      %v1920 = vadd.f32 %v1749, %v1919
      %v1921 = vpop.f32.mrf.mxu0
      %v1922 = vpop.f32.mrf.mxu0
      %v1923 = vadd.f32 %v1750, %v1922
      %v1924 = vpop.f32.mrf.mxu0
      %1925 = vmatprep.mubr.bf16.mxu0 0
      %1926 = vmatmul.mubr.bf16.gmra.mxu0 %v1706
      %v1927 = vpop.f32.mrf.mxu0
      %v1928 = vadd.f32 %v1751, %v1927
      %v1929 = vpop.f32.mrf.mxu0
      %v1930 = vpop.f32.mrf.mxu0
      %v1931 = vadd.f32 %v1752, %v1930
      %v1932 = vpop.f32.mrf.mxu0
      %1933 = vmatprep.mubr.bf16.mxu0 0
      %1934 = vmatmul.mubr.bf16.gmra.mxu0 %v1707
      %v1935 = vpop.f32.mrf.mxu0
      %v1936 = vadd.f32 %v1753, %v1935
      %v1937 = vpop.f32.mrf.mxu0
      %v1938 = vpop.f32.mrf.mxu0
      %v1939 = vadd.f32 %v1754, %v1938
      %v1940 = vpop.f32.mrf.mxu0
      %1941 = vmatprep.mubr.bf16.mxu0 0
      %1942 = vmatmul.mubr.bf16.gmra.mxu0 %v1708
      %v1943 = vpop.f32.mrf.mxu0
      %v1944 = vadd.f32 %v1755, %v1943
      %v1945 = vpop.f32.mrf.mxu0
      %v1946 = vpop.f32.mrf.mxu0
      %v1947 = vadd.f32 %v1756, %v1946
      %v1948 = vpop.f32.mrf.mxu0
      %1949 = vmatprep.mubr.bf16.mxu0 0
      %1950 = vmatmul.mubr.bf16.gmra.mxu0 %v1709
      %v1951 = vpop.f32.mrf.mxu0
      %v1952 = vadd.f32 %v1757, %v1951
      %v1953 = vpop.f32.mrf.mxu0
      %v1954 = vpop.f32.mrf.mxu0
      %v1955 = vadd.f32 %v1758, %v1954
      %v1956 = vpop.f32.mrf.mxu0
      %1957 = vmatprep.mubr.bf16.mxu0 0
      %1958 = vmatmul.mubr.bf16.gmra.mxu0 %v1710
      %v1959 = vpop.f32.mrf.mxu0
      %v1960 = vadd.f32 %v1759, %v1959
      %v1961 = vpop.f32.mrf.mxu0
      %v1962 = vpop.f32.mrf.mxu0
      %v1963 = vadd.f32 %v1760, %v1962
      %v1964 = vpop.f32.mrf.mxu0
      %1965 = vmatprep.mubr.bf16.mxu0 0
      %1966 = vmatmul.mubr.bf16.gmra.mxu0 %v1711
      %v1967 = vpop.f32.mrf.mxu0
      %v1968 = vadd.f32 %v1761, %v1967
      %v1969 = vpop.f32.mrf.mxu0
      %v1970 = vpop.f32.mrf.mxu0
      %v1971 = vadd.f32 %v1762, %v1970
      %v1972 = vpop.f32.mrf.mxu0
      %1973 = vmatprep.mubr.bf16.mxu0 0
      %1974 = vmatmul.mubr.bf16.gmra.mxu0 %v1712
      %v1975 = vpop.f32.mrf.mxu0
      %v1976 = vadd.f32 %v1763, %v1975
      %v1977 = vpop.f32.mrf.mxu0
      %v1978 = vpop.f32.mrf.mxu0
      %v1979 = vadd.f32 %v1764, %v1978
      %v1980 = vpop.f32.mrf.mxu0
      %1981 = vmatprep.mubr.bf16.mxu0 0
      %1982 = vmatmul.mubr.bf16.gmra.mxu0 %v1713
      %v1983 = vpop.f32.mrf.mxu0
      %v1984 = vadd.f32 %v1765, %v1983
      %v1985 = vpop.f32.mrf.mxu0
      %v1986 = vpop.f32.mrf.mxu0
      %v1987 = vadd.f32 %v1766, %v1986
      %v1988 = vpop.f32.mrf.mxu0
      %1989 = vmatprep.mubr.bf16.mxu0 0
      %1990 = vmatmul.mubr.bf16.gmra.mxu0 %v1714
      %v1991 = vpop.f32.mrf.mxu0
      %v1992 = vadd.f32 %v1767, %v1991
      %v1993 = vpop.f32.mrf.mxu0
      %v1994 = vpop.f32.mrf.mxu0
      %v1995 = vadd.f32 %v1768, %v1994
      %v1996 = vpop.f32.mrf.mxu0
      %1997 = vmatprep.mubr.bf16.mxu0 0
      %1998 = vmatmul.mubr.bf16.gmra.mxu0 %v1715
      %v1999 = vpop.f32.mrf.mxu0
      %v2000 = vadd.f32 %v1769, %v1999
      %v2001 = vpop.f32.mrf.mxu0
      %v2002 = vpop.f32.mrf.mxu0
      %v2003 = vadd.f32 %v1770, %v2002
      %v2004 = vpop.f32.mrf.mxu0
      %2005 = vmatprep.mubr.bf16.mxu0 0
      %2006 = vmatmul.mubr.bf16.gmra.mxu0 %v1716
      %v2007 = vpop.f32.mrf.mxu0
      %v2008 = vadd.f32 %v1771, %v2007
      %v2009 = vpop.f32.mrf.mxu0
      %v2010 = vpop.f32.mrf.mxu0
      %v2011 = vadd.f32 %v1772, %v2010
      %v2012 = vpop.f32.mrf.mxu0
      %2013 = vmatprep.mubr.bf16.mxu0 0
      %2014 = vmatmul.mubr.bf16.gmra.mxu0 %v1717
      %v2015 = vpop.f32.mrf.mxu0
      %v2016 = vadd.f32 %v1773, %v2015
      %v2017 = vpop.f32.mrf.mxu0
      %v2018 = vpop.f32.mrf.mxu0
      %v2019 = vadd.f32 %v1774, %v2018
      %v2020 = vpop.f32.mrf.mxu0
      %2021 = vmatprep.mubr.bf16.mxu0 0
      %2022 = vmatmul.mubr.bf16.gmra.mxu0 %v1718
      %v2023 = vpop.f32.mrf.mxu0
      %v2024 = vadd.f32 %v1775, %v2023
      %v2025 = vpop.f32.mrf.mxu0
      %v2026 = vpop.f32.mrf.mxu0
      %v2027 = vadd.f32 %v1776, %v2026
      %v2028 = vpop.f32.mrf.mxu0
      %2029 = vmatprep.mubr.bf16.mxu0 0
      %2030 = vmatmul.mubr.bf16.gmra.mxu0 %v1719
      %v2031 = vpop.f32.mrf.mxu0
      %v2032 = vadd.f32 %v1777, %v2031
      %v2033 = vpop.f32.mrf.mxu0
      %v2034 = vpop.f32.mrf.mxu0
      %v2035 = vadd.f32 %v1778, %v2034
      %v2036 = vpop.f32.mrf.mxu0
      %2037 = vmatprep.mubr.bf16.mxu0 0
      %2038 = vmatmul.mubr.bf16.gmra.mxu0 %v1720
      %v2039 = vpop.f32.mrf.mxu0
      %v2040 = vadd.f32 %v1779, %v2039
      %v2041 = vpop.f32.mrf.mxu0
      %v2042 = vpop.f32.mrf.mxu0
      %v2043 = vadd.f32 %v1780, %v2042
      %v2044 = vpop.f32.mrf.mxu0
      %2045 = vmatprep.mubr.bf16.mxu0 0
      %2046 = vmatmul.mubr.bf16.gmra.mxu0 %v1721
      %v2047 = vpop.f32.mrf.mxu0
      %v2048 = vadd.f32 %v1781, %v2047
      %v2049 = vpop.f32.mrf.mxu0
      %v2050 = vpop.f32.mrf.mxu0
      %v2051 = vadd.f32 %v1782, %v2050
      %v2052 = vpop.f32.mrf.mxu0
      %2053 = vmatprep.mubr.bf16.mxu0 0
      %2054 = vmatmul.mubr.bf16.gmra.mxu0 %v1722
      %v2055 = vpop.f32.mrf.mxu0
      %v2056 = vadd.f32 %v1783, %v2055
      %v2057 = vpop.f32.mrf.mxu0
      %v2058 = vpop.f32.mrf.mxu0
      %v2059 = vadd.f32 %v1784, %v2058
      %v2060 = vpop.f32.mrf.mxu0
      %2061 = vmatprep.mubr.bf16.mxu0 0
      %2062 = vmatmul.mubr.bf16.gmra.mxu0 %v1723
      %v2063 = vpop.f32.mrf.mxu0
      %v2064 = vadd.f32 %v1785, %v2063
      %v2065 = vpop.f32.mrf.mxu0
      %v2066 = vpop.f32.mrf.mxu0
      %v2067 = vadd.f32 %v1786, %v2066
      %v2068 = vpop.f32.mrf.mxu0
      %2069 = vmatprep.mubr.bf16.mxu0 0
      %2070 = vmatmul.mubr.bf16.gmra.mxu0 %v1724
      %v2071 = vpop.f32.mrf.mxu0
      %v2072 = vadd.f32 %v1787, %v2071
      %v2073 = vpop.f32.mrf.mxu0
      %v2074 = vpop.f32.mrf.mxu0
      %v2075 = vadd.f32 %v1788, %v2074
      %v2076 = vpop.f32.mrf.mxu0
      %2077 = vdwg.mxu0
      %vm2078 = vcmask 523264
      %v2079 = vsel %vm2078, %v1824, -inf
      %2080 = vmax.xlane.f32.xlu0 %v2079
      %v2081 = vpop.xlane.xlu0 %2080
      %v2082 = vsel %vm2078, %v1827, -inf
      %2083 = vmax.xlane.f32.xlu0 %v2082
      %v2084 = vpop.xlane.xlu0 %2083
      %v2085 = vsel %vm2078, %v1832, -inf
      %2086 = vmax.xlane.f32.xlu0 %v2085
      %v2087 = vpop.xlane.xlu0 %2086
      %v2088 = vsel %vm2078, %v1835, -inf
      %2089 = vmax.xlane.f32.xlu0 %v2088
      %v2090 = vpop.xlane.xlu0 %2089
      %v2091 = vsel %vm2078, %v1840, -inf
      %2092 = vmax.xlane.f32.xlu0 %v2091
      %v2093 = vpop.xlane.xlu0 %2092
      %v2094 = vsel %vm2078, %v1843, -inf
      %2095 = vmax.xlane.f32.xlu0 %v2094
      %v2096 = vpop.xlane.xlu0 %2095
      %v2097 = vsel %vm2078, %v1848, -inf
      %2098 = vmax.xlane.f32.xlu0 %v2097
      %v2099 = vpop.xlane.xlu0 %2098
      %v2100 = vsel %vm2078, %v1851, -inf
      %2101 = vmax.xlane.f32.xlu0 %v2100
      %v2102 = vpop.xlane.xlu0 %2101
      %v2103 = vsel %vm2078, %v1856, -inf
      %2104 = vmax.xlane.f32.xlu0 %v2103
      %v2105 = vpop.xlane.xlu0 %2104
      %v2106 = vsel %vm2078, %v1859, -inf
      %2107 = vmax.xlane.f32.xlu0 %v2106
      %v2108 = vpop.xlane.xlu0 %2107
      %v2109 = vsel %vm2078, %v1864, -inf
      %2110 = vmax.xlane.f32.xlu0 %v2109
      %v2111 = vpop.xlane.xlu0 %2110
      %v2112 = vsel %vm2078, %v1867, -inf
      %2113 = vmax.xlane.f32.xlu0 %v2112
      %v2114 = vpop.xlane.xlu0 %2113
      %v2115 = vsel %vm2078, %v1872, -inf
      %2116 = vmax.xlane.f32.xlu0 %v2115
      %v2117 = vpop.xlane.xlu0 %2116
      %v2118 = vsel %vm2078, %v1875, -inf
      %2119 = vmax.xlane.f32.xlu0 %v2118
      %v2120 = vpop.xlane.xlu0 %2119
      %v2121 = vsel %vm2078, %v1880, -inf
      %2122 = vmax.xlane.f32.xlu0 %v2121
      %v2123 = vpop.xlane.xlu0 %2122
      %v2124 = vsel %vm2078, %v1883, -inf
      %2125 = vmax.xlane.f32.xlu0 %v2124
      %v2126 = vpop.xlane.xlu0 %2125
      %v2127 = vsel %vm2078, %v1888, -inf
      %2128 = vmax.xlane.f32.xlu0 %v2127
      %v2129 = vpop.xlane.xlu0 %2128
      %v2130 = vsel %vm2078, %v1891, -inf
      %2131 = vmax.xlane.f32.xlu0 %v2130
      %v2132 = vpop.xlane.xlu0 %2131
      %v2133 = vsel %vm2078, %v1896, -inf
      %2134 = vmax.xlane.f32.xlu0 %v2133
      %v2135 = vpop.xlane.xlu0 %2134
      %v2136 = vsel %vm2078, %v1899, -inf
      %2137 = vmax.xlane.f32.xlu0 %v2136
      %v2138 = vpop.xlane.xlu0 %2137
      %v2139 = vsel %vm2078, %v1904, -inf
      %2140 = vmax.xlane.f32.xlu0 %v2139
      %v2141 = vpop.xlane.xlu0 %2140
      %v2142 = vsel %vm2078, %v1907, -inf
      %2143 = vmax.xlane.f32.xlu0 %v2142
      %v2144 = vpop.xlane.xlu0 %2143
      %v2145 = vsel %vm2078, %v1912, -inf
      %2146 = vmax.xlane.f32.xlu0 %v2145
      %v2147 = vpop.xlane.xlu0 %2146
      %v2148 = vsel %vm2078, %v1915, -inf
      %2149 = vmax.xlane.f32.xlu0 %v2148
      %v2150 = vpop.xlane.xlu0 %2149
      %v2151 = vsel %vm2078, %v1920, -inf
      %2152 = vmax.xlane.f32.xlu0 %v2151
      %v2153 = vpop.xlane.xlu0 %2152
      %v2154 = vsel %vm2078, %v1923, -inf
      %2155 = vmax.xlane.f32.xlu0 %v2154
      %v2156 = vpop.xlane.xlu0 %2155
      %v2157 = vsel %vm2078, %v1928, -inf
      %2158 = vmax.xlane.f32.xlu0 %v2157
      %v2159 = vpop.xlane.xlu0 %2158
      %v2160 = vsel %vm2078, %v1931, -inf
      %2161 = vmax.xlane.f32.xlu0 %v2160
      %v2162 = vpop.xlane.xlu0 %2161
      %v2163 = vsel %vm2078, %v1936, -inf
      %2164 = vmax.xlane.f32.xlu0 %v2163
      %v2165 = vpop.xlane.xlu0 %2164
      %v2166 = vsel %vm2078, %v1939, -inf
      %2167 = vmax.xlane.f32.xlu0 %v2166
      %v2168 = vpop.xlane.xlu0 %2167
      %v2169 = vsel %vm2078, %v1944, -inf
      %2170 = vmax.xlane.f32.xlu0 %v2169
      %v2171 = vpop.xlane.xlu0 %2170
      %v2172 = vsel %vm2078, %v1947, -inf
      %2173 = vmax.xlane.f32.xlu0 %v2172
      %v2174 = vpop.xlane.xlu0 %2173
      %v2175 = vsel %vm2078, %v1952, -inf
      %2176 = vmax.xlane.f32.xlu0 %v2175
      %v2177 = vpop.xlane.xlu0 %2176
      %v2178 = vsel %vm2078, %v1955, -inf
      %2179 = vmax.xlane.f32.xlu0 %v2178
      %v2180 = vpop.xlane.xlu0 %2179
      %v2181 = vsel %vm2078, %v1960, -inf
      %2182 = vmax.xlane.f32.xlu0 %v2181
      %v2183 = vpop.xlane.xlu0 %2182
      %v2184 = vsel %vm2078, %v1963, -inf
      %2185 = vmax.xlane.f32.xlu0 %v2184
      %v2186 = vpop.xlane.xlu0 %2185
      %v2187 = vsel %vm2078, %v1968, -inf
      %2188 = vmax.xlane.f32.xlu0 %v2187
      %v2189 = vpop.xlane.xlu0 %2188
      %v2190 = vsel %vm2078, %v1971, -inf
      %2191 = vmax.xlane.f32.xlu0 %v2190
      %v2192 = vpop.xlane.xlu0 %2191
      %v2193 = vsel %vm2078, %v1976, -inf
      %2194 = vmax.xlane.f32.xlu0 %v2193
      %v2195 = vpop.xlane.xlu0 %2194
      %v2196 = vsel %vm2078, %v1979, -inf
      %2197 = vmax.xlane.f32.xlu0 %v2196
      %v2198 = vpop.xlane.xlu0 %2197
      %v2199 = vsel %vm2078, %v1984, -inf
      %2200 = vmax.xlane.f32.xlu0 %v2199
      %v2201 = vpop.xlane.xlu0 %2200
      %v2202 = vsel %vm2078, %v1987, -inf
      %2203 = vmax.xlane.f32.xlu0 %v2202
      %v2204 = vpop.xlane.xlu0 %2203
      %v2205 = vsel %vm2078, %v1992, -inf
      %2206 = vmax.xlane.f32.xlu0 %v2205
      %v2207 = vpop.xlane.xlu0 %2206
      %v2208 = vsel %vm2078, %v1995, -inf
      %2209 = vmax.xlane.f32.xlu0 %v2208
      %v2210 = vpop.xlane.xlu0 %2209
      %v2211 = vsel %vm2078, %v2000, -inf
      %2212 = vmax.xlane.f32.xlu0 %v2211
      %v2213 = vpop.xlane.xlu0 %2212
      %v2214 = vsel %vm2078, %v2003, -inf
      %2215 = vmax.xlane.f32.xlu0 %v2214
      %v2216 = vpop.xlane.xlu0 %2215
      %v2217 = vsel %vm2078, %v2008, -inf
      %2218 = vmax.xlane.f32.xlu0 %v2217
      %v2219 = vpop.xlane.xlu0 %2218
      %v2220 = vsel %vm2078, %v2011, -inf
      %2221 = vmax.xlane.f32.xlu0 %v2220
      %v2222 = vpop.xlane.xlu0 %2221
      %v2223 = vsel %vm2078, %v2016, -inf
      %2224 = vmax.xlane.f32.xlu0 %v2223
      %v2225 = vpop.xlane.xlu0 %2224
      %v2226 = vsel %vm2078, %v2019, -inf
      %2227 = vmax.xlane.f32.xlu0 %v2226
      %v2228 = vpop.xlane.xlu0 %2227
      %v2229 = vsel %vm2078, %v2024, -inf
      %2230 = vmax.xlane.f32.xlu0 %v2229
      %v2231 = vpop.xlane.xlu0 %2230
      %v2232 = vsel %vm2078, %v2027, -inf
      %2233 = vmax.xlane.f32.xlu0 %v2232
      %v2234 = vpop.xlane.xlu0 %2233
      %v2235 = vsel %vm2078, %v2032, -inf
      %2236 = vmax.xlane.f32.xlu0 %v2235
      %v2237 = vpop.xlane.xlu0 %2236
      %v2238 = vsel %vm2078, %v2035, -inf
      %2239 = vmax.xlane.f32.xlu0 %v2238
      %v2240 = vpop.xlane.xlu0 %2239
      %v2241 = vsel %vm2078, %v2040, -inf
      %2242 = vmax.xlane.f32.xlu0 %v2241
      %v2243 = vpop.xlane.xlu0 %2242
      %v2244 = vsel %vm2078, %v2043, -inf
      %2245 = vmax.xlane.f32.xlu0 %v2244
      %v2246 = vpop.xlane.xlu0 %2245
      %v2247 = vsel %vm2078, %v2048, -inf
      %2248 = vmax.xlane.f32.xlu0 %v2247
      %v2249 = vpop.xlane.xlu0 %2248
      %v2250 = vsel %vm2078, %v2051, -inf
      %2251 = vmax.xlane.f32.xlu0 %v2250
      %v2252 = vpop.xlane.xlu0 %2251
      %v2253 = vsel %vm2078, %v2056, -inf
      %2254 = vmax.xlane.f32.xlu0 %v2253
      %v2255 = vpop.xlane.xlu0 %2254
      %v2256 = vsel %vm2078, %v2059, -inf
      %2257 = vmax.xlane.f32.xlu0 %v2256
      %v2258 = vpop.xlane.xlu0 %2257
      %v2259 = vsel %vm2078, %v2064, -inf
      %2260 = vmax.xlane.f32.xlu0 %v2259
      %v2261 = vpop.xlane.xlu0 %2260
      %v2262 = vsel %vm2078, %v2067, -inf
      %2263 = vmax.xlane.f32.xlu0 %v2262
      %v2264 = vpop.xlane.xlu0 %2263
      %v2265 = vsel %vm2078, %v2072, -inf
      %2266 = vmax.xlane.f32.xlu0 %v2265
      %v2267 = vpop.xlane.xlu0 %2266
      %v2268 = vsel %vm2078, %v2075, -inf
      %2269 = vmax.xlane.f32.xlu0 %v2268
      %v2270 = vpop.xlane.xlu0 %2269
      %v2271 = vsub.f32 %v1824, %v2081
      %v2272 = vsub.f32 %v1827, %v2084
      %v2273 = vsub.f32 %v1832, %v2087
      %v2274 = vsub.f32 %v1835, %v2090
      %v2275 = vsub.f32 %v1840, %v2093
      %v2276 = vsub.f32 %v1843, %v2096
      %v2277 = vsub.f32 %v1848, %v2099
      %v2278 = vsub.f32 %v1851, %v2102
      %v2279 = vsub.f32 %v1856, %v2105
      %v2280 = vsub.f32 %v1859, %v2108
      %v2281 = vsub.f32 %v1864, %v2111
      %v2282 = vsub.f32 %v1867, %v2114
      %v2283 = vsub.f32 %v1872, %v2117
      %v2284 = vsub.f32 %v1875, %v2120
      %v2285 = vsub.f32 %v1880, %v2123
      %v2286 = vsub.f32 %v1883, %v2126
      %v2287 = vsub.f32 %v1888, %v2129
      %v2288 = vsub.f32 %v1891, %v2132
      %v2289 = vsub.f32 %v1896, %v2135
      %v2290 = vsub.f32 %v1899, %v2138
      %v2291 = vsub.f32 %v1904, %v2141
      %v2292 = vsub.f32 %v1907, %v2144
      %v2293 = vsub.f32 %v1912, %v2147
      %v2294 = vsub.f32 %v1915, %v2150
      %v2295 = vsub.f32 %v1920, %v2153
      %v2296 = vsub.f32 %v1923, %v2156
      %v2297 = vsub.f32 %v1928, %v2159
      %v2298 = vsub.f32 %v1931, %v2162
      %v2299 = vsub.f32 %v1936, %v2165
      %v2300 = vsub.f32 %v1939, %v2168
      %v2301 = vsub.f32 %v1944, %v2171
      %v2302 = vsub.f32 %v1947, %v2174
      %v2303 = vsub.f32 %v1952, %v2177
      %v2304 = vsub.f32 %v1955, %v2180
      %v2305 = vsub.f32 %v1960, %v2183
      %v2306 = vsub.f32 %v1963, %v2186
      %v2307 = vsub.f32 %v1968, %v2189
      %v2308 = vsub.f32 %v1971, %v2192
      %v2309 = vsub.f32 %v1976, %v2195
      %v2310 = vsub.f32 %v1979, %v2198
      %v2311 = vsub.f32 %v1984, %v2201
      %v2312 = vsub.f32 %v1987, %v2204
      %v2313 = vsub.f32 %v1992, %v2207
      %v2314 = vsub.f32 %v1995, %v2210
      %v2315 = vsub.f32 %v2000, %v2213
      %v2316 = vsub.f32 %v2003, %v2216
      %v2317 = vsub.f32 %v2008, %v2219
      %v2318 = vsub.f32 %v2011, %v2222
      %v2319 = vsub.f32 %v2016, %v2225
      %v2320 = vsub.f32 %v2019, %v2228
      %v2321 = vsub.f32 %v2024, %v2231
      %v2322 = vsub.f32 %v2027, %v2234
      %v2323 = vsub.f32 %v2032, %v2237
      %v2324 = vsub.f32 %v2035, %v2240
      %v2325 = vsub.f32 %v2040, %v2243
      %v2326 = vsub.f32 %v2043, %v2246
      %v2327 = vsub.f32 %v2048, %v2249
      %v2328 = vsub.f32 %v2051, %v2252
      %v2329 = vsub.f32 %v2056, %v2255
      %v2330 = vsub.f32 %v2059, %v2258
      %v2331 = vsub.f32 %v2064, %v2261
      %v2332 = vsub.f32 %v2067, %v2264
      %v2333 = vsub.f32 %v2072, %v2267
      %v2334 = vsub.f32 %v2075, %v2270
      %v2335 = vmul.f32 %v2271, 1.442695
      %v2336 = vpow.pop %v2335
      %v2337 = vmul.f32 %v2272, 1.442695
      %v2338 = vpow.pop %v2337
      %v2339 = vmul.f32 %v2273, 1.442695
      %v2340 = vpow.pop %v2339
      %v2341 = vmul.f32 %v2274, 1.442695
      %v2342 = vpow.pop %v2341
      %v2343 = vmul.f32 %v2275, 1.442695
      %v2344 = vpow.pop %v2343
      %v2345 = vmul.f32 %v2276, 1.442695
      %v2346 = vpow.pop %v2345
      %v2347 = vmul.f32 %v2277, 1.442695
      %v2348 = vpow.pop %v2347
      %v2349 = vmul.f32 %v2278, 1.442695
      %v2350 = vpow.pop %v2349
      %v2351 = vmul.f32 %v2279, 1.442695
      %v2352 = vpow.pop %v2351
      %v2353 = vmul.f32 %v2280, 1.442695
      %v2354 = vpow.pop %v2353
      %v2355 = vmul.f32 %v2281, 1.442695
      %v2356 = vpow.pop %v2355
      %v2357 = vmul.f32 %v2282, 1.442695
      %v2358 = vpow.pop %v2357
      %v2359 = vmul.f32 %v2283, 1.442695
      %v2360 = vpow.pop %v2359
      %v2361 = vmul.f32 %v2284, 1.442695
      %v2362 = vpow.pop %v2361
      %v2363 = vmul.f32 %v2285, 1.442695
      %v2364 = vpow.pop %v2363
      %v2365 = vmul.f32 %v2286, 1.442695
      %v2366 = vpow.pop %v2365
      %v2367 = vmul.f32 %v2287, 1.442695
      %v2368 = vpow.pop %v2367
      %v2369 = vmul.f32 %v2288, 1.442695
      %v2370 = vpow.pop %v2369
      %v2371 = vmul.f32 %v2289, 1.442695
      %v2372 = vpow.pop %v2371
      %v2373 = vmul.f32 %v2290, 1.442695
      %v2374 = vpow.pop %v2373
      %v2375 = vmul.f32 %v2291, 1.442695
      %v2376 = vpow.pop %v2375
      %v2377 = vmul.f32 %v2292, 1.442695
      %v2378 = vpow.pop %v2377
      %v2379 = vmul.f32 %v2293, 1.442695
      %v2380 = vpow.pop %v2379
      %v2381 = vmul.f32 %v2294, 1.442695
      %v2382 = vpow.pop %v2381
      %v2383 = vmul.f32 %v2295, 1.442695
      %v2384 = vpow.pop %v2383
      %v2385 = vmul.f32 %v2296, 1.442695
      %v2386 = vpow.pop %v2385
      %v2387 = vmul.f32 %v2297, 1.442695
      %v2388 = vpow.pop %v2387
      %v2389 = vmul.f32 %v2298, 1.442695
      %v2390 = vpow.pop %v2389
      %v2391 = vmul.f32 %v2299, 1.442695
      %v2392 = vpow.pop %v2391
      %v2393 = vmul.f32 %v2300, 1.442695
      %v2394 = vpow.pop %v2393
      %v2395 = vmul.f32 %v2301, 1.442695
      %v2396 = vpow.pop %v2395
      %v2397 = vmul.f32 %v2302, 1.442695
      %v2398 = vpow.pop %v2397
      %v2399 = vmul.f32 %v2303, 1.442695
      %v2400 = vpow.pop %v2399
      %v2401 = vmul.f32 %v2304, 1.442695
      %v2402 = vpow.pop %v2401
      %v2403 = vmul.f32 %v2305, 1.442695
      %v2404 = vpow.pop %v2403
      %v2405 = vmul.f32 %v2306, 1.442695
      %v2406 = vpow.pop %v2405
      %v2407 = vmul.f32 %v2307, 1.442695
      %v2408 = vpow.pop %v2407
      %v2409 = vmul.f32 %v2308, 1.442695
      %v2410 = vpow.pop %v2409
      %v2411 = vmul.f32 %v2309, 1.442695
      %v2412 = vpow.pop %v2411
      %v2413 = vmul.f32 %v2310, 1.442695
      %v2414 = vpow.pop %v2413
      %v2415 = vmul.f32 %v2311, 1.442695
      %v2416 = vpow.pop %v2415
      %v2417 = vmul.f32 %v2312, 1.442695
      %v2418 = vpow.pop %v2417
      %v2419 = vmul.f32 %v2313, 1.442695
      %v2420 = vpow.pop %v2419
      %v2421 = vmul.f32 %v2314, 1.442695
      %v2422 = vpow.pop %v2421
      %v2423 = vmul.f32 %v2315, 1.442695
      %v2424 = vpow.pop %v2423
      %v2425 = vmul.f32 %v2316, 1.442695
      %v2426 = vpow.pop %v2425
      %v2427 = vmul.f32 %v2317, 1.442695
      %v2428 = vpow.pop %v2427
      %v2429 = vmul.f32 %v2318, 1.442695
      %v2430 = vpow.pop %v2429
      %v2431 = vmul.f32 %v2319, 1.442695
      %v2432 = vpow.pop %v2431
      %v2433 = vmul.f32 %v2320, 1.442695
      %v2434 = vpow.pop %v2433
      %v2435 = vmul.f32 %v2321, 1.442695
      %v2436 = vpow.pop %v2435
      %v2437 = vmul.f32 %v2322, 1.442695
      %v2438 = vpow.pop %v2437
      %v2439 = vmul.f32 %v2323, 1.442695
      %v2440 = vpow.pop %v2439
      %v2441 = vmul.f32 %v2324, 1.442695
      %v2442 = vpow.pop %v2441
      %v2443 = vmul.f32 %v2325, 1.442695
      %v2444 = vpow.pop %v2443
      %v2445 = vmul.f32 %v2326, 1.442695
      %v2446 = vpow.pop %v2445
      %v2447 = vmul.f32 %v2327, 1.442695
      %v2448 = vpow.pop %v2447
      %v2449 = vmul.f32 %v2328, 1.442695
      %v2450 = vpow.pop %v2449
      %v2451 = vmul.f32 %v2329, 1.442695
      %v2452 = vpow.pop %v2451
      %v2453 = vmul.f32 %v2330, 1.442695
      %v2454 = vpow.pop %v2453
      %v2455 = vmul.f32 %v2331, 1.442695
      %v2456 = vpow.pop %v2455
      %v2457 = vmul.f32 %v2332, 1.442695
      %v2458 = vpow.pop %v2457
      %v2459 = vmul.f32 %v2333, 1.442695
      %v2460 = vpow.pop %v2459
      %v2461 = vmul.f32 %v2334, 1.442695
      %v2462 = vpow.pop %v2461
      %v2463 = vsel %vm2078, %v2336, 0.0
      %2464 = vadd.xlane.f32.xlu0 %v2463
      %v2465 = vpop.xlane.xlu0 %2464
      %v2466 = vsel %vm2078, %v2338, 0.0
      %2467 = vadd.xlane.f32.xlu0 %v2466
      %v2468 = vpop.xlane.xlu0 %2467
      %v2469 = vsel %vm2078, %v2340, 0.0
      %2470 = vadd.xlane.f32.xlu0 %v2469
      %v2471 = vpop.xlane.xlu0 %2470
      %v2472 = vsel %vm2078, %v2342, 0.0
      %2473 = vadd.xlane.f32.xlu0 %v2472
      %v2474 = vpop.xlane.xlu0 %2473
      %v2475 = vsel %vm2078, %v2344, 0.0
      %2476 = vadd.xlane.f32.xlu0 %v2475
      %v2477 = vpop.xlane.xlu0 %2476
      %v2478 = vsel %vm2078, %v2346, 0.0
      %2479 = vadd.xlane.f32.xlu0 %v2478
      %v2480 = vpop.xlane.xlu0 %2479
      %v2481 = vsel %vm2078, %v2348, 0.0
      %2482 = vadd.xlane.f32.xlu0 %v2481
      %v2483 = vpop.xlane.xlu0 %2482
      %v2484 = vsel %vm2078, %v2350, 0.0
      %2485 = vadd.xlane.f32.xlu0 %v2484
      %v2486 = vpop.xlane.xlu0 %2485
      %v2487 = vsel %vm2078, %v2352, 0.0
      %2488 = vadd.xlane.f32.xlu0 %v2487
      %v2489 = vpop.xlane.xlu0 %2488
      %v2490 = vsel %vm2078, %v2354, 0.0
      %2491 = vadd.xlane.f32.xlu0 %v2490
      %v2492 = vpop.xlane.xlu0 %2491
      %v2493 = vsel %vm2078, %v2356, 0.0
      %2494 = vadd.xlane.f32.xlu0 %v2493
      %v2495 = vpop.xlane.xlu0 %2494
      %v2496 = vsel %vm2078, %v2358, 0.0
      %2497 = vadd.xlane.f32.xlu0 %v2496
      %v2498 = vpop.xlane.xlu0 %2497
      %v2499 = vsel %vm2078, %v2360, 0.0
      %2500 = vadd.xlane.f32.xlu0 %v2499
      %v2501 = vpop.xlane.xlu0 %2500
      %v2502 = vsel %vm2078, %v2362, 0.0
      %2503 = vadd.xlane.f32.xlu0 %v2502
      %v2504 = vpop.xlane.xlu0 %2503
      %v2505 = vsel %vm2078, %v2364, 0.0
      %2506 = vadd.xlane.f32.xlu0 %v2505
      %v2507 = vpop.xlane.xlu0 %2506
      %v2508 = vsel %vm2078, %v2366, 0.0
      %2509 = vadd.xlane.f32.xlu0 %v2508
      %v2510 = vpop.xlane.xlu0 %2509
      %v2511 = vsel %vm2078, %v2368, 0.0
      %2512 = vadd.xlane.f32.xlu0 %v2511
      %v2513 = vpop.xlane.xlu0 %2512
      %v2514 = vsel %vm2078, %v2370, 0.0
      %2515 = vadd.xlane.f32.xlu0 %v2514
      %v2516 = vpop.xlane.xlu0 %2515
      %v2517 = vsel %vm2078, %v2372, 0.0
      %2518 = vadd.xlane.f32.xlu0 %v2517
      %v2519 = vpop.xlane.xlu0 %2518
      %v2520 = vsel %vm2078, %v2374, 0.0
      %2521 = vadd.xlane.f32.xlu0 %v2520
      %v2522 = vpop.xlane.xlu0 %2521
      %v2523 = vsel %vm2078, %v2376, 0.0
      %2524 = vadd.xlane.f32.xlu0 %v2523
      %v2525 = vpop.xlane.xlu0 %2524
      %v2526 = vsel %vm2078, %v2378, 0.0
      %2527 = vadd.xlane.f32.xlu0 %v2526
      %v2528 = vpop.xlane.xlu0 %2527
      %v2529 = vsel %vm2078, %v2380, 0.0
      %2530 = vadd.xlane.f32.xlu0 %v2529
      %v2531 = vpop.xlane.xlu0 %2530
      %v2532 = vsel %vm2078, %v2382, 0.0
      %2533 = vadd.xlane.f32.xlu0 %v2532
      %v2534 = vpop.xlane.xlu0 %2533
      %v2535 = vsel %vm2078, %v2384, 0.0
      %2536 = vadd.xlane.f32.xlu0 %v2535
      %v2537 = vpop.xlane.xlu0 %2536
      %v2538 = vsel %vm2078, %v2386, 0.0
      %2539 = vadd.xlane.f32.xlu0 %v2538
      %v2540 = vpop.xlane.xlu0 %2539
      %v2541 = vsel %vm2078, %v2388, 0.0
      %2542 = vadd.xlane.f32.xlu0 %v2541
      %v2543 = vpop.xlane.xlu0 %2542
      %v2544 = vsel %vm2078, %v2390, 0.0
      %2545 = vadd.xlane.f32.xlu0 %v2544
      %v2546 = vpop.xlane.xlu0 %2545
      %v2547 = vsel %vm2078, %v2392, 0.0
      %2548 = vadd.xlane.f32.xlu0 %v2547
      %v2549 = vpop.xlane.xlu0 %2548
      %v2550 = vsel %vm2078, %v2394, 0.0
      %2551 = vadd.xlane.f32.xlu0 %v2550
      %v2552 = vpop.xlane.xlu0 %2551
      %v2553 = vsel %vm2078, %v2396, 0.0
      %2554 = vadd.xlane.f32.xlu0 %v2553
      %v2555 = vpop.xlane.xlu0 %2554
      %v2556 = vsel %vm2078, %v2398, 0.0
      %2557 = vadd.xlane.f32.xlu0 %v2556
      %v2558 = vpop.xlane.xlu0 %2557
      %v2559 = vsel %vm2078, %v2400, 0.0
      %2560 = vadd.xlane.f32.xlu0 %v2559
      %v2561 = vpop.xlane.xlu0 %2560
      %v2562 = vsel %vm2078, %v2402, 0.0
      %2563 = vadd.xlane.f32.xlu0 %v2562
      %v2564 = vpop.xlane.xlu0 %2563
      %v2565 = vsel %vm2078, %v2404, 0.0
      %2566 = vadd.xlane.f32.xlu0 %v2565
      %v2567 = vpop.xlane.xlu0 %2566
      %v2568 = vsel %vm2078, %v2406, 0.0
      %2569 = vadd.xlane.f32.xlu0 %v2568
      %v2570 = vpop.xlane.xlu0 %2569
      %v2571 = vsel %vm2078, %v2408, 0.0
      %2572 = vadd.xlane.f32.xlu0 %v2571
      %v2573 = vpop.xlane.xlu0 %2572
      %v2574 = vsel %vm2078, %v2410, 0.0
      %2575 = vadd.xlane.f32.xlu0 %v2574
      %v2576 = vpop.xlane.xlu0 %2575
      %v2577 = vsel %vm2078, %v2412, 0.0
      %2578 = vadd.xlane.f32.xlu0 %v2577
      %v2579 = vpop.xlane.xlu0 %2578
      %v2580 = vsel %vm2078, %v2414, 0.0
      %2581 = vadd.xlane.f32.xlu0 %v2580
      %v2582 = vpop.xlane.xlu0 %2581
      %v2583 = vsel %vm2078, %v2416, 0.0
      %2584 = vadd.xlane.f32.xlu0 %v2583
      %v2585 = vpop.xlane.xlu0 %2584
      %v2586 = vsel %vm2078, %v2418, 0.0
      %2587 = vadd.xlane.f32.xlu0 %v2586
      %v2588 = vpop.xlane.xlu0 %2587
      %v2589 = vsel %vm2078, %v2420, 0.0
      %2590 = vadd.xlane.f32.xlu0 %v2589
      %v2591 = vpop.xlane.xlu0 %2590
      %v2592 = vsel %vm2078, %v2422, 0.0
      %2593 = vadd.xlane.f32.xlu0 %v2592
      %v2594 = vpop.xlane.xlu0 %2593
      %v2595 = vsel %vm2078, %v2424, 0.0
      %2596 = vadd.xlane.f32.xlu0 %v2595
      %v2597 = vpop.xlane.xlu0 %2596
      %v2598 = vsel %vm2078, %v2426, 0.0
      %2599 = vadd.xlane.f32.xlu0 %v2598
      %v2600 = vpop.xlane.xlu0 %2599
      %v2601 = vsel %vm2078, %v2428, 0.0
      %2602 = vadd.xlane.f32.xlu0 %v2601
      %v2603 = vpop.xlane.xlu0 %2602
      %v2604 = vsel %vm2078, %v2430, 0.0
      %2605 = vadd.xlane.f32.xlu0 %v2604
      %v2606 = vpop.xlane.xlu0 %2605
      %v2607 = vsel %vm2078, %v2432, 0.0
      %2608 = vadd.xlane.f32.xlu0 %v2607
      %v2609 = vpop.xlane.xlu0 %2608
      %v2610 = vsel %vm2078, %v2434, 0.0
      %2611 = vadd.xlane.f32.xlu0 %v2610
      %v2612 = vpop.xlane.xlu0 %2611
      %v2613 = vsel %vm2078, %v2436, 0.0
      %2614 = vadd.xlane.f32.xlu0 %v2613
      %v2615 = vpop.xlane.xlu0 %2614
      %v2616 = vsel %vm2078, %v2438, 0.0
      %2617 = vadd.xlane.f32.xlu0 %v2616
      %v2618 = vpop.xlane.xlu0 %2617
      %v2619 = vsel %vm2078, %v2440, 0.0
      %2620 = vadd.xlane.f32.xlu0 %v2619
      %v2621 = vpop.xlane.xlu0 %2620
      %v2622 = vsel %vm2078, %v2442, 0.0
      %2623 = vadd.xlane.f32.xlu0 %v2622
      %v2624 = vpop.xlane.xlu0 %2623
      %v2625 = vsel %vm2078, %v2444, 0.0
      %2626 = vadd.xlane.f32.xlu0 %v2625
      %v2627 = vpop.xlane.xlu0 %2626
      %v2628 = vsel %vm2078, %v2446, 0.0
      %2629 = vadd.xlane.f32.xlu0 %v2628
      %v2630 = vpop.xlane.xlu0 %2629
      %v2631 = vsel %vm2078, %v2448, 0.0
      %2632 = vadd.xlane.f32.xlu0 %v2631
      %v2633 = vpop.xlane.xlu0 %2632
      %v2634 = vsel %vm2078, %v2450, 0.0
      %2635 = vadd.xlane.f32.xlu0 %v2634
      %v2636 = vpop.xlane.xlu0 %2635
      %v2637 = vsel %vm2078, %v2452, 0.0
      %2638 = vadd.xlane.f32.xlu0 %v2637
      %v2639 = vpop.xlane.xlu0 %2638
      %v2640 = vsel %vm2078, %v2454, 0.0
      %2641 = vadd.xlane.f32.xlu0 %v2640
      %v2642 = vpop.xlane.xlu0 %2641
      %v2643 = vsel %vm2078, %v2456, 0.0
      %2644 = vadd.xlane.f32.xlu0 %v2643
      %v2645 = vpop.xlane.xlu0 %2644
      %v2646 = vsel %vm2078, %v2458, 0.0
      %2647 = vadd.xlane.f32.xlu0 %v2646
      %v2648 = vpop.xlane.xlu0 %2647
      %v2649 = vsel %vm2078, %v2460, 0.0
      %2650 = vadd.xlane.f32.xlu0 %v2649
      %v2651 = vpop.xlane.xlu0 %2650
      %v2652 = vsel %vm2078, %v2462, 0.0
      %2653 = vadd.xlane.f32.xlu0 %v2652
      %v2654 = vpop.xlane.xlu0 %2653
      %v2655 = vrcp.pop %v2465
      %v2656 = vrcp.pop %v2468
      %v2657 = vrcp.pop %v2471
      %v2658 = vrcp.pop %v2474
      %v2659 = vrcp.pop %v2477
      %v2660 = vrcp.pop %v2480
      %v2661 = vrcp.pop %v2483
      %v2662 = vrcp.pop %v2486
      %v2663 = vrcp.pop %v2489
      %v2664 = vrcp.pop %v2492
      %v2665 = vrcp.pop %v2495
      %v2666 = vrcp.pop %v2498
      %v2667 = vrcp.pop %v2501
      %v2668 = vrcp.pop %v2504
      %v2669 = vrcp.pop %v2507
      %v2670 = vrcp.pop %v2510
      %v2671 = vrcp.pop %v2513
      %v2672 = vrcp.pop %v2516
      %v2673 = vrcp.pop %v2519
      %v2674 = vrcp.pop %v2522
      %v2675 = vrcp.pop %v2525
      %v2676 = vrcp.pop %v2528
      %v2677 = vrcp.pop %v2531
      %v2678 = vrcp.pop %v2534
      %v2679 = vrcp.pop %v2537
      %v2680 = vrcp.pop %v2540
      %v2681 = vrcp.pop %v2543
      %v2682 = vrcp.pop %v2546
      %v2683 = vrcp.pop %v2549
      %v2684 = vrcp.pop %v2552
      %v2685 = vrcp.pop %v2555
      %v2686 = vrcp.pop %v2558
      %v2687 = vrcp.pop %v2561
      %v2688 = vrcp.pop %v2564
      %v2689 = vrcp.pop %v2567
      %v2690 = vrcp.pop %v2570
      %v2691 = vrcp.pop %v2573
      %v2692 = vrcp.pop %v2576
      %v2693 = vrcp.pop %v2579
      %v2694 = vrcp.pop %v2582
      %v2695 = vrcp.pop %v2585
      %v2696 = vrcp.pop %v2588
      %v2697 = vrcp.pop %v2591
      %v2698 = vrcp.pop %v2594
      %v2699 = vrcp.pop %v2597
      %v2700 = vrcp.pop %v2600
      %v2701 = vrcp.pop %v2603
      %v2702 = vrcp.pop %v2606
      %v2703 = vrcp.pop %v2609
      %v2704 = vrcp.pop %v2612
      %v2705 = vrcp.pop %v2615
      %v2706 = vrcp.pop %v2618
      %v2707 = vrcp.pop %v2621
      %v2708 = vrcp.pop %v2624
      %v2709 = vrcp.pop %v2627
      %v2710 = vrcp.pop %v2630
      %v2711 = vrcp.pop %v2633
      %v2712 = vrcp.pop %v2636
      %v2713 = vrcp.pop %v2639
      %v2714 = vrcp.pop %v2642
      %v2715 = vrcp.pop %v2645
      %v2716 = vrcp.pop %v2648
      %v2717 = vrcp.pop %v2651
      %v2718 = vrcp.pop %v2654
      %v2719 = vmul.f32 %v2336, %v2655
      %v2720 = vmul.f32 %v2338, %v2656
      %v2721 = vmul.f32 %v2340, %v2657
      %v2722 = vmul.f32 %v2342, %v2658
      %v2723 = vmul.f32 %v2344, %v2659
      %v2724 = vmul.f32 %v2346, %v2660
      %v2725 = vmul.f32 %v2348, %v2661
      %v2726 = vmul.f32 %v2350, %v2662
      %v2727 = vmul.f32 %v2352, %v2663
      %v2728 = vmul.f32 %v2354, %v2664
      %v2729 = vmul.f32 %v2356, %v2665
      %v2730 = vmul.f32 %v2358, %v2666
      %v2731 = vmul.f32 %v2360, %v2667
      %v2732 = vmul.f32 %v2362, %v2668
      %v2733 = vmul.f32 %v2364, %v2669
      %v2734 = vmul.f32 %v2366, %v2670
      %v2735 = vmul.f32 %v2368, %v2671
      %v2736 = vmul.f32 %v2370, %v2672
      %v2737 = vmul.f32 %v2372, %v2673
      %v2738 = vmul.f32 %v2374, %v2674
      %v2739 = vmul.f32 %v2376, %v2675
      %v2740 = vmul.f32 %v2378, %v2676
      %v2741 = vmul.f32 %v2380, %v2677
      %v2742 = vmul.f32 %v2382, %v2678
      %v2743 = vmul.f32 %v2384, %v2679
      %v2744 = vmul.f32 %v2386, %v2680
      %v2745 = vmul.f32 %v2388, %v2681
      %v2746 = vmul.f32 %v2390, %v2682
      %v2747 = vmul.f32 %v2392, %v2683
      %v2748 = vmul.f32 %v2394, %v2684
      %v2749 = vmul.f32 %v2396, %v2685
      %v2750 = vmul.f32 %v2398, %v2686
      %v2751 = vmul.f32 %v2400, %v2687
      %v2752 = vmul.f32 %v2402, %v2688
      %v2753 = vmul.f32 %v2404, %v2689
      %v2754 = vmul.f32 %v2406, %v2690
      %v2755 = vmul.f32 %v2408, %v2691
      %v2756 = vmul.f32 %v2410, %v2692
      %v2757 = vmul.f32 %v2412, %v2693
      %v2758 = vmul.f32 %v2414, %v2694
      %v2759 = vmul.f32 %v2416, %v2695
      %v2760 = vmul.f32 %v2418, %v2696
      %v2761 = vmul.f32 %v2420, %v2697
      %v2762 = vmul.f32 %v2422, %v2698
      %v2763 = vmul.f32 %v2424, %v2699
      %v2764 = vmul.f32 %v2426, %v2700
      %v2765 = vmul.f32 %v2428, %v2701
      %v2766 = vmul.f32 %v2430, %v2702
      %v2767 = vmul.f32 %v2432, %v2703
      %v2768 = vmul.f32 %v2434, %v2704
      %v2769 = vmul.f32 %v2436, %v2705
      %v2770 = vmul.f32 %v2438, %v2706
      %v2771 = vmul.f32 %v2440, %v2707
      %v2772 = vmul.f32 %v2442, %v2708
      %v2773 = vmul.f32 %v2444, %v2709
      %v2774 = vmul.f32 %v2446, %v2710
      %v2775 = vmul.f32 %v2448, %v2711
      %v2776 = vmul.f32 %v2450, %v2712
      %v2777 = vmul.f32 %v2452, %v2713
      %v2778 = vmul.f32 %v2454, %v2714
      %v2779 = vmul.f32 %v2456, %v2715
      %v2780 = vmul.f32 %v2458, %v2716
      %v2781 = vmul.f32 %v2460, %v2717
      %v2782 = vmul.f32 %v2462, %v2718
      %v2783 = vpack.c.bf16 %v2720, %v2719
      %v2784 = vpack.c.bf16 %v2722, %v2721
      %v2785 = vpack.c.bf16 %v2724, %v2723
      %v2786 = vpack.c.bf16 %v2726, %v2725
      %v2787 = vpack.c.bf16 %v2728, %v2727
      %v2788 = vpack.c.bf16 %v2730, %v2729
      %v2789 = vpack.c.bf16 %v2732, %v2731
      %v2790 = vpack.c.bf16 %v2734, %v2733
      %v2791 = vpack.c.bf16 %v2736, %v2735
      %v2792 = vpack.c.bf16 %v2738, %v2737
      %v2793 = vpack.c.bf16 %v2740, %v2739
      %v2794 = vpack.c.bf16 %v2742, %v2741
      %v2795 = vpack.c.bf16 %v2744, %v2743
      %v2796 = vpack.c.bf16 %v2746, %v2745
      %v2797 = vpack.c.bf16 %v2748, %v2747
      %v2798 = vpack.c.bf16 %v2750, %v2749
      %v2799 = vpack.c.bf16 %v2752, %v2751
      %v2800 = vpack.c.bf16 %v2754, %v2753
      %v2801 = vpack.c.bf16 %v2756, %v2755
      %v2802 = vpack.c.bf16 %v2758, %v2757
      %v2803 = vpack.c.bf16 %v2760, %v2759
      %v2804 = vpack.c.bf16 %v2762, %v2761
      %v2805 = vpack.c.bf16 %v2764, %v2763
      %v2806 = vpack.c.bf16 %v2766, %v2765
      %v2807 = vpack.c.bf16 %v2768, %v2767
      %v2808 = vpack.c.bf16 %v2770, %v2769
      %v2809 = vpack.c.bf16 %v2772, %v2771
      %v2810 = vpack.c.bf16 %v2774, %v2773
      %v2811 = vpack.c.bf16 %v2776, %v2775
      %v2812 = vpack.c.bf16 %v2778, %v2777
      %v2813 = vpack.c.bf16 %v2780, %v2779
      %v2814 = vpack.c.bf16 %v2782, %v2781
      %v2816 = vsel %vm2078, %v2783, 0
      %v2819 = vsel %vm2078, %v2784, 0
      %v2822 = vsel %vm2078, %v2785, 0
      %v2825 = vsel %vm2078, %v2786, 0
      %v2828 = vsel %vm2078, %v2787, 0
      %v2831 = vsel %vm2078, %v2788, 0
      %v2834 = vsel %vm2078, %v2789, 0
      %v2837 = vsel %vm2078, %v2790, 0
      %v2840 = vsel %vm2078, %v2791, 0
      %v2843 = vsel %vm2078, %v2792, 0
      %v2846 = vsel %vm2078, %v2793, 0
      %v2849 = vsel %vm2078, %v2794, 0
      %v2852 = vsel %vm2078, %v2795, 0
      %v2855 = vsel %vm2078, %v2796, 0
      %v2858 = vsel %vm2078, %v2797, 0
      %v2861 = vsel %vm2078, %v2798, 0
      %v2864 = vsel %vm2078, %v2799, 0
      %v2867 = vsel %vm2078, %v2800, 0
      %v2870 = vsel %vm2078, %v2801, 0
      %v2873 = vsel %vm2078, %v2802, 0
      %v2876 = vsel %vm2078, %v2803, 0
      %v2879 = vsel %vm2078, %v2804, 0
      %v2882 = vsel %vm2078, %v2805, 0
      %v2885 = vsel %vm2078, %v2806, 0
      %v2888 = vsel %vm2078, %v2807, 0
      %v2891 = vsel %vm2078, %v2808, 0
      %v2894 = vsel %vm2078, %v2809, 0
      %v2897 = vsel %vm2078, %v2810, 0
      %v2900 = vsel %vm2078, %v2811, 0
      %v2903 = vsel %vm2078, %v2812, 0
      %v2906 = vsel %vm2078, %v2813, 0
      %v2909 = vsel %vm2078, %v2814, 0
      %2911 = vmatprep.subr.bf16.mxu0 0
      %2912 = vmatpush1.bf16.msra.mxu0 0
      %2913 = vmatprep.subr.bf16.mxu0 0
      %2914 = vmatpush1.bf16.msra.mxu0 0
      %2915 = vmatprep.subr.bf16.mxu0 0
      %2916 = vmatpush1.bf16.msra.mxu0 0
      %2917 = vmatprep.subr.bf16.mxu0 0
      %2918 = vmatpush1.bf16.msra.mxu0 0
      %2919 = vmatprep.subr.bf16.mxu0 0
      %2920 = vmatpush1.bf16.msra.mxu0 %v1592
      %2921 = vmatprep.subr.bf16.mxu0 0
      %2922 = vmatpush1.bf16.msra.mxu0 %v1589
      %2923 = vmatprep.subr.bf16.mxu0 0
      %2924 = vmatpush1.bf16.msra.mxu0 %v1586
      %2925 = vmatprep.subr.bf16.mxu0 0
      %2926 = vmatpush1.bf16.msra.mxu0 %v1583
      %2927 = vmatprep.subr.bf16.mxu0 0
      %2928 = vmatpush2.bf16.msra.mxu0 0
      %2929 = vmatprep.subr.bf16.mxu0 0
      %2930 = vmatpush2.bf16.msra.mxu0 0
      %2931 = vmatprep.subr.bf16.mxu0 0
      %2932 = vmatpush2.bf16.msra.mxu0 0
      %2933 = vmatprep.subr.bf16.mxu0 0
      %2934 = vmatpush2.bf16.msra.mxu0 0
      %2935 = vmatprep.subr.bf16.mxu0 0
      %2936 = vmatpush2.bf16.msra.mxu0 0
      %2937 = vmatprep.subr.bf16.mxu0 0
      %2938 = vmatpush2.bf16.msra.mxu0 0
      %2939 = vmatprep.subr.bf16.mxu0 0
      %2940 = vmatpush2.bf16.msra.mxu0 0
      %2941 = vmatprep.subr.bf16.mxu0 0
      %2942 = vmatpush2.bf16.msra.mxu0 0
      %2943 = vmatprep.mubr.bf16.mxu0 0
      %2944 = vmatmul.mubr.bf16.gmra.mxu0 %v2816
      %v2945 = vpop.f32.mrf.mxu0
      %v2946 = vadd.f32 0.0, %v2945
      %v2947 = vpop.f32.mrf.mxu0
      %v2948 = vpop.f32.mrf.mxu0
      %v2949 = vadd.f32 0.0, %v2948
      %v2950 = vpop.f32.mrf.mxu0
      %2951 = vmatprep.mubr.bf16.mxu0 0
      %2952 = vmatmul.mubr.bf16.gmra.mxu0 %v2819
      %v2953 = vpop.f32.mrf.mxu0
      %v2954 = vadd.f32 0.0, %v2953
      %v2955 = vpop.f32.mrf.mxu0
      %v2956 = vpop.f32.mrf.mxu0
      %v2957 = vadd.f32 0.0, %v2956
      %v2958 = vpop.f32.mrf.mxu0
      %2959 = vmatprep.mubr.bf16.mxu0 0
      %2960 = vmatmul.mubr.bf16.gmra.mxu0 %v2822
      %v2961 = vpop.f32.mrf.mxu0
      %v2962 = vadd.f32 0.0, %v2961
      %v2963 = vpop.f32.mrf.mxu0
      %v2964 = vpop.f32.mrf.mxu0
      %v2965 = vadd.f32 0.0, %v2964
      %v2966 = vpop.f32.mrf.mxu0
      %2967 = vmatprep.mubr.bf16.mxu0 0
      %2968 = vmatmul.mubr.bf16.gmra.mxu0 %v2825
      %v2969 = vpop.f32.mrf.mxu0
      %v2970 = vadd.f32 0.0, %v2969
      %v2971 = vpop.f32.mrf.mxu0
      %v2972 = vpop.f32.mrf.mxu0
      %v2973 = vadd.f32 0.0, %v2972
      %v2974 = vpop.f32.mrf.mxu0
      %2975 = vmatprep.mubr.bf16.mxu0 0
      %2976 = vmatmul.mubr.bf16.gmra.mxu0 %v2828
      %v2977 = vpop.f32.mrf.mxu0
      %v2978 = vadd.f32 0.0, %v2977
      %v2979 = vpop.f32.mrf.mxu0
      %v2980 = vpop.f32.mrf.mxu0
      %v2981 = vadd.f32 0.0, %v2980
      %v2982 = vpop.f32.mrf.mxu0
      %2983 = vmatprep.mubr.bf16.mxu0 0
      %2984 = vmatmul.mubr.bf16.gmra.mxu0 %v2831
      %v2985 = vpop.f32.mrf.mxu0
      %v2986 = vadd.f32 0.0, %v2985
      %v2987 = vpop.f32.mrf.mxu0
      %v2988 = vpop.f32.mrf.mxu0
      %v2989 = vadd.f32 0.0, %v2988
      %v2990 = vpop.f32.mrf.mxu0
      %2991 = vmatprep.mubr.bf16.mxu0 0
      %2992 = vmatmul.mubr.bf16.gmra.mxu0 %v2834
      %v2993 = vpop.f32.mrf.mxu0
      %v2994 = vadd.f32 0.0, %v2993
      %v2995 = vpop.f32.mrf.mxu0
      %v2996 = vpop.f32.mrf.mxu0
      %v2997 = vadd.f32 0.0, %v2996
      %v2998 = vpop.f32.mrf.mxu0
      %2999 = vmatprep.mubr.bf16.mxu0 0
      %3000 = vmatmul.mubr.bf16.gmra.mxu0 %v2837
      %v3001 = vpop.f32.mrf.mxu0
      %v3002 = vadd.f32 0.0, %v3001
      %v3003 = vpop.f32.mrf.mxu0
      %v3004 = vpop.f32.mrf.mxu0
      %v3005 = vadd.f32 0.0, %v3004
      %v3006 = vpop.f32.mrf.mxu0
      %3007 = vmatprep.mubr.bf16.mxu0 0
      %3008 = vmatmul.mubr.bf16.gmra.mxu0 %v2840
      %v3009 = vpop.f32.mrf.mxu0
      %v3010 = vadd.f32 0.0, %v3009
      %v3011 = vpop.f32.mrf.mxu0
      %v3012 = vpop.f32.mrf.mxu0
      %v3013 = vadd.f32 0.0, %v3012
      %v3014 = vpop.f32.mrf.mxu0
      %3015 = vmatprep.mubr.bf16.mxu0 0
      %3016 = vmatmul.mubr.bf16.gmra.mxu0 %v2843
      %v3017 = vpop.f32.mrf.mxu0
      %v3018 = vadd.f32 0.0, %v3017
      %v3019 = vpop.f32.mrf.mxu0
      %v3020 = vpop.f32.mrf.mxu0
      %v3021 = vadd.f32 0.0, %v3020
      %v3022 = vpop.f32.mrf.mxu0
      %3023 = vmatprep.mubr.bf16.mxu0 0
      %3024 = vmatmul.mubr.bf16.gmra.mxu0 %v2846
      %v3025 = vpop.f32.mrf.mxu0
      %v3026 = vadd.f32 0.0, %v3025
      %v3027 = vpop.f32.mrf.mxu0
      %v3028 = vpop.f32.mrf.mxu0
      %v3029 = vadd.f32 0.0, %v3028
      %v3030 = vpop.f32.mrf.mxu0
      %3031 = vmatprep.mubr.bf16.mxu0 0
      %3032 = vmatmul.mubr.bf16.gmra.mxu0 %v2849
      %v3033 = vpop.f32.mrf.mxu0
      %v3034 = vadd.f32 0.0, %v3033
      %v3035 = vpop.f32.mrf.mxu0
      %v3036 = vpop.f32.mrf.mxu0
      %v3037 = vadd.f32 0.0, %v3036
      %v3038 = vpop.f32.mrf.mxu0
      %3039 = vmatprep.mubr.bf16.mxu0 0
      %3040 = vmatmul.mubr.bf16.gmra.mxu0 %v2852
      %v3041 = vpop.f32.mrf.mxu0
      %v3042 = vadd.f32 0.0, %v3041
      %v3043 = vpop.f32.mrf.mxu0
      %v3044 = vpop.f32.mrf.mxu0
      %v3045 = vadd.f32 0.0, %v3044
      %v3046 = vpop.f32.mrf.mxu0
      %3047 = vmatprep.mubr.bf16.mxu0 0
      %3048 = vmatmul.mubr.bf16.gmra.mxu0 %v2855
      %v3049 = vpop.f32.mrf.mxu0
      %v3050 = vadd.f32 0.0, %v3049
      %v3051 = vpop.f32.mrf.mxu0
      %v3052 = vpop.f32.mrf.mxu0
      %v3053 = vadd.f32 0.0, %v3052
      %v3054 = vpop.f32.mrf.mxu0
      %3055 = vmatprep.mubr.bf16.mxu0 0
      %3056 = vmatmul.mubr.bf16.gmra.mxu0 %v2858
      %v3057 = vpop.f32.mrf.mxu0
      %v3058 = vadd.f32 0.0, %v3057
      %v3059 = vpop.f32.mrf.mxu0
      %v3060 = vpop.f32.mrf.mxu0
      %v3061 = vadd.f32 0.0, %v3060
      %v3062 = vpop.f32.mrf.mxu0
      %3063 = vmatprep.mubr.bf16.mxu0 0
      %3064 = vmatmul.mubr.bf16.gmra.mxu0 %v2861
      %v3065 = vpop.f32.mrf.mxu0
      %v3066 = vadd.f32 0.0, %v3065
      %v3067 = vpop.f32.mrf.mxu0
      %v3068 = vpop.f32.mrf.mxu0
      %v3069 = vadd.f32 0.0, %v3068
      %v3070 = vpop.f32.mrf.mxu0
      %3071 = vmatprep.mubr.bf16.mxu0 0
      %3072 = vmatmul.mubr.bf16.gmra.mxu0 %v2864
      %v3073 = vpop.f32.mrf.mxu0
      %v3074 = vadd.f32 0.0, %v3073
      %v3075 = vpop.f32.mrf.mxu0
      %v3076 = vpop.f32.mrf.mxu0
      %v3077 = vadd.f32 0.0, %v3076
      %v3078 = vpop.f32.mrf.mxu0
      %3079 = vmatprep.mubr.bf16.mxu0 0
      %3080 = vmatmul.mubr.bf16.gmra.mxu0 %v2867
      %v3081 = vpop.f32.mrf.mxu0
      %v3082 = vadd.f32 0.0, %v3081
      %v3083 = vpop.f32.mrf.mxu0
      %v3084 = vpop.f32.mrf.mxu0
      %v3085 = vadd.f32 0.0, %v3084
      %v3086 = vpop.f32.mrf.mxu0
      %3087 = vmatprep.mubr.bf16.mxu0 0
      %3088 = vmatmul.mubr.bf16.gmra.mxu0 %v2870
      %v3089 = vpop.f32.mrf.mxu0
      %v3090 = vadd.f32 0.0, %v3089
      %v3091 = vpop.f32.mrf.mxu0
      %v3092 = vpop.f32.mrf.mxu0
      %v3093 = vadd.f32 0.0, %v3092
      %v3094 = vpop.f32.mrf.mxu0
      %3095 = vmatprep.mubr.bf16.mxu0 0
      %3096 = vmatmul.mubr.bf16.gmra.mxu0 %v2873
      %v3097 = vpop.f32.mrf.mxu0
      %v3098 = vadd.f32 0.0, %v3097
      %v3099 = vpop.f32.mrf.mxu0
      %v3100 = vpop.f32.mrf.mxu0
      %v3101 = vadd.f32 0.0, %v3100
      %v3102 = vpop.f32.mrf.mxu0
      %3103 = vmatprep.mubr.bf16.mxu0 0
      %3104 = vmatmul.mubr.bf16.gmra.mxu0 %v2876
      %v3105 = vpop.f32.mrf.mxu0
      %v3106 = vadd.f32 0.0, %v3105
      %v3107 = vpop.f32.mrf.mxu0
      %v3108 = vpop.f32.mrf.mxu0
      %v3109 = vadd.f32 0.0, %v3108
      %v3110 = vpop.f32.mrf.mxu0
      %3111 = vmatprep.mubr.bf16.mxu0 0
      %3112 = vmatmul.mubr.bf16.gmra.mxu0 %v2879
      %v3113 = vpop.f32.mrf.mxu0
      %v3114 = vadd.f32 0.0, %v3113
      %v3115 = vpop.f32.mrf.mxu0
      %v3116 = vpop.f32.mrf.mxu0
      %v3117 = vadd.f32 0.0, %v3116
      %v3118 = vpop.f32.mrf.mxu0
      %3119 = vmatprep.mubr.bf16.mxu0 0
      %3120 = vmatmul.mubr.bf16.gmra.mxu0 %v2882
      %v3121 = vpop.f32.mrf.mxu0
      %v3122 = vadd.f32 0.0, %v3121
      %v3123 = vpop.f32.mrf.mxu0
      %v3124 = vpop.f32.mrf.mxu0
      %v3125 = vadd.f32 0.0, %v3124
      %v3126 = vpop.f32.mrf.mxu0
      %3127 = vmatprep.mubr.bf16.mxu0 0
      %3128 = vmatmul.mubr.bf16.gmra.mxu0 %v2885
      %v3129 = vpop.f32.mrf.mxu0
      %v3130 = vadd.f32 0.0, %v3129
      %v3131 = vpop.f32.mrf.mxu0
      %v3132 = vpop.f32.mrf.mxu0
      %v3133 = vadd.f32 0.0, %v3132
      %v3134 = vpop.f32.mrf.mxu0
      %3135 = vmatprep.mubr.bf16.mxu0 0
      %3136 = vmatmul.mubr.bf16.gmra.mxu0 %v2888
      %v3137 = vpop.f32.mrf.mxu0
      %v3138 = vadd.f32 0.0, %v3137
      %v3139 = vpop.f32.mrf.mxu0
      %v3140 = vpop.f32.mrf.mxu0
      %v3141 = vadd.f32 0.0, %v3140
      %v3142 = vpop.f32.mrf.mxu0
      %3143 = vmatprep.mubr.bf16.mxu0 0
      %3144 = vmatmul.mubr.bf16.gmra.mxu0 %v2891
      %v3145 = vpop.f32.mrf.mxu0
      %v3146 = vadd.f32 0.0, %v3145
      %v3147 = vpop.f32.mrf.mxu0
      %v3148 = vpop.f32.mrf.mxu0
      %v3149 = vadd.f32 0.0, %v3148
      %v3150 = vpop.f32.mrf.mxu0
      %3151 = vmatprep.mubr.bf16.mxu0 0
      %3152 = vmatmul.mubr.bf16.gmra.mxu0 %v2894
      %v3153 = vpop.f32.mrf.mxu0
      %v3154 = vadd.f32 0.0, %v3153
      %v3155 = vpop.f32.mrf.mxu0
      %v3156 = vpop.f32.mrf.mxu0
      %v3157 = vadd.f32 0.0, %v3156
      %v3158 = vpop.f32.mrf.mxu0
      %3159 = vmatprep.mubr.bf16.mxu0 0
      %3160 = vmatmul.mubr.bf16.gmra.mxu0 %v2897
      %v3161 = vpop.f32.mrf.mxu0
      %v3162 = vadd.f32 0.0, %v3161
      %v3163 = vpop.f32.mrf.mxu0
      %v3164 = vpop.f32.mrf.mxu0
      %v3165 = vadd.f32 0.0, %v3164
      %v3166 = vpop.f32.mrf.mxu0
      %3167 = vmatprep.mubr.bf16.mxu0 0
      %3168 = vmatmul.mubr.bf16.gmra.mxu0 %v2900
      %v3169 = vpop.f32.mrf.mxu0
      %v3170 = vadd.f32 0.0, %v3169
      %v3171 = vpop.f32.mrf.mxu0
      %v3172 = vpop.f32.mrf.mxu0
      %v3173 = vadd.f32 0.0, %v3172
      %v3174 = vpop.f32.mrf.mxu0
      %3175 = vmatprep.mubr.bf16.mxu0 0
      %3176 = vmatmul.mubr.bf16.gmra.mxu0 %v2903
      %v3177 = vpop.f32.mrf.mxu0
      %v3178 = vadd.f32 0.0, %v3177
      %v3179 = vpop.f32.mrf.mxu0
      %v3180 = vpop.f32.mrf.mxu0
      %v3181 = vadd.f32 0.0, %v3180
      %v3182 = vpop.f32.mrf.mxu0
      %3183 = vmatprep.mubr.bf16.mxu0 0
      %3184 = vmatmul.mubr.bf16.gmra.mxu0 %v2906
      %v3185 = vpop.f32.mrf.mxu0
      %v3186 = vadd.f32 0.0, %v3185
      %v3187 = vpop.f32.mrf.mxu0
      %v3188 = vpop.f32.mrf.mxu0
      %v3189 = vadd.f32 0.0, %v3188
      %v3190 = vpop.f32.mrf.mxu0
      %3191 = vmatprep.mubr.bf16.mxu0 0
      %3192 = vmatmul.mubr.bf16.gmra.mxu0 %v2909
      %v3193 = vpop.f32.mrf.mxu0
      %v3194 = vadd.f32 0.0, %v3193
      %v3195 = vpop.f32.mrf.mxu0
      %v3196 = vpop.f32.mrf.mxu0
      %v3197 = vadd.f32 0.0, %v3196
      %v3198 = vpop.f32.mrf.mxu0
      %3199 = vdwg.mxu0
      %v3200 = vmul.f32 %v2946, %v1597
      %v3201 = vmul.f32 %v2949, %v1598
      %v3202 = vmul.f32 %v2954, %v1599
      %v3203 = vmul.f32 %v2957, %v1600
      %v3204 = vmul.f32 %v2962, %v1601
      %v3205 = vmul.f32 %v2965, %v1602
      %v3206 = vmul.f32 %v2970, %v1603
      %v3207 = vmul.f32 %v2973, %v1604
      %v3208 = vmul.f32 %v2978, %v1605
      %v3209 = vmul.f32 %v2981, %v1606
      %v3210 = vmul.f32 %v2986, %v1607
      %v3211 = vmul.f32 %v2989, %v1608
      %v3212 = vmul.f32 %v2994, %v1609
      %v3213 = vmul.f32 %v2997, %v1610
      %v3214 = vmul.f32 %v3002, %v1611
      %v3215 = vmul.f32 %v3005, %v1612
      %v3216 = vmul.f32 %v3010, %v1613
      %v3217 = vmul.f32 %v3013, %v1614
      %v3218 = vmul.f32 %v3018, %v1615
      %v3219 = vmul.f32 %v3021, %v1616
      %v3220 = vmul.f32 %v3026, %v1617
      %v3221 = vmul.f32 %v3029, %v1618
      %v3222 = vmul.f32 %v3034, %v1619
      %v3223 = vmul.f32 %v3037, %v1620
      %v3224 = vmul.f32 %v3042, %v1621
      %v3225 = vmul.f32 %v3045, %v1622
      %v3226 = vmul.f32 %v3050, %v1623
      %v3227 = vmul.f32 %v3053, %v1624
      %v3228 = vmul.f32 %v3058, %v1625
      %v3229 = vmul.f32 %v3061, %v1626
      %v3230 = vmul.f32 %v3066, %v1627
      %v3231 = vmul.f32 %v3069, %v1628
      %v3232 = vmul.f32 %v3074, %v1629
      %v3233 = vmul.f32 %v3077, %v1630
      %v3234 = vmul.f32 %v3082, %v1631
      %v3235 = vmul.f32 %v3085, %v1632
      %v3236 = vmul.f32 %v3090, %v1633
      %v3237 = vmul.f32 %v3093, %v1634
      %v3238 = vmul.f32 %v3098, %v1635
      %v3239 = vmul.f32 %v3101, %v1636
      %v3240 = vmul.f32 %v3106, %v1637
      %v3241 = vmul.f32 %v3109, %v1638
      %v3242 = vmul.f32 %v3114, %v1639
      %v3243 = vmul.f32 %v3117, %v1640
      %v3244 = vmul.f32 %v3122, %v1641
      %v3245 = vmul.f32 %v3125, %v1642
      %v3246 = vmul.f32 %v3130, %v1643
      %v3247 = vmul.f32 %v3133, %v1644
      %v3248 = vmul.f32 %v3138, %v1645
      %v3249 = vmul.f32 %v3141, %v1646
      %v3250 = vmul.f32 %v3146, %v1647
      %v3251 = vmul.f32 %v3149, %v1648
      %v3252 = vmul.f32 %v3154, %v1649
      %v3253 = vmul.f32 %v3157, %v1650
      %v3254 = vmul.f32 %v3162, %v1651
      %v3255 = vmul.f32 %v3165, %v1652
      %v3256 = vmul.f32 %v3170, %v1653
      %v3257 = vmul.f32 %v3173, %v1654
      %v3258 = vmul.f32 %v3178, %v1655
      %v3259 = vmul.f32 %v3181, %v1656
      %v3260 = vmul.f32 %v3186, %v1657
      %v3261 = vmul.f32 %v3189, %v1658
      %v3262 = vmul.f32 %v3194, %v1659
      %v3263 = vmul.f32 %v3197, %v1660
      %v3264 = vadd.f32 %v3200, %v3208
      %v3265 = vadd.f32 %v3201, %v3209
      %v3266 = vadd.f32 %v3202, %v3210
      %v3267 = vadd.f32 %v3203, %v3211
      %v3268 = vadd.f32 %v3204, %v3212
      %v3269 = vadd.f32 %v3205, %v3213
      %v3270 = vadd.f32 %v3206, %v3214
      %v3271 = vadd.f32 %v3207, %v3215
      %v3272 = vadd.f32 %v3264, %v3216
      %v3273 = vadd.f32 %v3265, %v3217
      %v3274 = vadd.f32 %v3266, %v3218
      %v3275 = vadd.f32 %v3267, %v3219
      %v3276 = vadd.f32 %v3268, %v3220
      %v3277 = vadd.f32 %v3269, %v3221
      %v3278 = vadd.f32 %v3270, %v3222
      %v3279 = vadd.f32 %v3271, %v3223
      %v3280 = vadd.f32 %v3272, %v3224
      %v3281 = vadd.f32 %v3273, %v3225
      %v3282 = vadd.f32 %v3274, %v3226
      %v3283 = vadd.f32 %v3275, %v3227
      %v3284 = vadd.f32 %v3276, %v3228
      %v3285 = vadd.f32 %v3277, %v3229
      %v3286 = vadd.f32 %v3278, %v3230
      %v3287 = vadd.f32 %v3279, %v3231
      %v3288 = vadd.f32 %v3280, %v3232
      %v3289 = vadd.f32 %v3281, %v3233
      %v3290 = vadd.f32 %v3282, %v3234
      %v3291 = vadd.f32 %v3283, %v3235
      %v3292 = vadd.f32 %v3284, %v3236
      %v3293 = vadd.f32 %v3285, %v3237
      %v3294 = vadd.f32 %v3286, %v3238
      %v3295 = vadd.f32 %v3287, %v3239
      %v3296 = vadd.f32 %v3288, %v3240
      %v3297 = vadd.f32 %v3289, %v3241
      %v3298 = vadd.f32 %v3290, %v3242
      %v3299 = vadd.f32 %v3291, %v3243
      %v3300 = vadd.f32 %v3292, %v3244
      %v3301 = vadd.f32 %v3293, %v3245
      %v3302 = vadd.f32 %v3294, %v3246
      %v3303 = vadd.f32 %v3295, %v3247
      %v3304 = vadd.f32 %v3296, %v3248
      %v3305 = vadd.f32 %v3297, %v3249
      %v3306 = vadd.f32 %v3298, %v3250
      %v3307 = vadd.f32 %v3299, %v3251
      %v3308 = vadd.f32 %v3300, %v3252
      %v3309 = vadd.f32 %v3301, %v3253
      %v3310 = vadd.f32 %v3302, %v3254
      %v3311 = vadd.f32 %v3303, %v3255
      %v3312 = vadd.f32 %v3304, %v3256
      %v3313 = vadd.f32 %v3305, %v3257
      %v3314 = vadd.f32 %v3306, %v3258
      %v3315 = vadd.f32 %v3307, %v3259
      %v3316 = vadd.f32 %v3308, %v3260
      %v3317 = vadd.f32 %v3309, %v3261
      %v3318 = vadd.f32 %v3310, %v3262
      %v3319 = vadd.f32 %v3311, %v3263
      %v3320 = vpack.c.bf16 %v3313, %v3312
      %v3321 = vpack.c.bf16 %v3315, %v3314
      %v3322 = vpack.c.bf16 %v3317, %v3316
      %v3323 = vpack.c.bf16 %v3319, %v3318
      %v3324 = vld [vmem:[%s841] sm:$0xf]
      %v3325 = vld [vmem:[%s841 + $0x4] sm:$0xf]
      %v3326 = vld [vmem:[%s841 + $0x8] sm:$0xf]
      %v3327 = vld [vmem:[%s841 + $0xc] sm:$0xf]
      %v3328 = vld [vmem:[%s841 + $0x10] sm:$0xf]
      %v3329 = vld [vmem:[%s841 + $0x14] sm:$0xf]
      %v3330 = vld [vmem:[%s841 + $0x18] sm:$0xf]
      %v3331 = vld [vmem:[%s841 + $0x1c] sm:$0xf]
      %v3332 = vld [vmem:[%s841 + $0x20] sm:$0xf]
      %v3333 = vld [vmem:[%s841 + $0x24] sm:$0xf]
      %v3334 = vld [vmem:[%s841 + $0x28] sm:$0xf]
      %v3335 = vld [vmem:[%s841 + $0x2c] sm:$0xf]
      %v3336 = vld [vmem:[%s841 + $0x30] sm:$0xf]
      %v3337 = vld [vmem:[%s841 + $0x34] sm:$0xf]
      %v3338 = vld [vmem:[%s841 + $0x38] sm:$0xf]
      %v3339 = vld [vmem:[%s841 + $0x3c] sm:$0xf]
      %v3340 = vld [vmem:[%s844] sm:$0x1]
      %v3342 = vlaneseq
      %v3343 = vshrl.u32 %v3342, 7
      %v3344 = vsub.s32 0, %v3343
      %v3345 = vrot.slane %v3340, %v3344
      %v3363 = vunpack.c.l.b16 %v3324
      %v3364 = vunpack.c.l.b16 %v3325
      %v3365 = vunpack.c.l.b16 %v3326
      %v3366 = vunpack.c.l.b16 %v3327
      %v3367 = vunpack.c.l.b16 %v3328
      %v3368 = vunpack.c.l.b16 %v3329
      %v3369 = vunpack.c.l.b16 %v3330
      %v3370 = vunpack.c.l.b16 %v3331
      %v3371 = vunpack.c.l.b16 %v3332
      %v3372 = vunpack.c.l.b16 %v3333
      %v3373 = vunpack.c.l.b16 %v3334
      %v3374 = vunpack.c.l.b16 %v3335
      %v3375 = vunpack.c.l.b16 %v3336
      %v3376 = vunpack.c.l.b16 %v3337
      %v3377 = vunpack.c.l.b16 %v3338
      %v3378 = vunpack.c.l.b16 %v3339
      %v3379 = vpack.c.b16 %v3364, %v3363
      %v3380 = vpack.c.b16 %v3366, %v3365
      %v3381 = vpack.c.b16 %v3368, %v3367
      %v3382 = vpack.c.b16 %v3370, %v3369
      %v3383 = vpack.c.b16 %v3372, %v3371
      %v3384 = vpack.c.b16 %v3374, %v3373
      %v3385 = vpack.c.b16 %v3376, %v3375
      %v3386 = vpack.c.b16 %v3378, %v3377
      %3395 = vmatprep.subr.bf16.mxu0 0
      %3396 = vmatpush1.bf16.msra.mxu0 %v3386
      %3397 = vmatprep.subr.bf16.mxu0 0
      %3398 = vmatpush1.bf16.msra.mxu0 %v3385
      %3399 = vmatprep.subr.bf16.mxu0 0
      %3400 = vmatpush1.bf16.msra.mxu0 %v3384
      %3401 = vmatprep.subr.bf16.mxu0 0
      %3402 = vmatpush1.bf16.msra.mxu0 %v3383
      %3403 = vmatprep.subr.bf16.mxu0 0
      %3404 = vmatpush1.bf16.msra.mxu0 %v3382
      %3405 = vmatprep.subr.bf16.mxu0 0
      %3406 = vmatpush1.bf16.msra.mxu0 %v3381
      %3407 = vmatprep.subr.bf16.mxu0 0
      %3408 = vmatpush1.bf16.msra.mxu0 %v3380
      %3409 = vmatprep.subr.bf16.mxu0 0
      %3410 = vmatpush1.bf16.msra.mxu0 %v3379
      %3411 = vmatprep.subr.bf16.mxu0 0
      %3412 = vmatpush2.bf16.msra.mxu0 0
      %3413 = vmatprep.subr.bf16.mxu0 0
      %3414 = vmatpush2.bf16.msra.mxu0 0
      %3415 = vmatprep.subr.bf16.mxu0 0
      %3416 = vmatpush2.bf16.msra.mxu0 0
      %3417 = vmatprep.subr.bf16.mxu0 0
      %3418 = vmatpush2.bf16.msra.mxu0 0
      %3419 = vmatprep.subr.bf16.mxu0 0
      %3420 = vmatpush2.bf16.msra.mxu0 0
      %3421 = vmatprep.subr.bf16.mxu0 0
      %3422 = vmatpush2.bf16.msra.mxu0 0
      %3423 = vmatprep.subr.bf16.mxu0 0
      %3424 = vmatpush2.bf16.msra.mxu0 0
      %3425 = vmatprep.subr.bf16.mxu0 0
      %3426 = vmatpush2.bf16.msra.mxu0 0
      %3427 = vmatprep.mubr.bf16.mxu0 0
      %3428 = vmatmul.mubr.bf16.gmra.mxu0 %v3320
      %v3429 = vpop.f32.mrf.mxu0
      %v3430 = vadd.f32 %v3345, %v3429
      %v3431 = vpop.f32.mrf.mxu0
      %v3432 = vpop.f32.mrf.mxu0
      %v3433 = vadd.f32 %v3345, %v3432
      %v3434 = vpop.f32.mrf.mxu0
      %3435 = vmatprep.mubr.bf16.mxu0 0
      %3436 = vmatmul.mubr.bf16.gmra.mxu0 %v3321
      %v3437 = vpop.f32.mrf.mxu0
      %v3438 = vadd.f32 %v3345, %v3437
      %v3439 = vpop.f32.mrf.mxu0
      %v3440 = vpop.f32.mrf.mxu0
      %v3441 = vadd.f32 %v3345, %v3440
      %v3442 = vpop.f32.mrf.mxu0
      %3443 = vmatprep.mubr.bf16.mxu0 0
      %3444 = vmatmul.mubr.bf16.gmra.mxu0 %v3322
      %v3445 = vpop.f32.mrf.mxu0
      %v3446 = vadd.f32 %v3345, %v3445
      %v3447 = vpop.f32.mrf.mxu0
      %v3448 = vpop.f32.mrf.mxu0
      %v3449 = vadd.f32 %v3345, %v3448
      %v3450 = vpop.f32.mrf.mxu0
      %3451 = vmatprep.mubr.bf16.mxu0 0
      %3452 = vmatmul.mubr.bf16.gmra.mxu0 %v3323
      %v3453 = vpop.f32.mrf.mxu0
      %v3454 = vadd.f32 %v3345, %v3453
      %v3455 = vpop.f32.mrf.mxu0
      %v3456 = vpop.f32.mrf.mxu0
      %v3457 = vadd.f32 %v3345, %v3456
      %v3458 = vpop.f32.mrf.mxu0
      %3459 = vdwg.mxu0
      %v3460 = vadd.f32 %v1254, %v3430
      %v3461 = vadd.f32 %v1255, %v3433
      %v3462 = vadd.f32 %v1256, %v3438
      %v3463 = vadd.f32 %v1257, %v3441
      %v3464 = vadd.f32 %v1258, %v3446
      %v3465 = vadd.f32 %v1259, %v3449
      %v3466 = vadd.f32 %v1260, %v3454
      %v3467 = vadd.f32 %v1261, %v3457
      %v3468 = vld [vmem:[%s847] sm:$0x1]
      %v3469 = vld [vmem:[%s850] sm:$0x1]
      %3470 = vadd.xlane.f32.xlu0 %v3460
      %v3471 = vpop.xlane.xlu0 %3470
      %3472 = vadd.xlane.f32.xlu0 %v3461
      %v3473 = vpop.xlane.xlu0 %3472
      %3474 = vadd.xlane.f32.xlu0 %v3462
      %v3475 = vpop.xlane.xlu0 %3474
      %3476 = vadd.xlane.f32.xlu0 %v3463
      %v3477 = vpop.xlane.xlu0 %3476
      %3478 = vadd.xlane.f32.xlu0 %v3464
      %v3479 = vpop.xlane.xlu0 %3478
      %3480 = vadd.xlane.f32.xlu0 %v3465
      %v3481 = vpop.xlane.xlu0 %3480
      %3482 = vadd.xlane.f32.xlu0 %v3466
      %v3483 = vpop.xlane.xlu0 %3482
      %3484 = vadd.xlane.f32.xlu0 %v3467
      %v3485 = vpop.xlane.xlu0 %3484
      %v3486 = vrcp.pop 128.0
      %v3487 = vmul.f32 %v3471, %v3486
      %v3488 = vmul.f32 %v3473, %v3486
      %v3489 = vmul.f32 %v3475, %v3486
      %v3490 = vmul.f32 %v3477, %v3486
      %v3491 = vmul.f32 %v3479, %v3486
      %v3492 = vmul.f32 %v3481, %v3486
      %v3493 = vmul.f32 %v3483, %v3486
      %v3494 = vmul.f32 %v3485, %v3486
      %v3495 = vsub.f32 %v3460, %v3487
      %v3496 = vsub.f32 %v3461, %v3488
      %v3497 = vsub.f32 %v3462, %v3489
      %v3498 = vsub.f32 %v3463, %v3490
      %v3499 = vsub.f32 %v3464, %v3491
      %v3500 = vsub.f32 %v3465, %v3492
      %v3501 = vsub.f32 %v3466, %v3493
      %v3502 = vsub.f32 %v3467, %v3494
      %v3503 = vmul.f32 %v3495, %v3495
      %v3504 = vmul.f32 %v3496, %v3496
      %v3505 = vmul.f32 %v3497, %v3497
      %v3506 = vmul.f32 %v3498, %v3498
      %v3507 = vmul.f32 %v3499, %v3499
      %v3508 = vmul.f32 %v3500, %v3500
      %v3509 = vmul.f32 %v3501, %v3501
      %v3510 = vmul.f32 %v3502, %v3502
      %3511 = vadd.xlane.f32.xlu0 %v3503
      %v3512 = vpop.xlane.xlu0 %3511
      %3513 = vadd.xlane.f32.xlu0 %v3504
      %v3514 = vpop.xlane.xlu0 %3513
      %3515 = vadd.xlane.f32.xlu0 %v3505
      %v3516 = vpop.xlane.xlu0 %3515
      %3517 = vadd.xlane.f32.xlu0 %v3506
      %v3518 = vpop.xlane.xlu0 %3517
      %3519 = vadd.xlane.f32.xlu0 %v3507
      %v3520 = vpop.xlane.xlu0 %3519
      %3521 = vadd.xlane.f32.xlu0 %v3508
      %v3522 = vpop.xlane.xlu0 %3521
      %3523 = vadd.xlane.f32.xlu0 %v3509
      %v3524 = vpop.xlane.xlu0 %3523
      %3525 = vadd.xlane.f32.xlu0 %v3510
      %v3526 = vpop.xlane.xlu0 %3525
      %v3527 = vmul.f32 %v3512, %v3486
      %v3528 = vmul.f32 %v3514, %v3486
      %v3529 = vmul.f32 %v3516, %v3486
      %v3530 = vmul.f32 %v3518, %v3486
      %v3531 = vmul.f32 %v3520, %v3486
      %v3532 = vmul.f32 %v3522, %v3486
      %v3533 = vmul.f32 %v3524, %v3486
      %v3534 = vmul.f32 %v3526, %v3486
      %v3535 = vadd.f32 %v3527, 1e-05
      %v3536 = vadd.f32 %v3528, 1e-05
      %v3537 = vadd.f32 %v3529, 1e-05
      %v3538 = vadd.f32 %v3530, 1e-05
      %v3539 = vadd.f32 %v3531, 1e-05
      %v3540 = vadd.f32 %v3532, 1e-05
      %v3541 = vadd.f32 %v3533, 1e-05
      %v3542 = vadd.f32 %v3534, 1e-05
      %v3543 = vrsqrt.pop %v3535
      %v3544 = vrsqrt.pop %v3536
      %v3545 = vrsqrt.pop %v3537
      %v3546 = vrsqrt.pop %v3538
      %v3547 = vrsqrt.pop %v3539
      %v3548 = vrsqrt.pop %v3540
      %v3549 = vrsqrt.pop %v3541
      %v3550 = vrsqrt.pop %v3542
      %v3551 = vmul.f32 %v3495, %v3543
      %v3552 = vmul.f32 %v3496, %v3544
      %v3553 = vmul.f32 %v3497, %v3545
      %v3554 = vmul.f32 %v3498, %v3546
      %v3555 = vmul.f32 %v3499, %v3547
      %v3556 = vmul.f32 %v3500, %v3548
      %v3557 = vmul.f32 %v3501, %v3549
      %v3558 = vmul.f32 %v3502, %v3550
      %v3560 = vlaneseq
      %v3561 = vshrl.u32 %v3560, 7
      %v3562 = vsub.s32 0, %v3561
      %v3563 = vrot.slane %v3468, %v3562
      %v3565 = vmul.f32 %v3551, %v3563
      %v3566 = vmul.f32 %v3552, %v3563
      %v3567 = vmul.f32 %v3553, %v3563
      %v3568 = vmul.f32 %v3554, %v3563
      %v3569 = vmul.f32 %v3555, %v3563
      %v3570 = vmul.f32 %v3556, %v3563
      %v3571 = vmul.f32 %v3557, %v3563
      %v3572 = vmul.f32 %v3558, %v3563
      %v3574 = vlaneseq
      %v3575 = vshrl.u32 %v3574, 7
      %v3576 = vsub.s32 0, %v3575
      %v3577 = vrot.slane %v3469, %v3576
      %v3579 = vadd.f32 %v3565, %v3577
      %v3580 = vadd.f32 %v3566, %v3577
      %v3581 = vadd.f32 %v3567, %v3577
      %v3582 = vadd.f32 %v3568, %v3577
      %v3583 = vadd.f32 %v3569, %v3577
      %v3584 = vadd.f32 %v3570, %v3577
      %v3585 = vadd.f32 %v3571, %v3577
      %v3586 = vadd.f32 %v3572, %v3577
      %v3587 = vpack.c.bf16 %v3580, %v3579
      %v3588 = vpack.c.bf16 %v3582, %v3581
      %v3589 = vpack.c.bf16 %v3584, %v3583
      %v3590 = vpack.c.bf16 %v3586, %v3585
      %v3591 = vld [vmem:[%s855] sm:$0xff]
      %v3592 = vld [vmem:[%s855 + $0x8] sm:$0xff]
      %v3593 = vld [vmem:[%s855 + $0x10] sm:$0xff]
      %v3594 = vld [vmem:[%s855 + $0x18] sm:$0xff]
      %v3595 = vld [vmem:[%s855 + $0x20] sm:$0xff]
      %v3596 = vld [vmem:[%s855 + $0x28] sm:$0xff]
      %v3597 = vld [vmem:[%s855 + $0x30] sm:$0xff]
      %v3598 = vld [vmem:[%s855 + $0x38] sm:$0xff]
      %v3599 = vld [vmem:[%s855 + $0x40] sm:$0xff]
      %v3600 = vld [vmem:[%s855 + $0x48] sm:$0xff]
      %v3601 = vld [vmem:[%s855 + $0x50] sm:$0xff]
      %v3602 = vld [vmem:[%s855 + $0x58] sm:$0xff]
      %v3603 = vld [vmem:[%s855 + $0x60] sm:$0xff]
      %v3604 = vld [vmem:[%s855 + $0x68] sm:$0xff]
      %v3605 = vld [vmem:[%s855 + $0x70] sm:$0xff]
      %v3606 = vld [vmem:[%s855 + $0x78] sm:$0xff]
      %v3607 = vld [vmem:[%s859] sm:$0x3]
      %v3609 = vlaneseq
      %v3610 = vshrl.u32 %v3609, 7
      %v3611 = vsub.s32 0, %v3610
      %v3612 = vrot.slane %v3607, %v3611
      %v3613 = vlaneseq
      %v3614 = vshrl.u32 %v3613, 7
      %v3615 = vsub.s32 1, %v3614
      %v3616 = vrot.slane %v3607, %v3615
      %v3635 = vunpack.c.l.b16 %v3591
      %v3636 = vunpack.c.h.b16 %v3591
      %v3637 = vunpack.c.l.b16 %v3592
      %v3638 = vunpack.c.h.b16 %v3592
      %v3639 = vunpack.c.l.b16 %v3593
      %v3640 = vunpack.c.h.b16 %v3593
      %v3641 = vunpack.c.l.b16 %v3594
      %v3642 = vunpack.c.h.b16 %v3594
      %v3643 = vunpack.c.l.b16 %v3595
      %v3644 = vunpack.c.h.b16 %v3595
      %v3645 = vunpack.c.l.b16 %v3596
      %v3646 = vunpack.c.h.b16 %v3596
      %v3647 = vunpack.c.l.b16 %v3597
      %v3648 = vunpack.c.h.b16 %v3597
      %v3649 = vunpack.c.l.b16 %v3598
      %v3650 = vunpack.c.h.b16 %v3598
      %v3651 = vunpack.c.l.b16 %v3599
      %v3652 = vunpack.c.h.b16 %v3599
      %v3653 = vunpack.c.l.b16 %v3600
      %v3654 = vunpack.c.h.b16 %v3600
      %v3655 = vunpack.c.l.b16 %v3601
      %v3656 = vunpack.c.h.b16 %v3601
      %v3657 = vunpack.c.l.b16 %v3602
      %v3658 = vunpack.c.h.b16 %v3602
      %v3659 = vunpack.c.l.b16 %v3603
      %v3660 = vunpack.c.h.b16 %v3603
      %v3661 = vunpack.c.l.b16 %v3604
      %v3662 = vunpack.c.h.b16 %v3604
      %v3663 = vunpack.c.l.b16 %v3605
      %v3664 = vunpack.c.h.b16 %v3605
      %v3665 = vunpack.c.l.b16 %v3606
      %v3666 = vunpack.c.h.b16 %v3606
      %v3667 = vpack.c.b16 %v3637, %v3635
      %v3668 = vpack.c.b16 %v3638, %v3636
      %v3669 = vpack.c.b16 %v3641, %v3639
      %v3670 = vpack.c.b16 %v3642, %v3640
      %v3671 = vpack.c.b16 %v3645, %v3643
      %v3672 = vpack.c.b16 %v3646, %v3644
      %v3673 = vpack.c.b16 %v3649, %v3647
      %v3674 = vpack.c.b16 %v3650, %v3648
      %v3675 = vpack.c.b16 %v3653, %v3651
      %v3676 = vpack.c.b16 %v3654, %v3652
      %v3677 = vpack.c.b16 %v3657, %v3655
      %v3678 = vpack.c.b16 %v3658, %v3656
      %v3679 = vpack.c.b16 %v3661, %v3659
      %v3680 = vpack.c.b16 %v3662, %v3660
      %v3681 = vpack.c.b16 %v3665, %v3663
      %v3682 = vpack.c.b16 %v3666, %v3664
      %3699 = vmatprep.subr.bf16.mxu0 %v3682
      %3700 = vmatpush1.bf16.msra.mxu0 %v3681
      %3701 = vmatprep.subr.bf16.mxu0 %v3680
      %3702 = vmatpush1.bf16.msra.mxu0 %v3679
      %3703 = vmatprep.subr.bf16.mxu0 %v3678
      %3704 = vmatpush1.bf16.msra.mxu0 %v3677
      %3705 = vmatprep.subr.bf16.mxu0 %v3676
      %3706 = vmatpush1.bf16.msra.mxu0 %v3675
      %3707 = vmatprep.subr.bf16.mxu0 %v3674
      %3708 = vmatpush1.bf16.msra.mxu0 %v3673
      %3709 = vmatprep.subr.bf16.mxu0 %v3672
      %3710 = vmatpush1.bf16.msra.mxu0 %v3671
      %3711 = vmatprep.subr.bf16.mxu0 %v3670
      %3712 = vmatpush1.bf16.msra.mxu0 %v3669
      %3713 = vmatprep.subr.bf16.mxu0 %v3668
      %3714 = vmatpush1.bf16.msra.mxu0 %v3667
      %3715 = vmatprep.subr.bf16.mxu0 0
      %3716 = vmatpush2.bf16.msra.mxu0 0
      %3717 = vmatprep.subr.bf16.mxu0 0
      %3718 = vmatpush2.bf16.msra.mxu0 0
      %3719 = vmatprep.subr.bf16.mxu0 0
      %3720 = vmatpush2.bf16.msra.mxu0 0
      %3721 = vmatprep.subr.bf16.mxu0 0
      %3722 = vmatpush2.bf16.msra.mxu0 0
      %3723 = vmatprep.subr.bf16.mxu0 0
      %3724 = vmatpush2.bf16.msra.mxu0 0
      %3725 = vmatprep.subr.bf16.mxu0 0
      %3726 = vmatpush2.bf16.msra.mxu0 0
      %3727 = vmatprep.subr.bf16.mxu0 0
      %3728 = vmatpush2.bf16.msra.mxu0 0
      %3729 = vmatprep.subr.bf16.mxu0 0
      %3730 = vmatpush2.bf16.msra.mxu0 0
      %3731 = vmatprep.mubr.bf16.mxu0 0
      %3732 = vmatmul.mubr.bf16.gmra.mxu0 %v3587
      %v3733 = vpop.f32.mrf.mxu0
      %v3734 = vadd.f32 %v3612, %v3733
      %v3735 = vpop.f32.mrf.mxu0
      %v3736 = vadd.f32 %v3616, %v3735
      %v3737 = vpop.f32.mrf.mxu0
      %v3738 = vadd.f32 %v3612, %v3737
      %v3739 = vpop.f32.mrf.mxu0
      %v3740 = vadd.f32 %v3616, %v3739
      %3741 = vmatprep.mubr.bf16.mxu0 0
      %3742 = vmatmul.mubr.bf16.gmra.mxu0 %v3588
      %v3743 = vpop.f32.mrf.mxu0
      %v3744 = vadd.f32 %v3612, %v3743
      %v3745 = vpop.f32.mrf.mxu0
      %v3746 = vadd.f32 %v3616, %v3745
      %v3747 = vpop.f32.mrf.mxu0
      %v3748 = vadd.f32 %v3612, %v3747
      %v3749 = vpop.f32.mrf.mxu0
      %v3750 = vadd.f32 %v3616, %v3749
      %3751 = vmatprep.mubr.bf16.mxu0 0
      %3752 = vmatmul.mubr.bf16.gmra.mxu0 %v3589
      %v3753 = vpop.f32.mrf.mxu0
      %v3754 = vadd.f32 %v3612, %v3753
      %v3755 = vpop.f32.mrf.mxu0
      %v3756 = vadd.f32 %v3616, %v3755
      %v3757 = vpop.f32.mrf.mxu0
      %v3758 = vadd.f32 %v3612, %v3757
      %v3759 = vpop.f32.mrf.mxu0
      %v3760 = vadd.f32 %v3616, %v3759
      %3761 = vmatprep.mubr.bf16.mxu0 0
      %3762 = vmatmul.mubr.bf16.gmra.mxu0 %v3590
      %v3763 = vpop.f32.mrf.mxu0
      %v3764 = vadd.f32 %v3612, %v3763
      %v3765 = vpop.f32.mrf.mxu0
      %v3766 = vadd.f32 %v3616, %v3765
      %v3767 = vpop.f32.mrf.mxu0
      %v3768 = vadd.f32 %v3612, %v3767
      %v3769 = vpop.f32.mrf.mxu0
      %v3770 = vadd.f32 %v3616, %v3769
      %3771 = vdwg.mxu0
      %v3772 = vmax.f32 %v3734, 0.0
      %v3773 = vmax.f32 %v3736, 0.0
      %v3774 = vmax.f32 %v3738, 0.0
      %v3775 = vmax.f32 %v3740, 0.0
      %v3776 = vmax.f32 %v3744, 0.0
      %v3777 = vmax.f32 %v3746, 0.0
      %v3778 = vmax.f32 %v3748, 0.0
      %v3779 = vmax.f32 %v3750, 0.0
      %v3780 = vmax.f32 %v3754, 0.0
      %v3781 = vmax.f32 %v3756, 0.0
      %v3782 = vmax.f32 %v3758, 0.0
      %v3783 = vmax.f32 %v3760, 0.0
      %v3784 = vmax.f32 %v3764, 0.0
      %v3785 = vmax.f32 %v3766, 0.0
      %v3786 = vmax.f32 %v3768, 0.0
      %v3787 = vmax.f32 %v3770, 0.0
      %v3788 = vpack.c.bf16 %v3774, %v3772
      %v3789 = vpack.c.bf16 %v3775, %v3773
      %v3790 = vpack.c.bf16 %v3778, %v3776
      %v3791 = vpack.c.bf16 %v3779, %v3777
      %v3792 = vpack.c.bf16 %v3782, %v3780
      %v3793 = vpack.c.bf16 %v3783, %v3781
      %v3794 = vpack.c.bf16 %v3786, %v3784
      %v3795 = vpack.c.bf16 %v3787, %v3785
      %v3796 = vld [vmem:[%s864] sm:$0xf]
      %v3797 = vld [vmem:[%s864 + $0x4] sm:$0xf]
      %v3798 = vld [vmem:[%s864 + $0x8] sm:$0xf]
      %v3799 = vld [vmem:[%s864 + $0xc] sm:$0xf]
      %v3800 = vld [vmem:[%s864 + $0x10] sm:$0xf]
      %v3801 = vld [vmem:[%s864 + $0x14] sm:$0xf]
      %v3802 = vld [vmem:[%s864 + $0x18] sm:$0xf]
      %v3803 = vld [vmem:[%s864 + $0x1c] sm:$0xf]
      %v3804 = vld [vmem:[%s864 + $0x20] sm:$0xf]
      %v3805 = vld [vmem:[%s864 + $0x24] sm:$0xf]
      %v3806 = vld [vmem:[%s864 + $0x28] sm:$0xf]
      %v3807 = vld [vmem:[%s864 + $0x2c] sm:$0xf]
      %v3808 = vld [vmem:[%s864 + $0x30] sm:$0xf]
      %v3809 = vld [vmem:[%s864 + $0x34] sm:$0xf]
      %v3810 = vld [vmem:[%s864 + $0x38] sm:$0xf]
      %v3811 = vld [vmem:[%s864 + $0x3c] sm:$0xf]
      %v3812 = vld [vmem:[%s864 + $0x40] sm:$0xf]
      %v3813 = vld [vmem:[%s864 + $0x44] sm:$0xf]
      %v3814 = vld [vmem:[%s864 + $0x48] sm:$0xf]
      %v3815 = vld [vmem:[%s864 + $0x4c] sm:$0xf]
      %v3816 = vld [vmem:[%s864 + $0x50] sm:$0xf]
      %v3817 = vld [vmem:[%s864 + $0x54] sm:$0xf]
      %v3818 = vld [vmem:[%s864 + $0x58] sm:$0xf]
      %v3819 = vld [vmem:[%s864 + $0x5c] sm:$0xf]
      %v3820 = vld [vmem:[%s864 + $0x60] sm:$0xf]
      %v3821 = vld [vmem:[%s864 + $0x64] sm:$0xf]
      %v3822 = vld [vmem:[%s864 + $0x68] sm:$0xf]
      %v3823 = vld [vmem:[%s864 + $0x6c] sm:$0xf]
      %v3824 = vld [vmem:[%s864 + $0x70] sm:$0xf]
      %v3825 = vld [vmem:[%s864 + $0x74] sm:$0xf]
      %v3826 = vld [vmem:[%s864 + $0x78] sm:$0xf]
      %v3827 = vld [vmem:[%s864 + $0x7c] sm:$0xf]
      %v3828 = vld [vmem:[%s867] sm:$0x1]
      %v3830 = vlaneseq
      %v3831 = vshrl.u32 %v3830, 7
      %v3832 = vsub.s32 0, %v3831
      %v3833 = vrot.slane %v3828, %v3832
      %v3867 = vunpack.c.l.b16 %v3796
      %v3868 = vunpack.c.l.b16 %v3797
      %v3869 = vunpack.c.l.b16 %v3798
      %v3870 = vunpack.c.l.b16 %v3799
      %v3871 = vunpack.c.l.b16 %v3800
      %v3872 = vunpack.c.l.b16 %v3801
      %v3873 = vunpack.c.l.b16 %v3802
      %v3874 = vunpack.c.l.b16 %v3803
      %v3875 = vunpack.c.l.b16 %v3804
      %v3876 = vunpack.c.l.b16 %v3805
      %v3877 = vunpack.c.l.b16 %v3806
      %v3878 = vunpack.c.l.b16 %v3807
      %v3879 = vunpack.c.l.b16 %v3808
      %v3880 = vunpack.c.l.b16 %v3809
      %v3881 = vunpack.c.l.b16 %v3810
      %v3882 = vunpack.c.l.b16 %v3811
      %v3883 = vunpack.c.l.b16 %v3812
      %v3884 = vunpack.c.l.b16 %v3813
      %v3885 = vunpack.c.l.b16 %v3814
      %v3886 = vunpack.c.l.b16 %v3815
      %v3887 = vunpack.c.l.b16 %v3816
      %v3888 = vunpack.c.l.b16 %v3817
      %v3889 = vunpack.c.l.b16 %v3818
      %v3890 = vunpack.c.l.b16 %v3819
      %v3891 = vunpack.c.l.b16 %v3820
      %v3892 = vunpack.c.l.b16 %v3821
      %v3893 = vunpack.c.l.b16 %v3822
      %v3894 = vunpack.c.l.b16 %v3823
      %v3895 = vunpack.c.l.b16 %v3824
      %v3896 = vunpack.c.l.b16 %v3825
      %v3897 = vunpack.c.l.b16 %v3826
      %v3898 = vunpack.c.l.b16 %v3827
      %v3899 = vpack.c.b16 %v3868, %v3867
      %v3900 = vpack.c.b16 %v3870, %v3869
      %v3901 = vpack.c.b16 %v3872, %v3871
      %v3902 = vpack.c.b16 %v3874, %v3873
      %v3903 = vpack.c.b16 %v3876, %v3875
      %v3904 = vpack.c.b16 %v3878, %v3877
      %v3905 = vpack.c.b16 %v3880, %v3879
      %v3906 = vpack.c.b16 %v3882, %v3881
      %v3907 = vpack.c.b16 %v3884, %v3883
      %v3908 = vpack.c.b16 %v3886, %v3885
      %v3909 = vpack.c.b16 %v3888, %v3887
      %v3910 = vpack.c.b16 %v3890, %v3889
      %v3911 = vpack.c.b16 %v3892, %v3891
      %v3912 = vpack.c.b16 %v3894, %v3893
      %v3913 = vpack.c.b16 %v3896, %v3895
      %v3914 = vpack.c.b16 %v3898, %v3897
      %3931 = vmatprep.subr.bf16.mxu0 0
      %3932 = vmatpush1.bf16.msra.mxu0 %v3906
      %3933 = vmatprep.subr.bf16.mxu0 0
      %3934 = vmatpush1.bf16.msra.mxu0 %v3905
      %3935 = vmatprep.subr.bf16.mxu0 0
      %3936 = vmatpush1.bf16.msra.mxu0 %v3904
      %3937 = vmatprep.subr.bf16.mxu0 0
      %3938 = vmatpush1.bf16.msra.mxu0 %v3903
      %3939 = vmatprep.subr.bf16.mxu0 0
      %3940 = vmatpush1.bf16.msra.mxu0 %v3902
      %3941 = vmatprep.subr.bf16.mxu0 0
      %3942 = vmatpush1.bf16.msra.mxu0 %v3901
      %3943 = vmatprep.subr.bf16.mxu0 0
      %3944 = vmatpush1.bf16.msra.mxu0 %v3900
      %3945 = vmatprep.subr.bf16.mxu0 0
      %3946 = vmatpush1.bf16.msra.mxu0 %v3899
      %3947 = vmatprep.subr.bf16.mxu0 0
      %3948 = vmatpush2.bf16.msra.mxu0 %v3914
      %3949 = vmatprep.subr.bf16.mxu0 0
      %3950 = vmatpush2.bf16.msra.mxu0 %v3913
      %3951 = vmatprep.subr.bf16.mxu0 0
      %3952 = vmatpush2.bf16.msra.mxu0 %v3912
      %3953 = vmatprep.subr.bf16.mxu0 0
      %3954 = vmatpush2.bf16.msra.mxu0 %v3911
      %3955 = vmatprep.subr.bf16.mxu0 0
      %3956 = vmatpush2.bf16.msra.mxu0 %v3910
      %3957 = vmatprep.subr.bf16.mxu0 0
      %3958 = vmatpush2.bf16.msra.mxu0 %v3909
      %3959 = vmatprep.subr.bf16.mxu0 0
      %3960 = vmatpush2.bf16.msra.mxu0 %v3908
      %3961 = vmatprep.subr.bf16.mxu0 0
      %3962 = vmatpush2.bf16.msra.mxu0 %v3907
      %3963 = vmatprep.mubr.bf16.mxu0 %v3789
      %3964 = vmatmul.mubr.bf16.gmra.mxu0 %v3788
      %v3965 = vpop.f32.mrf.mxu0
      %v3966 = vadd.f32 %v3833, %v3965
      %v3967 = vpop.f32.mrf.mxu0
      %v3968 = vpop.f32.mrf.mxu0
      %v3969 = vadd.f32 %v3833, %v3968
      %v3970 = vpop.f32.mrf.mxu0
      %3971 = vmatprep.mubr.bf16.mxu0 %v3791
      %3972 = vmatmul.mubr.bf16.gmra.mxu0 %v3790
      %v3973 = vpop.f32.mrf.mxu0
      %v3974 = vadd.f32 %v3833, %v3973
      %v3975 = vpop.f32.mrf.mxu0
      %v3976 = vpop.f32.mrf.mxu0
      %v3977 = vadd.f32 %v3833, %v3976
      %v3978 = vpop.f32.mrf.mxu0
      %3979 = vmatprep.mubr.bf16.mxu0 %v3793
      %3980 = vmatmul.mubr.bf16.gmra.mxu0 %v3792
      %v3981 = vpop.f32.mrf.mxu0
      %v3982 = vadd.f32 %v3833, %v3981
      %v3983 = vpop.f32.mrf.mxu0
      %v3984 = vpop.f32.mrf.mxu0
      %v3985 = vadd.f32 %v3833, %v3984
      %v3986 = vpop.f32.mrf.mxu0
      %3987 = vmatprep.mubr.bf16.mxu0 %v3795
      %3988 = vmatmul.mubr.bf16.gmra.mxu0 %v3794
      %v3989 = vpop.f32.mrf.mxu0
      %v3990 = vadd.f32 %v3833, %v3989
      %v3991 = vpop.f32.mrf.mxu0
      %v3992 = vpop.f32.mrf.mxu0
      %v3993 = vadd.f32 %v3833, %v3992
      %v3994 = vpop.f32.mrf.mxu0
      %3995 = vdwg.mxu0
      %v3996 = vadd.f32 %v3579, %v3966
      %v3997 = vadd.f32 %v3580, %v3969
      %v3998 = vadd.f32 %v3581, %v3974
      %v3999 = vadd.f32 %v3582, %v3977
      %v4000 = vadd.f32 %v3583, %v3982
      %v4001 = vadd.f32 %v3584, %v3985
      %v4002 = vadd.f32 %v3585, %v3990
      %v4003 = vadd.f32 %v3586, %v3993
      %v4004 = vld [vmem:[%s870] sm:$0x1]
      %v4005 = vld [vmem:[%s873] sm:$0x1]
      %4006 = vadd.xlane.f32.xlu0 %v3996
      %v4007 = vpop.xlane.xlu0 %4006
      %4008 = vadd.xlane.f32.xlu0 %v3997
      %v4009 = vpop.xlane.xlu0 %4008
      %4010 = vadd.xlane.f32.xlu0 %v3998
      %v4011 = vpop.xlane.xlu0 %4010
      %4012 = vadd.xlane.f32.xlu0 %v3999
      %v4013 = vpop.xlane.xlu0 %4012
      %4014 = vadd.xlane.f32.xlu0 %v4000
      %v4015 = vpop.xlane.xlu0 %4014
      %4016 = vadd.xlane.f32.xlu0 %v4001
      %v4017 = vpop.xlane.xlu0 %4016
      %4018 = vadd.xlane.f32.xlu0 %v4002
      %v4019 = vpop.xlane.xlu0 %4018
      %4020 = vadd.xlane.f32.xlu0 %v4003
      %v4021 = vpop.xlane.xlu0 %4020
      %v4022 = vmul.f32 %v4007, %v3486
      %v4023 = vmul.f32 %v4009, %v3486
      %v4024 = vmul.f32 %v4011, %v3486
      %v4025 = vmul.f32 %v4013, %v3486
      %v4026 = vmul.f32 %v4015, %v3486
      %v4027 = vmul.f32 %v4017, %v3486
      %v4028 = vmul.f32 %v4019, %v3486
      %v4029 = vmul.f32 %v4021, %v3486
      %v4030 = vsub.f32 %v3996, %v4022
      %v4031 = vsub.f32 %v3997, %v4023
      %v4032 = vsub.f32 %v3998, %v4024
      %v4033 = vsub.f32 %v3999, %v4025
      %v4034 = vsub.f32 %v4000, %v4026
      %v4035 = vsub.f32 %v4001, %v4027
      %v4036 = vsub.f32 %v4002, %v4028
      %v4037 = vsub.f32 %v4003, %v4029
      %v4038 = vmul.f32 %v4030, %v4030
      %v4039 = vmul.f32 %v4031, %v4031
      %v4040 = vmul.f32 %v4032, %v4032
      %v4041 = vmul.f32 %v4033, %v4033
      %v4042 = vmul.f32 %v4034, %v4034
      %v4043 = vmul.f32 %v4035, %v4035
      %v4044 = vmul.f32 %v4036, %v4036
      %v4045 = vmul.f32 %v4037, %v4037
      %4046 = vadd.xlane.f32.xlu0 %v4038
      %v4047 = vpop.xlane.xlu0 %4046
      %4048 = vadd.xlane.f32.xlu0 %v4039
      %v4049 = vpop.xlane.xlu0 %4048
      %4050 = vadd.xlane.f32.xlu0 %v4040
      %v4051 = vpop.xlane.xlu0 %4050
      %4052 = vadd.xlane.f32.xlu0 %v4041
      %v4053 = vpop.xlane.xlu0 %4052
      %4054 = vadd.xlane.f32.xlu0 %v4042
      %v4055 = vpop.xlane.xlu0 %4054
      %4056 = vadd.xlane.f32.xlu0 %v4043
      %v4057 = vpop.xlane.xlu0 %4056
      %4058 = vadd.xlane.f32.xlu0 %v4044
      %v4059 = vpop.xlane.xlu0 %4058
      %4060 = vadd.xlane.f32.xlu0 %v4045
      %v4061 = vpop.xlane.xlu0 %4060
      %v4062 = vmul.f32 %v4047, %v3486
      %v4063 = vmul.f32 %v4049, %v3486
      %v4064 = vmul.f32 %v4051, %v3486
      %v4065 = vmul.f32 %v4053, %v3486
      %v4066 = vmul.f32 %v4055, %v3486
      %v4067 = vmul.f32 %v4057, %v3486
      %v4068 = vmul.f32 %v4059, %v3486
      %v4069 = vmul.f32 %v4061, %v3486
      %v4070 = vadd.f32 %v4062, 1e-05
      %v4071 = vadd.f32 %v4063, 1e-05
      %v4072 = vadd.f32 %v4064, 1e-05
      %v4073 = vadd.f32 %v4065, 1e-05
      %v4074 = vadd.f32 %v4066, 1e-05
      %v4075 = vadd.f32 %v4067, 1e-05
      %v4076 = vadd.f32 %v4068, 1e-05
      %v4077 = vadd.f32 %v4069, 1e-05
      %v4078 = vrsqrt.pop %v4070
      %v4079 = vrsqrt.pop %v4071
      %v4080 = vrsqrt.pop %v4072
      %v4081 = vrsqrt.pop %v4073
      %v4082 = vrsqrt.pop %v4074
      %v4083 = vrsqrt.pop %v4075
      %v4084 = vrsqrt.pop %v4076
      %v4085 = vrsqrt.pop %v4077
      %v4086 = vmul.f32 %v4030, %v4078
      %v4087 = vmul.f32 %v4031, %v4079
      %v4088 = vmul.f32 %v4032, %v4080
      %v4089 = vmul.f32 %v4033, %v4081
      %v4090 = vmul.f32 %v4034, %v4082
      %v4091 = vmul.f32 %v4035, %v4083
      %v4092 = vmul.f32 %v4036, %v4084
      %v4093 = vmul.f32 %v4037, %v4085
      %v4095 = vlaneseq
      %v4096 = vshrl.u32 %v4095, 7
      %v4097 = vsub.s32 0, %v4096
      %v4098 = vrot.slane %v4004, %v4097
      %v4100 = vmul.f32 %v4086, %v4098
      %v4101 = vmul.f32 %v4087, %v4098
      %v4102 = vmul.f32 %v4088, %v4098
      %v4103 = vmul.f32 %v4089, %v4098
      %v4104 = vmul.f32 %v4090, %v4098
      %v4105 = vmul.f32 %v4091, %v4098
      %v4106 = vmul.f32 %v4092, %v4098
      %v4107 = vmul.f32 %v4093, %v4098
      %v4109 = vlaneseq
      %v4110 = vshrl.u32 %v4109, 7
      %v4111 = vsub.s32 0, %v4110
      %v4112 = vrot.slane %v4005, %v4111
      %v4114 = vadd.f32 %v4100, %v4112
      %v4115 = vadd.f32 %v4101, %v4112
      %v4116 = vadd.f32 %v4102, %v4112
      %v4117 = vadd.f32 %v4103, %v4112
      %v4118 = vadd.f32 %v4104, %v4112
      %v4119 = vadd.f32 %v4105, %v4112
      %v4120 = vadd.f32 %v4106, %v4112
      %v4121 = vadd.f32 %v4107, %v4112
      %4122 = vst [vmem:[#allocation2] sm:$0xff] %v4114
      %4123 = vst [vmem:[#allocation2 + $0x8] sm:$0xff] %v4115
      %4124 = vst [vmem:[#allocation2 + $0x10] sm:$0xff] %v4116
      %4125 = vst [vmem:[#allocation2 + $0x18] sm:$0xff] %v4117
      %4126 = vst [vmem:[#allocation2 + $0x20] sm:$0xff] %v4118
      %4127 = vst [vmem:[#allocation2 + $0x28] sm:$0xff] %v4119
      %4128 = vst [vmem:[#allocation2 + $0x30] sm:$0xff] %v4120
      %4129 = vst [vmem:[#allocation2 + $0x38] sm:$0xff] %v4121
      %p4130 = scmp.eq.s32.totalorder %s34, 1
      // Predicated region
      $region117: #{two_step_network_with_attention.1} parent=111 // pred_check
        %p4131 = pneg %p4130
      $region118: #{two_step_network_with_attention.1} parent=111 // pred_check_branch
        %4133 = sbr.rel (%p4131) target = $region120
      $region119: #{two_step_network_with_attention.1} parent=111 // pred_region
        %v4134 = vpack.c.bf16 %v4115, %v4114
        %v4135 = vpack.c.bf16 %v4117, %v4116
        %v4136 = vpack.c.bf16 %v4119, %v4118
        %v4137 = vpack.c.bf16 %v4121, %v4120
        %v4138 = vld [vmem:[%s21] sm:$0xf]
        %v4139 = vld [vmem:[%s21 + $0x4] sm:$0xf]
        %v4140 = vld [vmem:[%s21 + $0x8] sm:$0xf]
        %v4141 = vld [vmem:[%s21 + $0xc] sm:$0xf]
        %v4142 = vld [vmem:[%s21 + $0x10] sm:$0xf]
        %v4143 = vld [vmem:[%s21 + $0x14] sm:$0xf]
        %v4144 = vld [vmem:[%s21 + $0x18] sm:$0xf]
        %v4145 = vld [vmem:[%s21 + $0x1c] sm:$0xf]
        %v4146 = vld [vmem:[%s21 + $0x20] sm:$0xf]
        %v4147 = vld [vmem:[%s21 + $0x24] sm:$0xf]
        %v4148 = vld [vmem:[%s21 + $0x28] sm:$0xf]
        %v4149 = vld [vmem:[%s21 + $0x2c] sm:$0xf]
        %v4150 = vld [vmem:[%s21 + $0x30] sm:$0xf]
        %v4151 = vld [vmem:[%s21 + $0x34] sm:$0xf]
        %v4152 = vld [vmem:[%s21 + $0x38] sm:$0xf]
        %v4153 = vld [vmem:[%s21 + $0x3c] sm:$0xf]
        %v4154 = vld [vmem:[%s22] sm:$0x1]
        %v4156 = vlaneseq
        %v4157 = vshrl.u32 %v4156, 7
        %v4158 = vsub.s32 0, %v4157
        %v4159 = vrot.slane %v4154, %v4158
        %v4177 = vunpack.c.l.b16 %v4138
        %v4178 = vunpack.c.l.b16 %v4139
        %v4179 = vunpack.c.l.b16 %v4140
        %v4180 = vunpack.c.l.b16 %v4141
        %v4181 = vunpack.c.l.b16 %v4142
        %v4182 = vunpack.c.l.b16 %v4143
        %v4183 = vunpack.c.l.b16 %v4144
        %v4184 = vunpack.c.l.b16 %v4145
        %v4185 = vunpack.c.l.b16 %v4146
        %v4186 = vunpack.c.l.b16 %v4147
        %v4187 = vunpack.c.l.b16 %v4148
        %v4188 = vunpack.c.l.b16 %v4149
        %v4189 = vunpack.c.l.b16 %v4150
        %v4190 = vunpack.c.l.b16 %v4151
        %v4191 = vunpack.c.l.b16 %v4152
        %v4192 = vunpack.c.l.b16 %v4153
        %v4193 = vpack.c.b16 %v4178, %v4177
        %v4194 = vpack.c.b16 %v4180, %v4179
        %v4195 = vpack.c.b16 %v4182, %v4181
        %v4196 = vpack.c.b16 %v4184, %v4183
        %v4197 = vpack.c.b16 %v4186, %v4185
        %v4198 = vpack.c.b16 %v4188, %v4187
        %v4199 = vpack.c.b16 %v4190, %v4189
        %v4200 = vpack.c.b16 %v4192, %v4191
        %4209 = vmatprep.subr.bf16.mxu0 0
        %4210 = vmatpush1.bf16.msra.mxu0 %v4200
        %4211 = vmatprep.subr.bf16.mxu0 0
        %4212 = vmatpush1.bf16.msra.mxu0 %v4199
        %4213 = vmatprep.subr.bf16.mxu0 0
        %4214 = vmatpush1.bf16.msra.mxu0 %v4198
        %4215 = vmatprep.subr.bf16.mxu0 0
        %4216 = vmatpush1.bf16.msra.mxu0 %v4197
        %4217 = vmatprep.subr.bf16.mxu0 0
        %4218 = vmatpush1.bf16.msra.mxu0 %v4196
        %4219 = vmatprep.subr.bf16.mxu0 0
        %4220 = vmatpush1.bf16.msra.mxu0 %v4195
        %4221 = vmatprep.subr.bf16.mxu0 0
        %4222 = vmatpush1.bf16.msra.mxu0 %v4194
        %4223 = vmatprep.subr.bf16.mxu0 0
        %4224 = vmatpush1.bf16.msra.mxu0 %v4193
        %4225 = vmatprep.subr.bf16.mxu0 0
        %4226 = vmatpush2.bf16.msra.mxu0 0
        %4227 = vmatprep.subr.bf16.mxu0 0
        %4228 = vmatpush2.bf16.msra.mxu0 0
        %4229 = vmatprep.subr.bf16.mxu0 0
        %4230 = vmatpush2.bf16.msra.mxu0 0
        %4231 = vmatprep.subr.bf16.mxu0 0
        %4232 = vmatpush2.bf16.msra.mxu0 0
        %4233 = vmatprep.subr.bf16.mxu0 0
        %4234 = vmatpush2.bf16.msra.mxu0 0
        %4235 = vmatprep.subr.bf16.mxu0 0
        %4236 = vmatpush2.bf16.msra.mxu0 0
        %4237 = vmatprep.subr.bf16.mxu0 0
        %4238 = vmatpush2.bf16.msra.mxu0 0
        %4239 = vmatprep.subr.bf16.mxu0 0
        %4240 = vmatpush2.bf16.msra.mxu0 0
        %4241 = vmatprep.mubr.bf16.mxu0 0
        %4242 = vmatmul.mubr.bf16.gmra.mxu0 %v4134
        %v4243 = vpop.f32.mrf.mxu0
        %v4244 = vadd.f32 %v4159, %v4243
        %v4245 = vpop.f32.mrf.mxu0
        %v4246 = vpop.f32.mrf.mxu0
        %v4247 = vadd.f32 %v4159, %v4246
        %v4248 = vpop.f32.mrf.mxu0
        %4249 = vmatprep.mubr.bf16.mxu0 0
        %4250 = vmatmul.mubr.bf16.gmra.mxu0 %v4135
        %v4251 = vpop.f32.mrf.mxu0
        %v4252 = vadd.f32 %v4159, %v4251
        %v4253 = vpop.f32.mrf.mxu0
        %v4254 = vpop.f32.mrf.mxu0
        %v4255 = vadd.f32 %v4159, %v4254
        %v4256 = vpop.f32.mrf.mxu0
        %4257 = vmatprep.mubr.bf16.mxu0 0
        %4258 = vmatmul.mubr.bf16.gmra.mxu0 %v4136
        %v4259 = vpop.f32.mrf.mxu0
        %v4260 = vadd.f32 %v4159, %v4259
        %v4261 = vpop.f32.mrf.mxu0
        %v4262 = vpop.f32.mrf.mxu0
        %v4263 = vadd.f32 %v4159, %v4262
        %v4264 = vpop.f32.mrf.mxu0
        %4265 = vmatprep.mubr.bf16.mxu0 0
        %4266 = vmatmul.mubr.bf16.gmra.mxu0 %v4137
        %v4267 = vpop.f32.mrf.mxu0
        %v4268 = vadd.f32 %v4159, %v4267
        %v4269 = vpop.f32.mrf.mxu0
        %v4270 = vpop.f32.mrf.mxu0
        %v4271 = vadd.f32 %v4159, %v4270
        %v4272 = vpop.f32.mrf.mxu0
        %4273 = vdwg.mxu0
        %v4274 = vlaneseq
        %v4275 = vand.u32 %v4274, 127
        %vm4276 = vcmp.eq.s32.totalorder %v4275, 0
        %v4277 = vmax.f32 %v4244, 0.0
        %v4278 = vmax.f32 %v4247, 0.0
        %v4279 = vmax.f32 %v4252, 0.0
        %v4280 = vmax.f32 %v4255, 0.0
        %v4281 = vmax.f32 %v4260, 0.0
        %v4282 = vmax.f32 %v4263, 0.0
        %v4283 = vmax.f32 %v4268, 0.0
        %v4284 = vmax.f32 %v4271, 0.0
        %v4285 = vxor.u32 %v4244, 2147483648
        %v4286 = vxor.u32 %v4247, 2147483648
        %v4287 = vxor.u32 %v4252, 2147483648
        %v4288 = vxor.u32 %v4255, 2147483648
        %v4289 = vxor.u32 %v4260, 2147483648
        %v4290 = vxor.u32 %v4263, 2147483648
        %v4291 = vxor.u32 %v4268, 2147483648
        %v4292 = vxor.u32 %v4271, 2147483648
        %v4293 = vmul.f32 %v4285, 1.442695
        %v4294 = vpow.pop %v4293
        %v4295 = vmul.f32 %v4286, 1.442695
        %v4296 = vpow.pop %v4295
        %v4297 = vmul.f32 %v4287, 1.442695
        %v4298 = vpow.pop %v4297
        %v4299 = vmul.f32 %v4288, 1.442695
        %v4300 = vpow.pop %v4299
        %v4301 = vmul.f32 %v4289, 1.442695
        %v4302 = vpow.pop %v4301
        %v4303 = vmul.f32 %v4290, 1.442695
        %v4304 = vpow.pop %v4303
        %v4305 = vmul.f32 %v4291, 1.442695
        %v4306 = vpow.pop %v4305
        %v4307 = vmul.f32 %v4292, 1.442695
        %v4308 = vpow.pop %v4307
        %v4309 = vadd.f32 %v4294, 1.0
        %v4310 = vadd.f32 %v4296, 1.0
        %v4311 = vadd.f32 %v4298, 1.0
        %v4312 = vadd.f32 %v4300, 1.0
        %v4313 = vadd.f32 %v4302, 1.0
        %v4314 = vadd.f32 %v4304, 1.0
        %v4315 = vadd.f32 %v4306, 1.0
        %v4316 = vadd.f32 %v4308, 1.0
        %v4317 = vrcp.pop %v4309
        %v4318 = vmul.f32 1.0, %v4317
        %v4319 = vrcp.pop %v4310
        %v4320 = vmul.f32 1.0, %v4319
        %v4321 = vrcp.pop %v4311
        %v4322 = vmul.f32 1.0, %v4321
        %v4323 = vrcp.pop %v4312
        %v4324 = vmul.f32 1.0, %v4323
        %v4325 = vrcp.pop %v4313
        %v4326 = vmul.f32 1.0, %v4325
        %v4327 = vrcp.pop %v4314
        %v4328 = vmul.f32 1.0, %v4327
        %v4329 = vrcp.pop %v4315
        %v4330 = vmul.f32 1.0, %v4329
        %v4331 = vrcp.pop %v4316
        %v4332 = vmul.f32 1.0, %v4331
        %v4333 = vsel %vm4276, %v4277, %v4318
        %v4334 = vsel %vm4276, %v4278, %v4320
        %v4335 = vsel %vm4276, %v4279, %v4322
        %v4336 = vsel %vm4276, %v4280, %v4324
        %v4337 = vsel %vm4276, %v4281, %v4326
        %v4338 = vsel %vm4276, %v4282, %v4328
        %v4339 = vsel %vm4276, %v4283, %v4330
        %v4340 = vsel %vm4276, %v4284, %v4332
        %vm4341 = vcmask 15360
        %4342 = vst.msk [vmem:[%s23] sm:$0xff] %vm4341, %v4333
        %4343 = vst.msk [vmem:[%s23 + $0x8] sm:$0xff] %vm4341, %v4334
        %4344 = vst.msk [vmem:[%s23 + $0x10] sm:$0xff] %vm4341, %v4335
        %4345 = vst.msk [vmem:[%s23 + $0x18] sm:$0xff] %vm4341, %v4336
        %4346 = vst.msk [vmem:[%s23 + $0x20] sm:$0xff] %vm4341, %v4337
        %4347 = vst.msk [vmem:[%s23 + $0x28] sm:$0xff] %vm4341, %v4338
        %4348 = vst.msk [vmem:[%s23 + $0x30] sm:$0xff] %vm4341, %v4339
        %4349 = vst.msk [vmem:[%s23 + $0x38] sm:$0xff] %vm4341, %v4340
      $region120: #{two_step_network_with_attention.1} parent=111 // pred_fallthru
        _
      // Predicated region
      $region121: #{two_step_network_with_attention.1} parent=111 // pred_check
        %p4350 = pneg %p590
      $region122: #{two_step_network_with_attention.1} parent=111 // pred_check_branch
        %4352 = sbr.rel (%p4350) target = $region124
      $region123: #{two_step_network_with_attention.1} parent=111 // pred_region
        _
      $region124: #{two_step_network_with_attention.1} parent=111 // pred_fallthru
        _
      // Predicated region
      $region125: #{two_step_network_with_attention.1} parent=111 // pred_check
        %p4353 = pneg %p590
      $region126: #{two_step_network_with_attention.1} parent=111 // pred_check_branch
        %4355 = sbr.rel (%p4353) target = $region128
      $region127: #{two_step_network_with_attention.1} parent=111 // pred_region
        _
      $region128: #{two_step_network_with_attention.1} parent=111 // pred_fallthru
        _
    $region112: #{two_step_network_with_attention.1} parent=5 // pred_fallthru
      _
    %p4356 = scmp.le.s32.totalorder 2, %s29
    // Predicated region
    $region129: #{two_step_network_with_attention.1} parent=5 // pred_check
      %p4357 = pneg %p4356
    $region130: #{two_step_network_with_attention.1} parent=5 // pred_check_branch
      %4359 = sbr.rel (%p4357) target = $region132
    $region131: #{two_step_network_with_attention.1} parent=5 // pred_region
      %s4360 = ssub.s32 %s29, 2
    $region132: #{two_step_network_with_attention.1} parent=5 // pred_fallthru
      _
  $region6: #{two_step_network_with_attention.1} parent=0 // loop_footer
    %s33 = sadd.s32 1, %s29
  $region7: #{two_step_network_with_attention.1} parent=0 // loop_footer_branch
    %28 = sbr.rel target = $region3
  $region8: #{two_step_network_with_attention.1} parent=0 // loop_exit
    _

</llo_original>
